<compile_context>
chip_gen: v5e
topology: v5e:2x2
jax: 0.10.0
libtpu: 0.0.40
codegen_flags: <defaults>
</compile_context>

<pallas_src>
import functools
import math

import jax
import jax.numpy as jnp
from jax.experimental import pallas as pl
from jax.experimental.pallas import tpu as pltpu


def _vmem_limit_bytes():
    """Generation-aware scoped-VMEM request: ~3/4 of per-core VMEM, capped at 96 MiB
    (=> ~48 MiB on v7x's 64 MiB/TC, 96 MiB on v5e/v6e's 128 MiB)."""
    cap = None
    try:
        cap = getattr(pltpu.get_tpu_info(), "vmem_capacity_bytes", None)
    except Exception:
        cap = None
    if not cap:
        cap = 64 * 1024 * 1024
    return int(min(96 * 1024 * 1024, (cap * 3) // 4))


def _choose_batch_tile(B, S, D, H, d_ff, vmem_limit, *, in_itemsize=4,
                       compute_itemsize=4, attn_itemsize=4, with_attnw=True):
    """Largest batch tile (divisor of B) fitting a conservative VMEM budget.
    Prefers an even number of grid steps >= 4 (>= 2 per v7x TensorCore), then >= 2."""
    # constant operands (weights ideally single-buffered; biases/LN params tiny)
    weight_bytes = compute_itemsize * (3 * D * D + 2 * D * d_ff) + 8 * (6 * D + d_ff)
    # per batch element of the tile: double-buffered I/O blocks + f32 temporaries
    io = 2 * (3 * S * D * in_itemsize + S * D * 4
              + (H * S * S * attn_itemsize if with_attnw else 0))
    tmp = 4 * (4 * S * D          # Q, K, V, ctx (f32)
               + 3 * S * S        # one head's scores / exp / probs
               + 2 * S * d_ff     # FFN hidden (+ ReLU)
               + 2 * S * D)       # residual / LayerNorm temporaries
    per_b = io + tmp
    budget = int(vmem_limit * 0.6) - weight_bytes
    cap = max(1, budget // per_b) if per_b > 0 else 1
    divisors = [d for d in range(1, B + 1) if B % d == 0 and d <= cap]
    if not divisors:
        return 1

    def best(pred):
        ok = [d for d in divisors if pred(B // d)]
        return max(ok) if ok else None

    return (best(lambda n: n >= 4 and n % 2 == 0)
            or best(lambda n: n >= 2)
            or max(divisors))


def _const_spec(shape, single_buffer):
    """BlockSpec for a grid-invariant operand; single-buffer it when supported."""
    index_map = lambda b: (0,) * len(shape)
    if single_buffer and hasattr(pl, "Buffered"):
        try:
            return pl.BlockSpec(shape, index_map, pipeline_mode=pl.Buffered(1))
        except TypeError:
            pass
    return pl.BlockSpec(shape, index_map)


def transformer_layer_kernel(
    q_ref, k_ref, v_ref,
    wk_ref, bk_ref, wv_ref, bv_ref, wo_ref, bo_ref,
    ln1g_ref, ln1b_ref,
    w1_ref, b1_ref, w2_ref, b2_ref,
    ln2g_ref, ln2b_ref,
    out_ref, *opt_attnw_ref,
    n_heads, d_k, mask_k, zero_pad, apply_pos, compute_dtype,
):
    attnw_ref = opt_attnw_ref[0] if opt_attnw_ref else None
    Bt, S, D = q_ref.shape
    BS = Bt * S
    cd = compute_dtype
    f32 = jnp.float32

    # fold the batch tile into the row dimension of every dense matmul
    q_res = q_ref[...].astype(f32).reshape(BS, D)   # residual input (kept f32)
    k_in = k_ref[...].reshape(BS, D)
    v_in = v_ref[...].reshape(BS, D)

    bk = bk_ref[...].astype(f32)
    bv = bv_ref[...].astype(f32)
    bo = bo_ref[...].astype(f32)

    wk = wk_ref[...].astype(cd)
    scale = 1.0 / math.sqrt(d_k)

    # ---- projections (kq_same: K and Q both use k_linear); 1/sqrt(d_k) folded into Q ----
    K = jnp.dot(k_in.astype(cd), wk, preferred_element_type=f32) + bk
    Q = (jnp.dot(q_res.astype(cd), wk, preferred_element_type=f32) + bk) * scale
    V = jnp.dot(v_in.astype(cd), wv_ref[...].astype(cd), preferred_element_type=f32) + bv

    # ---- causal mask generated in-kernel: visible iff (col - row) < mask_k ----
    # (equals  (np.triu(ones, k=mask_k) == 0)  from the PyTorch module)
    row = jax.lax.broadcasted_iota(jnp.int32, (S, S), 0)
    col = jax.lax.broadcasted_iota(jnp.int32, (S, S), 1)
    visible = (col - row) < mask_k

    approx = (cd != jnp.float32)

    ctx_heads = []
    for h in range(n_heads):                     # static unroll, H is small
        lo = h * d_k
        Qh = Q[:, lo:lo + d_k].reshape(Bt, S, d_k)
        Kh = K[:, lo:lo + d_k].reshape(Bt, S, d_k)
        Vh = V[:, lo:lo + d_k].reshape(Bt, S, d_k)

        scores = jnp.einsum('bqd,bkd->bqk', Qh.astype(cd), Kh.astype(cd),
                            preferred_element_type=f32)
        scores = jnp.where(visible[None], scores, -1e32)   # keep -1e32 in f32

        # hand-rolled softmax: reciprocal of the (Bt,S,1) row-sum, one bcast multiply
        m = jnp.max(scores, axis=-1, keepdims=True)
        e = jnp.exp(scores - m)                             # fully-masked rows -> 1/S
        denom = jnp.sum(e, axis=-1, keepdims=True)
        if approx and hasattr(pl, "reciprocal"):
            inv = pl.reciprocal(denom, approx=True)
        else:
            inv = 1.0 / denom
        probs = e * inv

        if attnw_ref is not None:
            # attention weights returned by the module == PRE-zero-pad softmax scores.
            # stream this head's block out now (writeback DMA overlaps later heads).
            attnw_ref[:, h * S:(h + 1) * S, :] = probs.astype(attnw_ref.dtype)

        ctx_heads.append(jnp.einsum('bqk,bkd->bqd', probs.astype(cd), Vh.astype(cd),
                                    preferred_element_type=f32))      # (Bt, S, d_k)

    ctx = jnp.concatenate(ctx_heads, axis=-1)                          # (Bt, S, D)

    if zero_pad:
        # zeroing query row 0 of post-softmax scores == zeroing seq position 0 of ctx.
        # (attnw was written BEFORE this, matching the PyTorch ordering.)
        seq_nonzero = jax.lax.broadcasted_iota(jnp.int32, (S, 1), 0) != 0
        ctx = jnp.where(seq_nonzero[None], ctx, 0.0)

    # ---- out_proj: one full-D-contraction matmul (dropout is identity in eval) ----
    attn_out = jnp.dot(ctx.reshape(BS, D).astype(cd), wo_ref[...].astype(cd),
                       preferred_element_type=f32) + bo

    # ---- residual + LayerNorm1 ----
    x = q_res + attn_out
    mean = jnp.mean(x, axis=-1, keepdims=True)
    var = jnp.mean((x - mean) ** 2, axis=-1, keepdims=True)
    x = (x - mean) * jax.lax.rsqrt(var + 1e-5) * ln1g_ref[...].astype(f32) \
        + ln1b_ref[...].astype(f32)

    # ---- position-wise FFN + residual + LayerNorm2 ----
    if apply_pos:
        h1 = jnp.dot(x.astype(cd), w1_ref[...].astype(cd),
                     preferred_element_type=f32) + b1_ref[...].astype(f32)
        h1 = jnp.maximum(h1, 0.0)                                      # ReLU
        ffn = jnp.dot(h1.astype(cd), w2_ref[...].astype(cd),
                      preferred_element_type=f32) + b2_ref[...].astype(f32)
        x2 = x + ffn
        mean2 = jnp.mean(x2, axis=-1, keepdims=True)
        var2 = jnp.mean((x2 - mean2) ** 2, axis=-1, keepdims=True)
        x = (x2 - mean2) * jax.lax.rsqrt(var2 + 1e-5) * ln2g_ref[...].astype(f32) \
            + ln2b_ref[...].astype(f32)

    out_ref[...] = x.reshape(Bt, S, D).astype(out_ref.dtype)


def transformer_layer(query, key, values, params, *, n_heads, mask_k,
                      apply_pos=True, compute_dtype=jnp.float32, batch_tile=None,
                      return_attn_weights=True, attn_weights_dtype=jnp.float32):
    B, S, D = query.shape
    d_k = D // n_heads
    d_ff = params["w1"].shape[1]
    zero_pad = (mask_k == 0)
    cd = jnp.dtype(compute_dtype)
    attn_dt = jnp.dtype(attn_weights_dtype)

    vmem_limit = _vmem_limit_bytes()
    Bt = batch_tile if batch_tile is not None else _choose_batch_tile(
        B, S, D, n_heads, d_ff, vmem_limit,
        in_itemsize=jnp.dtype(query.dtype).itemsize,
        compute_itemsize=cd.itemsize,
        attn_itemsize=attn_dt.itemsize,
        with_attnw=return_attn_weights)
    assert B % Bt == 0, "batch tile must divide batch"
    grid = (B // Bt,)

    # bf16 MXU path: ship the big weight matrices in bf16 (halves weight DMA / VMEM)
    wdt = cd if cd == jnp.bfloat16 else jnp.float32
    wk, wv, wo = params["wk"].astype(wdt), params["wv"].astype(wdt), params["wo"].astype(wdt)
    w1, w2 = params["w1"].astype(wdt), params["w2"].astype(wdt)

    kernel = functools.partial(
        transformer_layer_kernel,
        n_heads=n_heads, d_k=d_k, mask_k=mask_k, zero_pad=zero_pad,
        apply_pos=apply_pos, compute_dtype=cd,
    )

    def build_in_specs(single_buffer):
        const = lambda s: _const_spec(s, single_buffer)
        return [
            pl.BlockSpec((Bt, S, D), lambda b: (b, 0, 0)),   # query
            pl.BlockSpec((Bt, S, D), lambda b: (b, 0, 0)),   # key
            pl.BlockSpec((Bt, S, D), lambda b: (b, 0, 0)),   # values
            const((D, D)), const((1, D)),                    # k_linear (W^T, b)
            const((D, D)), const((1, D)),                    # v_linear
            const((D, D)), const((1, D)),                    # out_proj
            const((1, D)), const((1, D)),                    # layer_norm1 gamma, beta
            const((D, d_ff)), const((1, d_ff)),              # linear1
            const((d_ff, D)), const((1, D)),                 # linear2
            const((1, D)), const((1, D)),                    # layer_norm2 gamma, beta
        ]

    out_specs = [pl.BlockSpec((Bt, S, D), lambda b: (b, 0, 0))]
    out_shape = [jax.ShapeDtypeStruct((B, S, D), query.dtype)]
    if return_attn_weights:
        out_specs.append(pl.BlockSpec((Bt, n_heads * S, S), lambda b: (b, 0, 0)))
        out_shape.append(jax.ShapeDtypeStruct((B, n_heads * S, S), attn_dt))

    args = (query, key, values,
            wk, params["bk"], wv, params["bv"], wo, params["bo"],
            params["ln1_g"], params["ln1_b"],
            w1, params["b1"], w2, params["b2"],
            params["ln2_g"], params["ln2_b"])

    def run(single_buffer):
        return pl.pallas_call(
            kernel,
            grid=grid,
            in_specs=build_in_specs(single_buffer),
            out_specs=out_specs,
            out_shape=out_shape,
            compiler_params=pltpu.CompilerParams(
                dimension_semantics=("parallel",),
                vmem_limit_bytes=vmem_limit,
            ),
        )(*args)

    try:
        results = run(True)      # single-buffered constant weights (VMEM win on v7x)
    except Exception:
        results = run(False)     # fall back to default double-buffering

    if return_attn_weights:
        out, attnw_flat = results
        return out, attnw_flat.reshape(B, n_heads, S, S)   # free row-major reshape
    (out,) = results
    return out, None


def reference(query, key, values, params, *, n_heads, mask_k, apply_pos=True):
    """Pure-JAX reference mirroring the PyTorch forward (eval mode)."""
    B, S, D = query.shape
    d_k = D // n_heads
    src_mask = (jnp.triu(jnp.ones((S, S)), k=mask_k) == 0)
    zero_pad = (mask_k == 0)

    K = key @ params["wk"] + params["bk"][0]
    Q = query @ params["wk"] + params["bk"][0]
    V = values @ params["wv"] + params["bv"][0]

    def split(x):
        return x.reshape(B, S, n_heads, d_k).transpose(0, 2, 1, 3)

    Qh, Kh, Vh = split(Q), split(K), split(V)
    scores = jnp.einsum("bhqd,bhkd->bhqk", Qh, Kh) / math.sqrt(d_k)
    scores = jnp.where(src_mask[None, None], scores, -1e32)
    scores = jax.nn.softmax(scores, axis=-1)
    attn_w = scores
    if zero_pad:
        scores = scores.at[:, :, 0, :].set(0.0)
    out = jnp.einsum("bhqk,bhkd->bhqd", scores, Vh)
    concat = out.transpose(0, 2, 1, 3).reshape(B, S, D)
    x = query + (concat @ params["wo"] + params["bo"][0])

    def ln(x, g, b):
        m = x.mean(-1, keepdims=True)
        v = ((x - m) ** 2).mean(-1, keepdims=True)
        return (x - m) / jnp.sqrt(v + 1e-5) * g[0] + b[0]

    x = ln(x, params["ln1_g"], params["ln1_b"])
    if apply_pos:
        h1 = jnp.maximum(x @ params["w1"] + params["b1"][0], 0.0)
        x = ln(x + h1 @ params["w2"] + params["b2"][0], params["ln2_g"], params["ln2_b"])
    return x, attn_w


def init_params(key, d_model, d_ff):
    """Deterministic synthetic init (xavier-uniform-like weights, zero biases,
    unit gamma / zero beta for LayerNorm). Weights stored pre-transposed
    (in, out) so the kernel computes x @ W + b."""
    ks = jax.random.split(key, 6)

    def xavier(k, shape):
        fan_in, fan_out = shape
        lim = math.sqrt(6.0 / (fan_in + fan_out))
        return jax.random.uniform(k, shape, jnp.float32, -lim, lim)

    return {
        "wk": xavier(ks[0], (d_model, d_model)), "bk": jnp.zeros((1, d_model), jnp.float32),
        "wv": xavier(ks[1], (d_model, d_model)), "bv": jnp.zeros((1, d_model), jnp.float32),
        "wo": xavier(ks[2], (d_model, d_model)), "bo": jnp.zeros((1, d_model), jnp.float32),
        "ln1_g": jnp.ones((1, d_model), jnp.float32), "ln1_b": jnp.zeros((1, d_model), jnp.float32),
        "w1": xavier(ks[3], (d_model, d_ff)), "b1": 0.01 * jax.random.normal(ks[4], (1, d_ff), jnp.float32),
        "w2": xavier(ks[5], (d_ff, d_model)), "b2": jnp.zeros((1, d_model), jnp.float32),
        "ln2_g": jnp.ones((1, d_model), jnp.float32), "ln2_b": jnp.zeros((1, d_model), jnp.float32),
    }


if __name__ == "__main__":
    # small shapes consistent with the module: bs=2, seq=8, d_model=32, heads=4, d_ff=64
    B, S, D, H, DFF = 2, 8, 32, 4, 64
    MASK = 0          # TransformerLayer's `mask` arg: 0 -> strict causal + zero_pad=True

    root = jax.random.PRNGKey(0)
    kq, kk, kv, kp = jax.random.split(root, 4)
    query = jax.random.normal(kq, (B, S, D), jnp.float32)
    key_ = jax.random.normal(kk, (B, S, D), jnp.float32)
    values = jax.random.normal(kv, (B, S, D), jnp.float32)
    params = init_params(kp, D, DFF)

    ref_out, ref_attn = reference(query, key_, values, params,
                                  n_heads=H, mask_k=MASK, apply_pos=True)

    # f32 compute path: matches the PyTorch eval-mode forward to tight tolerance.
    out, attn_w = transformer_layer(query, key_, values, params,
                                    n_heads=H, mask_k=MASK, apply_pos=True)
    jax.block_until_ready(out)
    jax.block_until_ready(attn_w)
    assert jnp.allclose(out, ref_out, rtol=1e-4, atol=1e-4), "output mismatch (f32)"
    assert jnp.allclose(attn_w, ref_attn, rtol=1e-4, atol=1e-4), "attn weights mismatch (f32)"

    # attnw-free path (common call sites discard the second return value).
    out_na, attn_na = transformer_layer(query, key_, values, params,
                                        n_heads=H, mask_k=MASK, apply_pos=True,
                                        return_attn_weights=False)
    jax.block_until_ready(out_na)
    assert attn_na is None
    assert jnp.allclose(out_na, ref_out, rtol=1e-4, atol=1e-4), "output mismatch (no attnw)"

    # bf16 MXU-operand path (f32 accumulation / softmax / LayerNorm): looser tolerance.
    out_bf, attn_bf = transformer_layer(query, key_, values, params,
                                        n_heads=H, mask_k=MASK, apply_pos=True,
                                        compute_dtype=jnp.bfloat16)
    jax.block_until_ready(out_bf)
    jax.block_until_ready(attn_bf)
    assert jnp.allclose(out_bf, ref_out, rtol=1e-1, atol=1e-1), "output mismatch (bf16)"
    assert jnp.allclose(attn_bf, ref_attn, rtol=1e-1, atol=1e-1), "attn weights mismatch (bf16)"

    print("KERNEL_OK")
</pallas_src>

<mosaic_0001>
module attributes {stable_mosaic.version = 11 : i64} {
  func.func @transformer_layer_kernel(%arg0: i32, %arg1: memref<1x8x32xf32, #tpu.memory_space<vmem>>, %arg2: memref<1x8x32xf32, #tpu.memory_space<vmem>>, %arg3: memref<1x8x32xf32, #tpu.memory_space<vmem>>, %arg4: memref<32x32xf32, #tpu.memory_space<vmem>>, %arg5: memref<1x32xf32, #tpu.memory_space<vmem>>, %arg6: memref<32x32xf32, #tpu.memory_space<vmem>>, %arg7: memref<1x32xf32, #tpu.memory_space<vmem>>, %arg8: memref<32x32xf32, #tpu.memory_space<vmem>>, %arg9: memref<1x32xf32, #tpu.memory_space<vmem>>, %arg10: memref<1x32xf32, #tpu.memory_space<vmem>>, %arg11: memref<1x32xf32, #tpu.memory_space<vmem>>, %arg12: memref<32x64xf32, #tpu.memory_space<vmem>>, %arg13: memref<1x64xf32, #tpu.memory_space<vmem>>, %arg14: memref<64x32xf32, #tpu.memory_space<vmem>>, %arg15: memref<1x32xf32, #tpu.memory_space<vmem>>, %arg16: memref<1x32xf32, #tpu.memory_space<vmem>>, %arg17: memref<1x32xf32, #tpu.memory_space<vmem>>, %arg18: memref<1x8x32xf32, #tpu.memory_space<vmem>>, %arg19: memref<1x32x8xf32, #tpu.memory_space<vmem>>) attributes {dimension_semantics = [#tpu.dimension_semantics<parallel>], iteration_bounds = array<i64: 2>, scalar_prefetch = 0 : i64, scratch_operands = 0 : i64, tpu.core_type = #tpu.core_type<tc>, window_params = [{transform_indices = @transform_0, window_bounds = array<i64: 1, 8, 32>}, {transform_indices = @transform_1, window_bounds = array<i64: 1, 8, 32>}, {transform_indices = @transform_2, window_bounds = array<i64: 1, 8, 32>}, {pipeline_mode = #tpu.pipeline_mode<synchronous>, transform_indices = @transform_3, window_bounds = array<i64: 32, 32>}, {pipeline_mode = #tpu.pipeline_mode<synchronous>, transform_indices = @transform_4, window_bounds = array<i64: 1, 32>}, {pipeline_mode = #tpu.pipeline_mode<synchronous>, transform_indices = @transform_5, window_bounds = array<i64: 32, 32>}, {pipeline_mode = #tpu.pipeline_mode<synchronous>, transform_indices = @transform_6, window_bounds = array<i64: 1, 32>}, {pipeline_mode = #tpu.pipeline_mode<synchronous>, transform_indices = @transform_7, window_bounds = array<i64: 32, 32>}, {pipeline_mode = #tpu.pipeline_mode<synchronous>, transform_indices = @transform_8, window_bounds = array<i64: 1, 32>}, {pipeline_mode = #tpu.pipeline_mode<synchronous>, transform_indices = @transform_9, window_bounds = array<i64: 1, 32>}, {pipeline_mode = #tpu.pipeline_mode<synchronous>, transform_indices = @transform_10, window_bounds = array<i64: 1, 32>}, {pipeline_mode = #tpu.pipeline_mode<synchronous>, transform_indices = @transform_11, window_bounds = array<i64: 32, 64>}, {pipeline_mode = #tpu.pipeline_mode<synchronous>, transform_indices = @transform_12, window_bounds = array<i64: 1, 64>}, {pipeline_mode = #tpu.pipeline_mode<synchronous>, transform_indices = @transform_13, window_bounds = array<i64: 64, 32>}, {pipeline_mode = #tpu.pipeline_mode<synchronous>, transform_indices = @transform_14, window_bounds = array<i64: 1, 32>}, {pipeline_mode = #tpu.pipeline_mode<synchronous>, transform_indices = @transform_15, window_bounds = array<i64: 1, 32>}, {pipeline_mode = #tpu.pipeline_mode<synchronous>, transform_indices = @transform_16, window_bounds = array<i64: 1, 32>}, {transform_indices = @transform_17, window_bounds = array<i64: 1, 8, 32>}, {transform_indices = @transform_18, window_bounds = array<i64: 1, 32, 8>}]} {
    %c0 = arith.constant 0 : index
    %c0_0 = arith.constant 0 : index
    %c0_1 = arith.constant 0 : index
    %0 = vector.load %arg1[%c0, %c0_0, %c0_1] : memref<1x8x32xf32, #tpu.memory_space<vmem>>, vector<1x8x32xf32>
    %1 = vector.shape_cast %0 : vector<1x8x32xf32> to vector<8x32xf32>
    %c0_2 = arith.constant 0 : index
    %c0_3 = arith.constant 0 : index
    %c0_4 = arith.constant 0 : index
    %2 = vector.load %arg2[%c0_2, %c0_3, %c0_4] : memref<1x8x32xf32, #tpu.memory_space<vmem>>, vector<1x8x32xf32>
    %3 = vector.shape_cast %2 : vector<1x8x32xf32> to vector<8x32xf32>
    %c0_5 = arith.constant 0 : index
    %c0_6 = arith.constant 0 : index
    %c0_7 = arith.constant 0 : index
    %4 = vector.load %arg3[%c0_5, %c0_6, %c0_7] : memref<1x8x32xf32, #tpu.memory_space<vmem>>, vector<1x8x32xf32>
    %5 = vector.shape_cast %4 : vector<1x8x32xf32> to vector<8x32xf32>
    %c0_8 = arith.constant 0 : index
    %c0_9 = arith.constant 0 : index
    %6 = vector.load %arg5[%c0_8, %c0_9] : memref<1x32xf32, #tpu.memory_space<vmem>>, vector<1x32xf32>
    %c0_10 = arith.constant 0 : index
    %c0_11 = arith.constant 0 : index
    %7 = vector.load %arg7[%c0_10, %c0_11] : memref<1x32xf32, #tpu.memory_space<vmem>>, vector<1x32xf32>
    %c0_12 = arith.constant 0 : index
    %c0_13 = arith.constant 0 : index
    %8 = vector.load %arg9[%c0_12, %c0_13] : memref<1x32xf32, #tpu.memory_space<vmem>>, vector<1x32xf32>
    %c0_14 = arith.constant 0 : index
    %c0_15 = arith.constant 0 : index
    %9 = vector.load %arg4[%c0_14, %c0_15] : memref<32x32xf32, #tpu.memory_space<vmem>>, vector<32x32xf32>
    %cst = arith.constant dense<0.000000e+00> : vector<8x32xf32>
    %10 = tpu.matmul %3, %9, %cst {dimension_numbers = #tpu.dot_dimension_numbers<[1], [0], [0], [1], [0, 0, 1, 1], [], []>} : vector<8x32xf32>, vector<32x32xf32>, vector<8x32xf32> -> vector<8x32xf32>
    %11 = vector.broadcast %6 : vector<1x32xf32> to vector<8x32xf32>
    %12 = arith.addf %10, %11 : vector<8x32xf32>
    %cst_16 = arith.constant dense<0.000000e+00> : vector<8x32xf32>
    %13 = tpu.matmul %1, %9, %cst_16 {dimension_numbers = #tpu.dot_dimension_numbers<[1], [0], [0], [1], [0, 0, 1, 1], [], []>} : vector<8x32xf32>, vector<32x32xf32>, vector<8x32xf32> -> vector<8x32xf32>
    %14 = vector.broadcast %6 : vector<1x32xf32> to vector<8x32xf32>
    %15 = arith.addf %13, %14 : vector<8x32xf32>
    %cst_17 = arith.constant 0.353553385 : f32
    %16 = vector.broadcast %cst_17 : f32 to vector<8x32xf32>
    %17 = arith.mulf %15, %16 : vector<8x32xf32>
    %c0_18 = arith.constant 0 : index
    %c0_19 = arith.constant 0 : index
    %18 = vector.load %arg6[%c0_18, %c0_19] : memref<32x32xf32, #tpu.memory_space<vmem>>, vector<32x32xf32>
    %cst_20 = arith.constant dense<0.000000e+00> : vector<8x32xf32>
    %19 = tpu.matmul %5, %18, %cst_20 {dimension_numbers = #tpu.dot_dimension_numbers<[1], [0], [0], [1], [0, 0, 1, 1], [], []>} : vector<8x32xf32>, vector<32x32xf32>, vector<8x32xf32> -> vector<8x32xf32>
    %20 = vector.broadcast %7 : vector<1x32xf32> to vector<8x32xf32>
    %21 = arith.addf %19, %20 : vector<8x32xf32>
    %22 = tpu.iota {dimensions = array<i32: 0>} : vector<8x8xi32>
    %23 = tpu.iota {dimensions = array<i32: 1>} : vector<8x8xi32>
    %24 = arith.subi %23, %22 : vector<8x8xi32>
    %c0_i32 = arith.constant 0 : i32
    %25 = vector.broadcast %c0_i32 : i32 to vector<8x8xi32>
    %26 = arith.cmpi slt, %24, %25 : vector<8x8xi32>
    %27 = vector.extract_strided_slice %17 {offsets = [0, 0], sizes = [8, 8], strides = [1, 1]} : vector<8x32xf32> to vector<8x8xf32>
    %28 = vector.shape_cast %27 : vector<8x8xf32> to vector<1x8x8xf32>
    %29 = vector.extract_strided_slice %12 {offsets = [0, 0], sizes = [8, 8], strides = [1, 1]} : vector<8x32xf32> to vector<8x8xf32>
    %30 = vector.shape_cast %29 : vector<8x8xf32> to vector<1x8x8xf32>
    %31 = vector.extract_strided_slice %21 {offsets = [0, 0], sizes = [8, 8], strides = [1, 1]} : vector<8x32xf32> to vector<8x8xf32>
    %32 = vector.shape_cast %31 : vector<8x8xf32> to vector<1x8x8xf32>
    "tpu.trace_start"() <{level = 10 : i32, message = "bqd,bkd->bqk"}> : () -> ()
    %cst_21 = arith.constant dense<0.000000e+00> : vector<1x8x8xf32>
    %33 = tpu.matmul %28, %30, %cst_21 {dimension_numbers = #tpu.dot_dimension_numbers<[2], [2], [1], [1], [0, 0, 0, 1, 1, 1], [0], [0]>} : vector<1x8x8xf32>, vector<1x8x8xf32>, vector<1x8x8xf32> -> vector<1x8x8xf32>
    "tpu.trace_stop"() : () -> ()
    %34 = vector.shape_cast %26 : vector<8x8xi1> to vector<1x8x8xi1>
    %cst_22 = arith.constant -1.000000e+32 : f32
    %35 = vector.broadcast %cst_22 : f32 to vector<1x8x8xf32>
    %36 = arith.select %34, %33, %35 : vector<1x8x8xi1>, vector<1x8x8xf32>
    %cst_23 = arith.constant dense<0xFF800000> : vector<1x8xf32>
    %37 = vector.multi_reduction <maximumf>, %36, %cst_23 [2] : vector<1x8x8xf32> to vector<1x8xf32>
    %38 = vector.shape_cast %37 : vector<1x8xf32> to vector<1x8x1xf32>
    %39 = vector.broadcast %38 : vector<1x8x1xf32> to vector<1x8x8xf32>
    %40 = arith.subf %36, %39 : vector<1x8x8xf32>
    %41 = math.exp %40 : vector<1x8x8xf32>
    %cst_24 = arith.constant dense<0.000000e+00> : vector<1x8xf32>
    %42 = vector.multi_reduction <add>, %41, %cst_24 [2] : vector<1x8x8xf32> to vector<1x8xf32>
    %43 = vector.shape_cast %42 : vector<1x8xf32> to vector<1x8x1xf32>
    %cst_25 = arith.constant 1.000000e+00 : f32
    %44 = vector.broadcast %cst_25 : f32 to vector<1x8x1xf32>
    %45 = arith.divf %44, %43 : vector<1x8x1xf32>
    %46 = vector.broadcast %45 : vector<1x8x1xf32> to vector<1x8x8xf32>
    %47 = arith.mulf %41, %46 : vector<1x8x8xf32>
    %c0_26 = arith.constant 0 : index
    %c0_27 = arith.constant 0 : index
    %c0_28 = arith.constant 0 : index
    %48 = vector.load %arg19[%c0_26, %c0_27, %c0_28] : memref<1x32x8xf32, #tpu.memory_space<vmem>>, vector<1x8x8xf32>
    tpu.vector_store %arg19[%c0_26, %c0_27, %c0_28], %47 {strides = array<i32>} : memref<1x32x8xf32, #tpu.memory_space<vmem>>, vector<1x8x8xf32>,
    "tpu.trace_start"() <{level = 10 : i32, message = "bqk,bkd->bqd"}> : () -> ()
    %cst_29 = arith.constant dense<0.000000e+00> : vector<1x8x8xf32>
    %49 = tpu.matmul %47, %32, %cst_29 {dimension_numbers = #tpu.dot_dimension_numbers<[2], [1], [1], [2], [0, 0, 0, 1, 1, 2], [0], [0]>} : vector<1x8x8xf32>, vector<1x8x8xf32>, vector<1x8x8xf32> -> vector<1x8x8xf32>
    "tpu.trace_stop"() : () -> ()
    %50 = vector.extract_strided_slice %17 {offsets = [0, 8], sizes = [8, 8], strides = [1, 1]} : vector<8x32xf32> to vector<8x8xf32>
    %51 = vector.shape_cast %50 : vector<8x8xf32> to vector<1x8x8xf32>
    %52 = vector.extract_strided_slice %12 {offsets = [0, 8], sizes = [8, 8], strides = [1, 1]} : vector<8x32xf32> to vector<8x8xf32>
    %53 = vector.shape_cast %52 : vector<8x8xf32> to vector<1x8x8xf32>
    %54 = vector.extract_strided_slice %21 {offsets = [0, 8], sizes = [8, 8], strides = [1, 1]} : vector<8x32xf32> to vector<8x8xf32>
    %55 = vector.shape_cast %54 : vector<8x8xf32> to vector<1x8x8xf32>
    "tpu.trace_start"() <{level = 10 : i32, message = "bqd,bkd->bqk"}> : () -> ()
    %cst_30 = arith.constant dense<0.000000e+00> : vector<1x8x8xf32>
    %56 = tpu.matmul %51, %53, %cst_30 {dimension_numbers = #tpu.dot_dimension_numbers<[2], [2], [1], [1], [0, 0, 0, 1, 1, 1], [0], [0]>} : vector<1x8x8xf32>, vector<1x8x8xf32>, vector<1x8x8xf32> -> vector<1x8x8xf32>
    "tpu.trace_stop"() : () -> ()
    %57 = vector.shape_cast %26 : vector<8x8xi1> to vector<1x8x8xi1>
    %cst_31 = arith.constant -1.000000e+32 : f32
    %58 = vector.broadcast %cst_31 : f32 to vector<1x8x8xf32>
    %59 = arith.select %57, %56, %58 : vector<1x8x8xi1>, vector<1x8x8xf32>
    %cst_32 = arith.constant dense<0xFF800000> : vector<1x8xf32>
    %60 = vector.multi_reduction <maximumf>, %59, %cst_32 [2] : vector<1x8x8xf32> to vector<1x8xf32>
    %61 = vector.shape_cast %60 : vector<1x8xf32> to vector<1x8x1xf32>
    %62 = vector.broadcast %61 : vector<1x8x1xf32> to vector<1x8x8xf32>
    %63 = arith.subf %59, %62 : vector<1x8x8xf32>
    %64 = math.exp %63 : vector<1x8x8xf32>
    %cst_33 = arith.constant dense<0.000000e+00> : vector<1x8xf32>
    %65 = vector.multi_reduction <add>, %64, %cst_33 [2] : vector<1x8x8xf32> to vector<1x8xf32>
    %66 = vector.shape_cast %65 : vector<1x8xf32> to vector<1x8x1xf32>
    %cst_34 = arith.constant 1.000000e+00 : f32
    %67 = vector.broadcast %cst_34 : f32 to vector<1x8x1xf32>
    %68 = arith.divf %67, %66 : vector<1x8x1xf32>
    %69 = vector.broadcast %68 : vector<1x8x1xf32> to vector<1x8x8xf32>
    %70 = arith.mulf %64, %69 : vector<1x8x8xf32>
    %c0_35 = arith.constant 0 : index
    %c8 = arith.constant 8 : index
    %c0_36 = arith.constant 0 : index
    %71 = vector.load %arg19[%c0_35, %c8, %c0_36] : memref<1x32x8xf32, #tpu.memory_space<vmem>>, vector<1x8x8xf32>
    tpu.vector_store %arg19[%c0_35, %c8, %c0_36], %70 {strides = array<i32>} : memref<1x32x8xf32, #tpu.memory_space<vmem>>, vector<1x8x8xf32>,
    "tpu.trace_start"() <{level = 10 : i32, message = "bqk,bkd->bqd"}> : () -> ()
    %cst_37 = arith.constant dense<0.000000e+00> : vector<1x8x8xf32>
    %72 = tpu.matmul %70, %55, %cst_37 {dimension_numbers = #tpu.dot_dimension_numbers<[2], [1], [1], [2], [0, 0, 0, 1, 1, 2], [0], [0]>} : vector<1x8x8xf32>, vector<1x8x8xf32>, vector<1x8x8xf32> -> vector<1x8x8xf32>
    "tpu.trace_stop"() : () -> ()
    %73 = vector.extract_strided_slice %17 {offsets = [0, 16], sizes = [8, 8], strides = [1, 1]} : vector<8x32xf32> to vector<8x8xf32>
    %74 = vector.shape_cast %73 : vector<8x8xf32> to vector<1x8x8xf32>
    %75 = vector.extract_strided_slice %12 {offsets = [0, 16], sizes = [8, 8], strides = [1, 1]} : vector<8x32xf32> to vector<8x8xf32>
    %76 = vector.shape_cast %75 : vector<8x8xf32> to vector<1x8x8xf32>
    %77 = vector.extract_strided_slice %21 {offsets = [0, 16], sizes = [8, 8], strides = [1, 1]} : vector<8x32xf32> to vector<8x8xf32>
    %78 = vector.shape_cast %77 : vector<8x8xf32> to vector<1x8x8xf32>
    "tpu.trace_start"() <{level = 10 : i32, message = "bqd,bkd->bqk"}> : () -> ()
    %cst_38 = arith.constant dense<0.000000e+00> : vector<1x8x8xf32>
    %79 = tpu.matmul %74, %76, %cst_38 {dimension_numbers = #tpu.dot_dimension_numbers<[2], [2], [1], [1], [0, 0, 0, 1, 1, 1], [0], [0]>} : vector<1x8x8xf32>, vector<1x8x8xf32>, vector<1x8x8xf32> -> vector<1x8x8xf32>
    "tpu.trace_stop"() : () -> ()
    %80 = vector.shape_cast %26 : vector<8x8xi1> to vector<1x8x8xi1>
    %cst_39 = arith.constant -1.000000e+32 : f32
    %81 = vector.broadcast %cst_39 : f32 to vector<1x8x8xf32>
    %82 = arith.select %80, %79, %81 : vector<1x8x8xi1>, vector<1x8x8xf32>
    %cst_40 = arith.constant dense<0xFF800000> : vector<1x8xf32>
    %83 = vector.multi_reduction <maximumf>, %82, %cst_40 [2] : vector<1x8x8xf32> to vector<1x8xf32>
    %84 = vector.shape_cast %83 : vector<1x8xf32> to vector<1x8x1xf32>
    %85 = vector.broadcast %84 : vector<1x8x1xf32> to vector<1x8x8xf32>
    %86 = arith.subf %82, %85 : vector<1x8x8xf32>
    %87 = math.exp %86 : vector<1x8x8xf32>
    %cst_41 = arith.constant dense<0.000000e+00> : vector<1x8xf32>
    %88 = vector.multi_reduction <add>, %87, %cst_41 [2] : vector<1x8x8xf32> to vector<1x8xf32>
    %89 = vector.shape_cast %88 : vector<1x8xf32> to vector<1x8x1xf32>
    %cst_42 = arith.constant 1.000000e+00 : f32
    %90 = vector.broadcast %cst_42 : f32 to vector<1x8x1xf32>
    %91 = arith.divf %90, %89 : vector<1x8x1xf32>
    %92 = vector.broadcast %91 : vector<1x8x1xf32> to vector<1x8x8xf32>
    %93 = arith.mulf %87, %92 : vector<1x8x8xf32>
    %c0_43 = arith.constant 0 : index
    %c16 = arith.constant 16 : index
    %c0_44 = arith.constant 0 : index
    %94 = vector.load %arg19[%c0_43, %c16, %c0_44] : memref<1x32x8xf32, #tpu.memory_space<vmem>>, vector<1x8x8xf32>
    tpu.vector_store %arg19[%c0_43, %c16, %c0_44], %93 {strides = array<i32>} : memref<1x32x8xf32, #tpu.memory_space<vmem>>, vector<1x8x8xf32>,
    "tpu.trace_start"() <{level = 10 : i32, message = "bqk,bkd->bqd"}> : () -> ()
    %cst_45 = arith.constant dense<0.000000e+00> : vector<1x8x8xf32>
    %95 = tpu.matmul %93, %78, %cst_45 {dimension_numbers = #tpu.dot_dimension_numbers<[2], [1], [1], [2], [0, 0, 0, 1, 1, 2], [0], [0]>} : vector<1x8x8xf32>, vector<1x8x8xf32>, vector<1x8x8xf32> -> vector<1x8x8xf32>
    "tpu.trace_stop"() : () -> ()
    %96 = vector.extract_strided_slice %17 {offsets = [0, 24], sizes = [8, 8], strides = [1, 1]} : vector<8x32xf32> to vector<8x8xf32>
    %97 = vector.shape_cast %96 : vector<8x8xf32> to vector<1x8x8xf32>
    %98 = vector.extract_strided_slice %12 {offsets = [0, 24], sizes = [8, 8], strides = [1, 1]} : vector<8x32xf32> to vector<8x8xf32>
    %99 = vector.shape_cast %98 : vector<8x8xf32> to vector<1x8x8xf32>
    %100 = vector.extract_strided_slice %21 {offsets = [0, 24], sizes = [8, 8], strides = [1, 1]} : vector<8x32xf32> to vector<8x8xf32>
    %101 = vector.shape_cast %100 : vector<8x8xf32> to vector<1x8x8xf32>
    "tpu.trace_start"() <{level = 10 : i32, message = "bqd,bkd->bqk"}> : () -> ()
    %cst_46 = arith.constant dense<0.000000e+00> : vector<1x8x8xf32>
    %102 = tpu.matmul %97, %99, %cst_46 {dimension_numbers = #tpu.dot_dimension_numbers<[2], [2], [1], [1], [0, 0, 0, 1, 1, 1], [0], [0]>} : vector<1x8x8xf32>, vector<1x8x8xf32>, vector<1x8x8xf32> -> vector<1x8x8xf32>
    "tpu.trace_stop"() : () -> ()
    %103 = vector.shape_cast %26 : vector<8x8xi1> to vector<1x8x8xi1>
    %cst_47 = arith.constant -1.000000e+32 : f32
    %104 = vector.broadcast %cst_47 : f32 to vector<1x8x8xf32>
    %105 = arith.select %103, %102, %104 : vector<1x8x8xi1>, vector<1x8x8xf32>
    %cst_48 = arith.constant dense<0xFF800000> : vector<1x8xf32>
    %106 = vector.multi_reduction <maximumf>, %105, %cst_48 [2] : vector<1x8x8xf32> to vector<1x8xf32>
    %107 = vector.shape_cast %106 : vector<1x8xf32> to vector<1x8x1xf32>
    %108 = vector.broadcast %107 : vector<1x8x1xf32> to vector<1x8x8xf32>
    %109 = arith.subf %105, %108 : vector<1x8x8xf32>
    %110 = math.exp %109 : vector<1x8x8xf32>
    %cst_49 = arith.constant dense<0.000000e+00> : vector<1x8xf32>
    %111 = vector.multi_reduction <add>, %110, %cst_49 [2] : vector<1x8x8xf32> to vector<1x8xf32>
    %112 = vector.shape_cast %111 : vector<1x8xf32> to vector<1x8x1xf32>
    %cst_50 = arith.constant 1.000000e+00 : f32
    %113 = vector.broadcast %cst_50 : f32 to vector<1x8x1xf32>
    %114 = arith.divf %113, %112 : vector<1x8x1xf32>
    %115 = vector.broadcast %114 : vector<1x8x1xf32> to vector<1x8x8xf32>
    %116 = arith.mulf %110, %115 : vector<1x8x8xf32>
    %c0_51 = arith.constant 0 : index
    %c24 = arith.constant 24 : index
    %c0_52 = arith.constant 0 : index
    %117 = vector.load %arg19[%c0_51, %c24, %c0_52] : memref<1x32x8xf32, #tpu.memory_space<vmem>>, vector<1x8x8xf32>
    tpu.vector_store %arg19[%c0_51, %c24, %c0_52], %116 {strides = array<i32>} : memref<1x32x8xf32, #tpu.memory_space<vmem>>, vector<1x8x8xf32>,
    "tpu.trace_start"() <{level = 10 : i32, message = "bqk,bkd->bqd"}> : () -> ()
    %cst_53 = arith.constant dense<0.000000e+00> : vector<1x8x8xf32>
    %118 = tpu.matmul %116, %101, %cst_53 {dimension_numbers = #tpu.dot_dimension_numbers<[2], [1], [1], [2], [0, 0, 0, 1, 1, 2], [0], [0]>} : vector<1x8x8xf32>, vector<1x8x8xf32>, vector<1x8x8xf32> -> vector<1x8x8xf32>
    "tpu.trace_stop"() : () -> ()
    %119 = tpu.concatenate %49, %72, %95, %118 in 2 : vector<1x8x8xf32>, vector<1x8x8xf32>, vector<1x8x8xf32>, vector<1x8x8xf32> -> vector<1x8x32xf32>
    %120 = tpu.iota {dimensions = array<i32: 0>} : vector<8x1xi32>
    %c0_i32_54 = arith.constant 0 : i32
    %121 = vector.broadcast %c0_i32_54 : i32 to vector<8x1xi32>
    %122 = arith.cmpi ne, %120, %121 : vector<8x1xi32>
    %123 = vector.shape_cast %122 : vector<8x1xi1> to vector<1x8x1xi1>
    %cst_55 = arith.constant 0.000000e+00 : f32
    %124 = vector.shape_cast %123 : vector<1x8x1xi1> to vector<1x8x1xi1>
    %125 = vector.broadcast %124 : vector<1x8x1xi1> to vector<1x8x32xi1>
    %126 = vector.broadcast %cst_55 : f32 to vector<1x8x32xf32>
    %127 = arith.select %125, %119, %126 : vector<1x8x32xi1>, vector<1x8x32xf32>
    %128 = vector.shape_cast %127 : vector<1x8x32xf32> to vector<8x32xf32>
    %c0_56 = arith.constant 0 : index
    %c0_57 = arith.constant 0 : index
    %129 = vector.load %arg8[%c0_56, %c0_57] : memref<32x32xf32, #tpu.memory_space<vmem>>, vector<32x32xf32>
    %cst_58 = arith.constant dense<0.000000e+00> : vector<8x32xf32>
    %130 = tpu.matmul %128, %129, %cst_58 {dimension_numbers = #tpu.dot_dimension_numbers<[1], [0], [0], [1], [0, 0, 1, 1], [], []>} : vector<8x32xf32>, vector<32x32xf32>, vector<8x32xf32> -> vector<8x32xf32>
    %131 = vector.broadcast %8 : vector<1x32xf32> to vector<8x32xf32>
    %132 = arith.addf %130, %131 : vector<8x32xf32>
    %133 = arith.addf %1, %132 : vector<8x32xf32>
    %cst_59 = arith.constant dense<0.000000e+00> : vector<8xf32>
    %134 = vector.multi_reduction <add>, %133, %cst_59 [1] : vector<8x32xf32> to vector<8xf32>
    %135 = vector.shape_cast %134 : vector<8xf32> to vector<8x1xf32>
    %cst_60 = arith.constant 3.200000e+01 : f32
    %136 = vector.broadcast %cst_60 : f32 to vector<8x1xf32>
    %137 = arith.divf %135, %136 : vector<8x1xf32>
    %138 = vector.broadcast %137 : vector<8x1xf32> to vector<8x32xf32>
    %139 = arith.subf %133, %138 : vector<8x32xf32>
    %140 = arith.mulf %139, %139 : vector<8x32xf32>
    %cst_61 = arith.constant dense<0.000000e+00> : vector<8xf32>
    %141 = vector.multi_reduction <add>, %140, %cst_61 [1] : vector<8x32xf32> to vector<8xf32>
    %142 = vector.shape_cast %141 : vector<8xf32> to vector<8x1xf32>
    %cst_62 = arith.constant 3.200000e+01 : f32
    %143 = vector.broadcast %cst_62 : f32 to vector<8x1xf32>
    %144 = arith.divf %142, %143 : vector<8x1xf32>
    %145 = vector.broadcast %137 : vector<8x1xf32> to vector<8x32xf32>
    %146 = arith.subf %133, %145 : vector<8x32xf32>
    %cst_63 = arith.constant 9.99999974E-6 : f32
    %147 = vector.broadcast %cst_63 : f32 to vector<8x1xf32>
    %148 = arith.addf %144, %147 : vector<8x1xf32>
    %149 = math.rsqrt %148 : vector<8x1xf32>
    %150 = vector.broadcast %149 : vector<8x1xf32> to vector<8x32xf32>
    %151 = arith.mulf %146, %150 : vector<8x32xf32>
    %c0_64 = arith.constant 0 : index
    %c0_65 = arith.constant 0 : index
    %152 = vector.load %arg10[%c0_64, %c0_65] : memref<1x32xf32, #tpu.memory_space<vmem>>, vector<1x32xf32>
    %153 = vector.broadcast %152 : vector<1x32xf32> to vector<8x32xf32>
    %154 = arith.mulf %151, %153 : vector<8x32xf32>
    %c0_66 = arith.constant 0 : index
    %c0_67 = arith.constant 0 : index
    %155 = vector.load %arg11[%c0_66, %c0_67] : memref<1x32xf32, #tpu.memory_space<vmem>>, vector<1x32xf32>
    %156 = vector.broadcast %155 : vector<1x32xf32> to vector<8x32xf32>
    %157 = arith.addf %154, %156 : vector<8x32xf32>
    %c0_68 = arith.constant 0 : index
    %c0_69 = arith.constant 0 : index
    %158 = vector.load %arg12[%c0_68, %c0_69] : memref<32x64xf32, #tpu.memory_space<vmem>>, vector<32x64xf32>
    %cst_70 = arith.constant dense<0.000000e+00> : vector<8x64xf32>
    %159 = tpu.matmul %157, %158, %cst_70 {dimension_numbers = #tpu.dot_dimension_numbers<[1], [0], [0], [1], [0, 0, 1, 1], [], []>} : vector<8x32xf32>, vector<32x64xf32>, vector<8x64xf32> -> vector<8x64xf32>
    %c0_71 = arith.constant 0 : index
    %c0_72 = arith.constant 0 : index
    %160 = vector.load %arg13[%c0_71, %c0_72] : memref<1x64xf32, #tpu.memory_space<vmem>>, vector<1x64xf32>
    %161 = vector.broadcast %160 : vector<1x64xf32> to vector<8x64xf32>
    %162 = arith.addf %159, %161 : vector<8x64xf32>
    %cst_73 = arith.constant 0.000000e+00 : f32
    %163 = vector.broadcast %cst_73 : f32 to vector<8x64xf32>
    %164 = arith.maximumf %162, %163 : vector<8x64xf32>
    %c0_74 = arith.constant 0 : index
    %c0_75 = arith.constant 0 : index
    %165 = vector.load %arg14[%c0_74, %c0_75] : memref<64x32xf32, #tpu.memory_space<vmem>>, vector<64x32xf32>
    %cst_76 = arith.constant dense<0.000000e+00> : vector<8x32xf32>
    %166 = tpu.matmul %164, %165, %cst_76 {dimension_numbers = #tpu.dot_dimension_numbers<[1], [0], [0], [1], [0, 0, 1, 1], [], []>} : vector<8x64xf32>, vector<64x32xf32>, vector<8x32xf32> -> vector<8x32xf32>
    %c0_77 = arith.constant 0 : index
    %c0_78 = arith.constant 0 : index
    %167 = vector.load %arg15[%c0_77, %c0_78] : memref<1x32xf32, #tpu.memory_space<vmem>>, vector<1x32xf32>
    %168 = vector.broadcast %167 : vector<1x32xf32> to vector<8x32xf32>
    %169 = arith.addf %166, %168 : vector<8x32xf32>
    %170 = arith.addf %157, %169 : vector<8x32xf32>
    %cst_79 = arith.constant dense<0.000000e+00> : vector<8xf32>
    %171 = vector.multi_reduction <add>, %170, %cst_79 [1] : vector<8x32xf32> to vector<8xf32>
    %172 = vector.shape_cast %171 : vector<8xf32> to vector<8x1xf32>
    %cst_80 = arith.constant 3.200000e+01 : f32
    %173 = vector.broadcast %cst_80 : f32 to vector<8x1xf32>
    %174 = arith.divf %172, %173 : vector<8x1xf32>
    %175 = vector.broadcast %174 : vector<8x1xf32> to vector<8x32xf32>
    %176 = arith.subf %170, %175 : vector<8x32xf32>
    %177 = arith.mulf %176, %176 : vector<8x32xf32>
    %cst_81 = arith.constant dense<0.000000e+00> : vector<8xf32>
    %178 = vector.multi_reduction <add>, %177, %cst_81 [1] : vector<8x32xf32> to vector<8xf32>
    %179 = vector.shape_cast %178 : vector<8xf32> to vector<8x1xf32>
    %cst_82 = arith.constant 3.200000e+01 : f32
    %180 = vector.broadcast %cst_82 : f32 to vector<8x1xf32>
    %181 = arith.divf %179, %180 : vector<8x1xf32>
    %182 = vector.broadcast %174 : vector<8x1xf32> to vector<8x32xf32>
    %183 = arith.subf %170, %182 : vector<8x32xf32>
    %cst_83 = arith.constant 9.99999974E-6 : f32
    %184 = vector.broadcast %cst_83 : f32 to vector<8x1xf32>
    %185 = arith.addf %181, %184 : vector<8x1xf32>
    %186 = math.rsqrt %185 : vector<8x1xf32>
    %187 = vector.broadcast %186 : vector<8x1xf32> to vector<8x32xf32>
    %188 = arith.mulf %183, %187 : vector<8x32xf32>
    %c0_84 = arith.constant 0 : index
    %c0_85 = arith.constant 0 : index
    %189 = vector.load %arg16[%c0_84, %c0_85] : memref<1x32xf32, #tpu.memory_space<vmem>>, vector<1x32xf32>
    %190 = vector.broadcast %189 : vector<1x32xf32> to vector<8x32xf32>
    %191 = arith.mulf %188, %190 : vector<8x32xf32>
    %c0_86 = arith.constant 0 : index
    %c0_87 = arith.constant 0 : index
    %192 = vector.load %arg17[%c0_86, %c0_87] : memref<1x32xf32, #tpu.memory_space<vmem>>, vector<1x32xf32>
    %193 = vector.broadcast %192 : vector<1x32xf32> to vector<8x32xf32>
    %194 = arith.addf %191, %193 : vector<8x32xf32>
    %195 = vector.shape_cast %194 : vector<8x32xf32> to vector<1x8x32xf32>
    %c0_88 = arith.constant 0 : index
    %c0_89 = arith.constant 0 : index
    %c0_90 = arith.constant 0 : index
    %196 = vector.load %arg18[%c0_88, %c0_89, %c0_90] : memref<1x8x32xf32, #tpu.memory_space<vmem>>, vector<1x8x32xf32>
    tpu.vector_store %arg18[%c0_88, %c0_89, %c0_90], %195 {strides = array<i32>} : memref<1x8x32xf32, #tpu.memory_space<vmem>>, vector<1x8x32xf32>,
    return
  }
  func.func @transform_0(%arg0: i32) -> (i32, i32, i32) {
    %c0_i32 = arith.constant 0 : i32
    %c0_i32_0 = arith.constant 0 : i32
    %c0_i32_1 = arith.constant 0 : i32
    return %arg0, %c0_i32, %c0_i32_0 : i32, i32, i32
  }
  func.func @transform_1(%arg0: i32) -> (i32, i32, i32) {
    %c0_i32 = arith.constant 0 : i32
    %c0_i32_0 = arith.constant 0 : i32
    %c0_i32_1 = arith.constant 0 : i32
    return %arg0, %c0_i32, %c0_i32_0 : i32, i32, i32
  }
  func.func @transform_2(%arg0: i32) -> (i32, i32, i32) {
    %c0_i32 = arith.constant 0 : i32
    %c0_i32_0 = arith.constant 0 : i32
    %c0_i32_1 = arith.constant 0 : i32
    return %arg0, %c0_i32, %c0_i32_0 : i32, i32, i32
  }
  func.func @transform_3(%arg0: i32) -> (i32, i32) {
    %c0_i32 = arith.constant 0 : i32
    %c0_i32_0 = arith.constant 0 : i32
    %c0_i32_1 = arith.constant 0 : i32
    return %c0_i32, %c0_i32_0 : i32, i32
  }
  func.func @transform_4(%arg0: i32) -> (i32, i32) {
    %c0_i32 = arith.constant 0 : i32
    %c0_i32_0 = arith.constant 0 : i32
    %c0_i32_1 = arith.constant 0 : i32
    return %c0_i32, %c0_i32_0 : i32, i32
  }
  func.func @transform_5(%arg0: i32) -> (i32, i32) {
    %c0_i32 = arith.constant 0 : i32
    %c0_i32_0 = arith.constant 0 : i32
    %c0_i32_1 = arith.constant 0 : i32
    return %c0_i32, %c0_i32_0 : i32, i32
  }
  func.func @transform_6(%arg0: i32) -> (i32, i32) {
    %c0_i32 = arith.constant 0 : i32
    %c0_i32_0 = arith.constant 0 : i32
    %c0_i32_1 = arith.constant 0 : i32
    return %c0_i32, %c0_i32_0 : i32, i32
  }
  func.func @transform_7(%arg0: i32) -> (i32, i32) {
    %c0_i32 = arith.constant 0 : i32
    %c0_i32_0 = arith.constant 0 : i32
    %c0_i32_1 = arith.constant 0 : i32
    return %c0_i32, %c0_i32_0 : i32, i32
  }
  func.func @transform_8(%arg0: i32) -> (i32, i32) {
    %c0_i32 = arith.constant 0 : i32
    %c0_i32_0 = arith.constant 0 : i32
    %c0_i32_1 = arith.constant 0 : i32
    return %c0_i32, %c0_i32_0 : i32, i32
  }
  func.func @transform_9(%arg0: i32) -> (i32, i32) {
    %c0_i32 = arith.constant 0 : i32
    %c0_i32_0 = arith.constant 0 : i32
    %c0_i32_1 = arith.constant 0 : i32
    return %c0_i32, %c0_i32_0 : i32, i32
  }
  func.func @transform_10(%arg0: i32) -> (i32, i32) {
    %c0_i32 = arith.constant 0 : i32
    %c0_i32_0 = arith.constant 0 : i32
    %c0_i32_1 = arith.constant 0 : i32
    return %c0_i32, %c0_i32_0 : i32, i32
  }
  func.func @transform_11(%arg0: i32) -> (i32, i32) {
    %c0_i32 = arith.constant 0 : i32
    %c0_i32_0 = arith.constant 0 : i32
    %c0_i32_1 = arith.constant 0 : i32
    return %c0_i32, %c0_i32_0 : i32, i32
  }
  func.func @transform_12(%arg0: i32) -> (i32, i32) {
    %c0_i32 = arith.constant 0 : i32
    %c0_i32_0 = arith.constant 0 : i32
    %c0_i32_1 = arith.constant 0 : i32
    return %c0_i32, %c0_i32_0 : i32, i32
  }
  func.func @transform_13(%arg0: i32) -> (i32, i32) {
    %c0_i32 = arith.constant 0 : i32
    %c0_i32_0 = arith.constant 0 : i32
    %c0_i32_1 = arith.constant 0 : i32
    return %c0_i32, %c0_i32_0 : i32, i32
  }
  func.func @transform_14(%arg0: i32) -> (i32, i32) {
    %c0_i32 = arith.constant 0 : i32
    %c0_i32_0 = arith.constant 0 : i32
    %c0_i32_1 = arith.constant 0 : i32
    return %c0_i32, %c0_i32_0 : i32, i32
  }
  func.func @transform_15(%arg0: i32) -> (i32, i32) {
    %c0_i32 = arith.constant 0 : i32
    %c0_i32_0 = arith.constant 0 : i32
    %c0_i32_1 = arith.constant 0 : i32
    return %c0_i32, %c0_i32_0 : i32, i32
  }
  func.func @transform_16(%arg0: i32) -> (i32, i32) {
    %c0_i32 = arith.constant 0 : i32
    %c0_i32_0 = arith.constant 0 : i32
    %c0_i32_1 = arith.constant 0 : i32
    return %c0_i32, %c0_i32_0 : i32, i32
  }
  func.func @transform_17(%arg0: i32) -> (i32, i32, i32) {
    %c0_i32 = arith.constant 0 : i32
    %c0_i32_0 = arith.constant 0 : i32
    %c0_i32_1 = arith.constant 0 : i32
    return %arg0, %c0_i32, %c0_i32_0 : i32, i32, i32
  }
  func.func @transform_18(%arg0: i32) -> (i32, i32, i32) {
    %c0_i32 = arith.constant 0 : i32
    %c0_i32_0 = arith.constant 0 : i32
    %c0_i32_1 = arith.constant 0 : i32
    return %arg0, %c0_i32, %c0_i32_0 : i32, i32, i32
  }
}

module attributes {stable_mosaic.version = 11 : i64} {
  func.func @transformer_layer_kernel(%arg0: i32, %arg1: memref<1x8x32xf32, #tpu.memory_space<vmem>>, %arg2: memref<1x8x32xf32, #tpu.memory_space<vmem>>, %arg3: memref<1x8x32xf32, #tpu.memory_space<vmem>>, %arg4: memref<32x32xf32, #tpu.memory_space<vmem>>, %arg5: memref<1x32xf32, #tpu.memory_space<vmem>>, %arg6: memref<32x32xf32, #tpu.memory_space<vmem>>, %arg7: memref<1x32xf32, #tpu.memory_space<vmem>>, %arg8: memref<32x32xf32, #tpu.memory_space<vmem>>, %arg9: memref<1x32xf32, #tpu.memory_space<vmem>>, %arg10: memref<1x32xf32, #tpu.memory_space<vmem>>, %arg11: memref<1x32xf32, #tpu.memory_space<vmem>>, %arg12: memref<32x64xf32, #tpu.memory_space<vmem>>, %arg13: memref<1x64xf32, #tpu.memory_space<vmem>>, %arg14: memref<64x32xf32, #tpu.memory_space<vmem>>, %arg15: memref<1x32xf32, #tpu.memory_space<vmem>>, %arg16: memref<1x32xf32, #tpu.memory_space<vmem>>, %arg17: memref<1x32xf32, #tpu.memory_space<vmem>>, %arg18: memref<1x8x32xf32, #tpu.memory_space<vmem>>, %arg19: memref<1x32x8xf32, #tpu.memory_space<vmem>>) attributes {dimension_semantics = [#tpu.dimension_semantics<parallel>], iteration_bounds = array<i64: 2>, scalar_prefetch = 0 : i64, scratch_operands = 0 : i64, tpu.core_type = #tpu.core_type<tc>, window_params = [{transform_indices = @transform_0, window_bounds = array<i64: 1, 8, 32>}, {transform_indices = @transform_1, window_bounds = array<i64: 1, 8, 32>}, {transform_indices = @transform_2, window_bounds = array<i64: 1, 8, 32>}, {pipeline_mode = #tpu.pipeline_mode<synchronous>, transform_indices = @transform_3, window_bounds = array<i64: 32, 32>}, {pipeline_mode = #tpu.pipeline_mode<synchronous>, transform_indices = @transform_4, window_bounds = array<i64: 1, 32>}, {pipeline_mode = #tpu.pipeline_mode<synchronous>, transform_indices = @transform_5, window_bounds = array<i64: 32, 32>}, {pipeline_mode = #tpu.pipeline_mode<synchronous>, transform_indices = @transform_6, window_bounds = array<i64: 1, 32>}, {pipeline_mode = #tpu.pipeline_mode<synchronous>, transform_indices = @transform_7, window_bounds = array<i64: 32, 32>}, {pipeline_mode = #tpu.pipeline_mode<synchronous>, transform_indices = @transform_8, window_bounds = array<i64: 1, 32>}, {pipeline_mode = #tpu.pipeline_mode<synchronous>, transform_indices = @transform_9, window_bounds = array<i64: 1, 32>}, {pipeline_mode = #tpu.pipeline_mode<synchronous>, transform_indices = @transform_10, window_bounds = array<i64: 1, 32>}, {pipeline_mode = #tpu.pipeline_mode<synchronous>, transform_indices = @transform_11, window_bounds = array<i64: 32, 64>}, {pipeline_mode = #tpu.pipeline_mode<synchronous>, transform_indices = @transform_12, window_bounds = array<i64: 1, 64>}, {pipeline_mode = #tpu.pipeline_mode<synchronous>, transform_indices = @transform_13, window_bounds = array<i64: 64, 32>}, {pipeline_mode = #tpu.pipeline_mode<synchronous>, transform_indices = @transform_14, window_bounds = array<i64: 1, 32>}, {pipeline_mode = #tpu.pipeline_mode<synchronous>, transform_indices = @transform_15, window_bounds = array<i64: 1, 32>}, {pipeline_mode = #tpu.pipeline_mode<synchronous>, transform_indices = @transform_16, window_bounds = array<i64: 1, 32>}, {transform_indices = @transform_17, window_bounds = array<i64: 1, 8, 32>}, {transform_indices = @transform_18, window_bounds = array<i64: 1, 32, 8>}]} {
    %c0 = arith.constant 0 : index
    %c0_0 = arith.constant 0 : index
    %c0_1 = arith.constant 0 : index
    %0 = vector.load %arg1[%c0, %c0_0, %c0_1] : memref<1x8x32xf32, #tpu.memory_space<vmem>>, vector<1x8x32xf32>
    %1 = vector.shape_cast %0 : vector<1x8x32xf32> to vector<8x32xf32>
    %c0_2 = arith.constant 0 : index
    %c0_3 = arith.constant 0 : index
    %c0_4 = arith.constant 0 : index
    %2 = vector.load %arg2[%c0_2, %c0_3, %c0_4] : memref<1x8x32xf32, #tpu.memory_space<vmem>>, vector<1x8x32xf32>
    %3 = vector.shape_cast %2 : vector<1x8x32xf32> to vector<8x32xf32>
    %c0_5 = arith.constant 0 : index
    %c0_6 = arith.constant 0 : index
    %c0_7 = arith.constant 0 : index
    %4 = vector.load %arg3[%c0_5, %c0_6, %c0_7] : memref<1x8x32xf32, #tpu.memory_space<vmem>>, vector<1x8x32xf32>
    %5 = vector.shape_cast %4 : vector<1x8x32xf32> to vector<8x32xf32>
    %c0_8 = arith.constant 0 : index
    %c0_9 = arith.constant 0 : index
    %6 = vector.load %arg5[%c0_8, %c0_9] : memref<1x32xf32, #tpu.memory_space<vmem>>, vector<1x32xf32>
    %c0_10 = arith.constant 0 : index
    %c0_11 = arith.constant 0 : index
    %7 = vector.load %arg7[%c0_10, %c0_11] : memref<1x32xf32, #tpu.memory_space<vmem>>, vector<1x32xf32>
    %c0_12 = arith.constant 0 : index
    %c0_13 = arith.constant 0 : index
    %8 = vector.load %arg9[%c0_12, %c0_13] : memref<1x32xf32, #tpu.memory_space<vmem>>, vector<1x32xf32>
    %c0_14 = arith.constant 0 : index
    %c0_15 = arith.constant 0 : index
    %9 = vector.load %arg4[%c0_14, %c0_15] : memref<32x32xf32, #tpu.memory_space<vmem>>, vector<32x32xf32>
    %cst = arith.constant dense<0.000000e+00> : vector<8x32xf32>
    %10 = tpu.matmul %3, %9, %cst {dimension_numbers = #tpu.dot_dimension_numbers<[1], [0], [0], [1], [0, 0, 1, 1], [], []>} : vector<8x32xf32>, vector<32x32xf32>, vector<8x32xf32> -> vector<8x32xf32>
    %11 = vector.broadcast %6 : vector<1x32xf32> to vector<8x32xf32>
    %12 = arith.addf %10, %11 : vector<8x32xf32>
    %cst_16 = arith.constant dense<0.000000e+00> : vector<8x32xf32>
    %13 = tpu.matmul %1, %9, %cst_16 {dimension_numbers = #tpu.dot_dimension_numbers<[1], [0], [0], [1], [0, 0, 1, 1], [], []>} : vector<8x32xf32>, vector<32x32xf32>, vector<8x32xf32> -> vector<8x32xf32>
    %14 = vector.broadcast %6 : vector<1x32xf32> to vector<8x32xf32>
    %15 = arith.addf %13, %14 : vector<8x32xf32>
    %cst_17 = arith.constant 0.353553385 : f32
    %16 = vector.broadcast %cst_17 : f32 to vector<8x32xf32>
    %17 = arith.mulf %15, %16 : vector<8x32xf32>
    %c0_18 = arith.constant 0 : index
    %c0_19 = arith.constant 0 : index
    %18 = vector.load %arg6[%c0_18, %c0_19] : memref<32x32xf32, #tpu.memory_space<vmem>>, vector<32x32xf32>
    %cst_20 = arith.constant dense<0.000000e+00> : vector<8x32xf32>
    %19 = tpu.matmul %5, %18, %cst_20 {dimension_numbers = #tpu.dot_dimension_numbers<[1], [0], [0], [1], [0, 0, 1, 1], [], []>} : vector<8x32xf32>, vector<32x32xf32>, vector<8x32xf32> -> vector<8x32xf32>
    %20 = vector.broadcast %7 : vector<1x32xf32> to vector<8x32xf32>
    %21 = arith.addf %19, %20 : vector<8x32xf32>
    %22 = tpu.iota {dimensions = array<i32: 0>} : vector<8x8xi32>
    %23 = tpu.iota {dimensions = array<i32: 1>} : vector<8x8xi32>
    %24 = arith.subi %23, %22 : vector<8x8xi32>
    %c0_i32 = arith.constant 0 : i32
    %25 = vector.broadcast %c0_i32 : i32 to vector<8x8xi32>
    %26 = arith.cmpi slt, %24, %25 : vector<8x8xi32>
    %27 = vector.extract_strided_slice %17 {offsets = [0, 0], sizes = [8, 8], strides = [1, 1]} : vector<8x32xf32> to vector<8x8xf32>
    %28 = vector.shape_cast %27 : vector<8x8xf32> to vector<1x8x8xf32>
    %29 = vector.extract_strided_slice %12 {offsets = [0, 0], sizes = [8, 8], strides = [1, 1]} : vector<8x32xf32> to vector<8x8xf32>
    %30 = vector.shape_cast %29 : vector<8x8xf32> to vector<1x8x8xf32>
    %31 = vector.extract_strided_slice %21 {offsets = [0, 0], sizes = [8, 8], strides = [1, 1]} : vector<8x32xf32> to vector<8x8xf32>
    %32 = vector.shape_cast %31 : vector<8x8xf32> to vector<1x8x8xf32>
    "tpu.trace_start"() <{level = 10 : i32, message = "bqd,bkd->bqk"}> : () -> ()
    %cst_21 = arith.constant dense<0.000000e+00> : vector<1x8x8xf32>
    %33 = tpu.matmul %28, %30, %cst_21 {dimension_numbers = #tpu.dot_dimension_numbers<[2], [2], [1], [1], [0, 0, 0, 1, 1, 1], [0], [0]>} : vector<1x8x8xf32>, vector<1x8x8xf32>, vector<1x8x8xf32> -> vector<1x8x8xf32>
    "tpu.trace_stop"() : () -> ()
    %34 = vector.shape_cast %26 : vector<8x8xi1> to vector<1x8x8xi1>
    %cst_22 = arith.constant -1.000000e+32 : f32
    %35 = vector.broadcast %cst_22 : f32 to vector<1x8x8xf32>
    %36 = arith.select %34, %33, %35 : vector<1x8x8xi1>, vector<1x8x8xf32>
    %cst_23 = arith.constant dense<0xFF800000> : vector<1x8xf32>
    %37 = vector.multi_reduction <maximumf>, %36, %cst_23 [2] : vector<1x8x8xf32> to vector<1x8xf32>
    %38 = vector.shape_cast %37 : vector<1x8xf32> to vector<1x8x1xf32>
    %39 = vector.broadcast %38 : vector<1x8x1xf32> to vector<1x8x8xf32>
    %40 = arith.subf %36, %39 : vector<1x8x8xf32>
    %41 = math.exp %40 : vector<1x8x8xf32>
    %cst_24 = arith.constant dense<0.000000e+00> : vector<1x8xf32>
    %42 = vector.multi_reduction <add>, %41, %cst_24 [2] : vector<1x8x8xf32> to vector<1x8xf32>
    %43 = vector.shape_cast %42 : vector<1x8xf32> to vector<1x8x1xf32>
    %cst_25 = arith.constant 1.000000e+00 : f32
    %44 = vector.broadcast %cst_25 : f32 to vector<1x8x1xf32>
    %45 = arith.divf %44, %43 : vector<1x8x1xf32>
    %46 = vector.broadcast %45 : vector<1x8x1xf32> to vector<1x8x8xf32>
    %47 = arith.mulf %41, %46 : vector<1x8x8xf32>
    %c0_26 = arith.constant 0 : index
    %c0_27 = arith.constant 0 : index
    %c0_28 = arith.constant 0 : index
    %48 = vector.load %arg19[%c0_26, %c0_27, %c0_28] : memref<1x32x8xf32, #tpu.memory_space<vmem>>, vector<1x8x8xf32>
    tpu.vector_store %arg19[%c0_26, %c0_27, %c0_28], %47 {strides = array<i32>} : memref<1x32x8xf32, #tpu.memory_space<vmem>>, vector<1x8x8xf32>,
    "tpu.trace_start"() <{level = 10 : i32, message = "bqk,bkd->bqd"}> : () -> ()
    %cst_29 = arith.constant dense<0.000000e+00> : vector<1x8x8xf32>
    %49 = tpu.matmul %47, %32, %cst_29 {dimension_numbers = #tpu.dot_dimension_numbers<[2], [1], [1], [2], [0, 0, 0, 1, 1, 2], [0], [0]>} : vector<1x8x8xf32>, vector<1x8x8xf32>, vector<1x8x8xf32> -> vector<1x8x8xf32>
    "tpu.trace_stop"() : () -> ()
    %50 = vector.extract_strided_slice %17 {offsets = [0, 8], sizes = [8, 8], strides = [1, 1]} : vector<8x32xf32> to vector<8x8xf32>
    %51 = vector.shape_cast %50 : vector<8x8xf32> to vector<1x8x8xf32>
    %52 = vector.extract_strided_slice %12 {offsets = [0, 8], sizes = [8, 8], strides = [1, 1]} : vector<8x32xf32> to vector<8x8xf32>
    %53 = vector.shape_cast %52 : vector<8x8xf32> to vector<1x8x8xf32>
    %54 = vector.extract_strided_slice %21 {offsets = [0, 8], sizes = [8, 8], strides = [1, 1]} : vector<8x32xf32> to vector<8x8xf32>
    %55 = vector.shape_cast %54 : vector<8x8xf32> to vector<1x8x8xf32>
    "tpu.trace_start"() <{level = 10 : i32, message = "bqd,bkd->bqk"}> : () -> ()
    %cst_30 = arith.constant dense<0.000000e+00> : vector<1x8x8xf32>
    %56 = tpu.matmul %51, %53, %cst_30 {dimension_numbers = #tpu.dot_dimension_numbers<[2], [2], [1], [1], [0, 0, 0, 1, 1, 1], [0], [0]>} : vector<1x8x8xf32>, vector<1x8x8xf32>, vector<1x8x8xf32> -> vector<1x8x8xf32>
    "tpu.trace_stop"() : () -> ()
    %57 = vector.shape_cast %26 : vector<8x8xi1> to vector<1x8x8xi1>
    %cst_31 = arith.constant -1.000000e+32 : f32
    %58 = vector.broadcast %cst_31 : f32 to vector<1x8x8xf32>
    %59 = arith.select %57, %56, %58 : vector<1x8x8xi1>, vector<1x8x8xf32>
    %cst_32 = arith.constant dense<0xFF800000> : vector<1x8xf32>
    %60 = vector.multi_reduction <maximumf>, %59, %cst_32 [2] : vector<1x8x8xf32> to vector<1x8xf32>
    %61 = vector.shape_cast %60 : vector<1x8xf32> to vector<1x8x1xf32>
    %62 = vector.broadcast %61 : vector<1x8x1xf32> to vector<1x8x8xf32>
    %63 = arith.subf %59, %62 : vector<1x8x8xf32>
    %64 = math.exp %63 : vector<1x8x8xf32>
    %cst_33 = arith.constant dense<0.000000e+00> : vector<1x8xf32>
    %65 = vector.multi_reduction <add>, %64, %cst_33 [2] : vector<1x8x8xf32> to vector<1x8xf32>
    %66 = vector.shape_cast %65 : vector<1x8xf32> to vector<1x8x1xf32>
    %cst_34 = arith.constant 1.000000e+00 : f32
    %67 = vector.broadcast %cst_34 : f32 to vector<1x8x1xf32>
    %68 = arith.divf %67, %66 : vector<1x8x1xf32>
    %69 = vector.broadcast %68 : vector<1x8x1xf32> to vector<1x8x8xf32>
    %70 = arith.mulf %64, %69 : vector<1x8x8xf32>
    %c0_35 = arith.constant 0 : index
    %c8 = arith.constant 8 : index
    %c0_36 = arith.constant 0 : index
    %71 = vector.load %arg19[%c0_35, %c8, %c0_36] : memref<1x32x8xf32, #tpu.memory_space<vmem>>, vector<1x8x8xf32>
    tpu.vector_store %arg19[%c0_35, %c8, %c0_36], %70 {strides = array<i32>} : memref<1x32x8xf32, #tpu.memory_space<vmem>>, vector<1x8x8xf32>,
    "tpu.trace_start"() <{level = 10 : i32, message = "bqk,bkd->bqd"}> : () -> ()
    %cst_37 = arith.constant dense<0.000000e+00> : vector<1x8x8xf32>
    %72 = tpu.matmul %70, %55, %cst_37 {dimension_numbers = #tpu.dot_dimension_numbers<[2], [1], [1], [2], [0, 0, 0, 1, 1, 2], [0], [0]>} : vector<1x8x8xf32>, vector<1x8x8xf32>, vector<1x8x8xf32> -> vector<1x8x8xf32>
    "tpu.trace_stop"() : () -> ()
    %73 = vector.extract_strided_slice %17 {offsets = [0, 16], sizes = [8, 8], strides = [1, 1]} : vector<8x32xf32> to vector<8x8xf32>
    %74 = vector.shape_cast %73 : vector<8x8xf32> to vector<1x8x8xf32>
    %75 = vector.extract_strided_slice %12 {offsets = [0, 16], sizes = [8, 8], strides = [1, 1]} : vector<8x32xf32> to vector<8x8xf32>
    %76 = vector.shape_cast %75 : vector<8x8xf32> to vector<1x8x8xf32>
    %77 = vector.extract_strided_slice %21 {offsets = [0, 16], sizes = [8, 8], strides = [1, 1]} : vector<8x32xf32> to vector<8x8xf32>
    %78 = vector.shape_cast %77 : vector<8x8xf32> to vector<1x8x8xf32>
    "tpu.trace_start"() <{level = 10 : i32, message = "bqd,bkd->bqk"}> : () -> ()
    %cst_38 = arith.constant dense<0.000000e+00> : vector<1x8x8xf32>
    %79 = tpu.matmul %74, %76, %cst_38 {dimension_numbers = #tpu.dot_dimension_numbers<[2], [2], [1], [1], [0, 0, 0, 1, 1, 1], [0], [0]>} : vector<1x8x8xf32>, vector<1x8x8xf32>, vector<1x8x8xf32> -> vector<1x8x8xf32>
    "tpu.trace_stop"() : () -> ()
    %80 = vector.shape_cast %26 : vector<8x8xi1> to vector<1x8x8xi1>
    %cst_39 = arith.constant -1.000000e+32 : f32
    %81 = vector.broadcast %cst_39 : f32 to vector<1x8x8xf32>
    %82 = arith.select %80, %79, %81 : vector<1x8x8xi1>, vector<1x8x8xf32>
    %cst_40 = arith.constant dense<0xFF800000> : vector<1x8xf32>
    %83 = vector.multi_reduction <maximumf>, %82, %cst_40 [2] : vector<1x8x8xf32> to vector<1x8xf32>
    %84 = vector.shape_cast %83 : vector<1x8xf32> to vector<1x8x1xf32>
    %85 = vector.broadcast %84 : vector<1x8x1xf32> to vector<1x8x8xf32>
    %86 = arith.subf %82, %85 : vector<1x8x8xf32>
    %87 = math.exp %86 : vector<1x8x8xf32>
    %cst_41 = arith.constant dense<0.000000e+00> : vector<1x8xf32>
    %88 = vector.multi_reduction <add>, %87, %cst_41 [2] : vector<1x8x8xf32> to vector<1x8xf32>
    %89 = vector.shape_cast %88 : vector<1x8xf32> to vector<1x8x1xf32>
    %cst_42 = arith.constant 1.000000e+00 : f32
    %90 = vector.broadcast %cst_42 : f32 to vector<1x8x1xf32>
    %91 = arith.divf %90, %89 : vector<1x8x1xf32>
    %92 = vector.broadcast %91 : vector<1x8x1xf32> to vector<1x8x8xf32>
    %93 = arith.mulf %87, %92 : vector<1x8x8xf32>
    %c0_43 = arith.constant 0 : index
    %c16 = arith.constant 16 : index
    %c0_44 = arith.constant 0 : index
    %94 = vector.load %arg19[%c0_43, %c16, %c0_44] : memref<1x32x8xf32, #tpu.memory_space<vmem>>, vector<1x8x8xf32>
    tpu.vector_store %arg19[%c0_43, %c16, %c0_44], %93 {strides = array<i32>} : memref<1x32x8xf32, #tpu.memory_space<vmem>>, vector<1x8x8xf32>,
    "tpu.trace_start"() <{level = 10 : i32, message = "bqk,bkd->bqd"}> : () -> ()
    %cst_45 = arith.constant dense<0.000000e+00> : vector<1x8x8xf32>
    %95 = tpu.matmul %93, %78, %cst_45 {dimension_numbers = #tpu.dot_dimension_numbers<[2], [1], [1], [2], [0, 0, 0, 1, 1, 2], [0], [0]>} : vector<1x8x8xf32>, vector<1x8x8xf32>, vector<1x8x8xf32> -> vector<1x8x8xf32>
    "tpu.trace_stop"() : () -> ()
    %96 = vector.extract_strided_slice %17 {offsets = [0, 24], sizes = [8, 8], strides = [1, 1]} : vector<8x32xf32> to vector<8x8xf32>
    %97 = vector.shape_cast %96 : vector<8x8xf32> to vector<1x8x8xf32>
    %98 = vector.extract_strided_slice %12 {offsets = [0, 24], sizes = [8, 8], strides = [1, 1]} : vector<8x32xf32> to vector<8x8xf32>
    %99 = vector.shape_cast %98 : vector<8x8xf32> to vector<1x8x8xf32>
    %100 = vector.extract_strided_slice %21 {offsets = [0, 24], sizes = [8, 8], strides = [1, 1]} : vector<8x32xf32> to vector<8x8xf32>
    %101 = vector.shape_cast %100 : vector<8x8xf32> to vector<1x8x8xf32>
    "tpu.trace_start"() <{level = 10 : i32, message = "bqd,bkd->bqk"}> : () -> ()
    %cst_46 = arith.constant dense<0.000000e+00> : vector<1x8x8xf32>
    %102 = tpu.matmul %97, %99, %cst_46 {dimension_numbers = #tpu.dot_dimension_numbers<[2], [2], [1], [1], [0, 0, 0, 1, 1, 1], [0], [0]>} : vector<1x8x8xf32>, vector<1x8x8xf32>, vector<1x8x8xf32> -> vector<1x8x8xf32>
    "tpu.trace_stop"() : () -> ()
    %103 = vector.shape_cast %26 : vector<8x8xi1> to vector<1x8x8xi1>
    %cst_47 = arith.constant -1.000000e+32 : f32
    %104 = vector.broadcast %cst_47 : f32 to vector<1x8x8xf32>
    %105 = arith.select %103, %102, %104 : vector<1x8x8xi1>, vector<1x8x8xf32>
    %cst_48 = arith.constant dense<0xFF800000> : vector<1x8xf32>
    %106 = vector.multi_reduction <maximumf>, %105, %cst_48 [2] : vector<1x8x8xf32> to vector<1x8xf32>
    %107 = vector.shape_cast %106 : vector<1x8xf32> to vector<1x8x1xf32>
    %108 = vector.broadcast %107 : vector<1x8x1xf32> to vector<1x8x8xf32>
    %109 = arith.subf %105, %108 : vector<1x8x8xf32>
    %110 = math.exp %109 : vector<1x8x8xf32>
    %cst_49 = arith.constant dense<0.000000e+00> : vector<1x8xf32>
    %111 = vector.multi_reduction <add>, %110, %cst_49 [2] : vector<1x8x8xf32> to vector<1x8xf32>
    %112 = vector.shape_cast %111 : vector<1x8xf32> to vector<1x8x1xf32>
    %cst_50 = arith.constant 1.000000e+00 : f32
    %113 = vector.broadcast %cst_50 : f32 to vector<1x8x1xf32>
    %114 = arith.divf %113, %112 : vector<1x8x1xf32>
    %115 = vector.broadcast %114 : vector<1x8x1xf32> to vector<1x8x8xf32>
    %116 = arith.mulf %110, %115 : vector<1x8x8xf32>
    %c0_51 = arith.constant 0 : index
    %c24 = arith.constant 24 : index
    %c0_52 = arith.constant 0 : index
    %117 = vector.load %arg19[%c0_51, %c24, %c0_52] : memref<1x32x8xf32, #tpu.memory_space<vmem>>, vector<1x8x8xf32>
    tpu.vector_store %arg19[%c0_51, %c24, %c0_52], %116 {strides = array<i32>} : memref<1x32x8xf32, #tpu.memory_space<vmem>>, vector<1x8x8xf32>,
    "tpu.trace_start"() <{level = 10 : i32, message = "bqk,bkd->bqd"}> : () -> ()
    %cst_53 = arith.constant dense<0.000000e+00> : vector<1x8x8xf32>
    %118 = tpu.matmul %116, %101, %cst_53 {dimension_numbers = #tpu.dot_dimension_numbers<[2], [1], [1], [2], [0, 0, 0, 1, 1, 2], [0], [0]>} : vector<1x8x8xf32>, vector<1x8x8xf32>, vector<1x8x8xf32> -> vector<1x8x8xf32>
    "tpu.trace_stop"() : () -> ()
    %119 = tpu.concatenate %49, %72, %95, %118 in 2 : vector<1x8x8xf32>, vector<1x8x8xf32>, vector<1x8x8xf32>, vector<1x8x8xf32> -> vector<1x8x32xf32>
    %120 = tpu.iota {dimensions = array<i32: 0>} : vector<8x1xi32>
    %c0_i32_54 = arith.constant 0 : i32
    %121 = vector.broadcast %c0_i32_54 : i32 to vector<8x1xi32>
    %122 = arith.cmpi ne, %120, %121 : vector<8x1xi32>
    %123 = vector.shape_cast %122 : vector<8x1xi1> to vector<1x8x1xi1>
    %cst_55 = arith.constant 0.000000e+00 : f32
    %124 = vector.shape_cast %123 : vector<1x8x1xi1> to vector<1x8x1xi1>
    %125 = vector.broadcast %124 : vector<1x8x1xi1> to vector<1x8x32xi1>
    %126 = vector.broadcast %cst_55 : f32 to vector<1x8x32xf32>
    %127 = arith.select %125, %119, %126 : vector<1x8x32xi1>, vector<1x8x32xf32>
    %128 = vector.shape_cast %127 : vector<1x8x32xf32> to vector<8x32xf32>
    %c0_56 = arith.constant 0 : index
    %c0_57 = arith.constant 0 : index
    %129 = vector.load %arg8[%c0_56, %c0_57] : memref<32x32xf32, #tpu.memory_space<vmem>>, vector<32x32xf32>
    %cst_58 = arith.constant dense<0.000000e+00> : vector<8x32xf32>
    %130 = tpu.matmul %128, %129, %cst_58 {dimension_numbers = #tpu.dot_dimension_numbers<[1], [0], [0], [1], [0, 0, 1, 1], [], []>} : vector<8x32xf32>, vector<32x32xf32>, vector<8x32xf32> -> vector<8x32xf32>
    %131 = vector.broadcast %8 : vector<1x32xf32> to vector<8x32xf32>
    %132 = arith.addf %130, %131 : vector<8x32xf32>
    %133 = arith.addf %1, %132 : vector<8x32xf32>
    %cst_59 = arith.constant dense<0.000000e+00> : vector<8xf32>
    %134 = vector.multi_reduction <add>, %133, %cst_59 [1] : vector<8x32xf32> to vector<8xf32>
    %135 = vector.shape_cast %134 : vector<8xf32> to vector<8x1xf32>
    %cst_60 = arith.constant 3.200000e+01 : f32
    %136 = vector.broadcast %cst_60 : f32 to vector<8x1xf32>
    %137 = arith.divf %135, %136 : vector<8x1xf32>
    %138 = vector.broadcast %137 : vector<8x1xf32> to vector<8x32xf32>
    %139 = arith.subf %133, %138 : vector<8x32xf32>
    %140 = arith.mulf %139, %139 : vector<8x32xf32>
    %cst_61 = arith.constant dense<0.000000e+00> : vector<8xf32>
    %141 = vector.multi_reduction <add>, %140, %cst_61 [1] : vector<8x32xf32> to vector<8xf32>
    %142 = vector.shape_cast %141 : vector<8xf32> to vector<8x1xf32>
    %cst_62 = arith.constant 3.200000e+01 : f32
    %143 = vector.broadcast %cst_62 : f32 to vector<8x1xf32>
    %144 = arith.divf %142, %143 : vector<8x1xf32>
    %145 = vector.broadcast %137 : vector<8x1xf32> to vector<8x32xf32>
    %146 = arith.subf %133, %145 : vector<8x32xf32>
    %cst_63 = arith.constant 9.99999974E-6 : f32
    %147 = vector.broadcast %cst_63 : f32 to vector<8x1xf32>
    %148 = arith.addf %144, %147 : vector<8x1xf32>
    %149 = math.rsqrt %148 : vector<8x1xf32>
    %150 = vector.broadcast %149 : vector<8x1xf32> to vector<8x32xf32>
    %151 = arith.mulf %146, %150 : vector<8x32xf32>
    %c0_64 = arith.constant 0 : index
    %c0_65 = arith.constant 0 : index
    %152 = vector.load %arg10[%c0_64, %c0_65] : memref<1x32xf32, #tpu.memory_space<vmem>>, vector<1x32xf32>
    %153 = vector.broadcast %152 : vector<1x32xf32> to vector<8x32xf32>
    %154 = arith.mulf %151, %153 : vector<8x32xf32>
    %c0_66 = arith.constant 0 : index
    %c0_67 = arith.constant 0 : index
    %155 = vector.load %arg11[%c0_66, %c0_67] : memref<1x32xf32, #tpu.memory_space<vmem>>, vector<1x32xf32>
    %156 = vector.broadcast %155 : vector<1x32xf32> to vector<8x32xf32>
    %157 = arith.addf %154, %156 : vector<8x32xf32>
    %c0_68 = arith.constant 0 : index
    %c0_69 = arith.constant 0 : index
    %158 = vector.load %arg12[%c0_68, %c0_69] : memref<32x64xf32, #tpu.memory_space<vmem>>, vector<32x64xf32>
    %cst_70 = arith.constant dense<0.000000e+00> : vector<8x64xf32>
    %159 = tpu.matmul %157, %158, %cst_70 {dimension_numbers = #tpu.dot_dimension_numbers<[1], [0], [0], [1], [0, 0, 1, 1], [], []>} : vector<8x32xf32>, vector<32x64xf32>, vector<8x64xf32> -> vector<8x64xf32>
    %c0_71 = arith.constant 0 : index
    %c0_72 = arith.constant 0 : index
    %160 = vector.load %arg13[%c0_71, %c0_72] : memref<1x64xf32, #tpu.memory_space<vmem>>, vector<1x64xf32>
    %161 = vector.broadcast %160 : vector<1x64xf32> to vector<8x64xf32>
    %162 = arith.addf %159, %161 : vector<8x64xf32>
    %cst_73 = arith.constant 0.000000e+00 : f32
    %163 = vector.broadcast %cst_73 : f32 to vector<8x64xf32>
    %164 = arith.maximumf %162, %163 : vector<8x64xf32>
    %c0_74 = arith.constant 0 : index
    %c0_75 = arith.constant 0 : index
    %165 = vector.load %arg14[%c0_74, %c0_75] : memref<64x32xf32, #tpu.memory_space<vmem>>, vector<64x32xf32>
    %cst_76 = arith.constant dense<0.000000e+00> : vector<8x32xf32>
    %166 = tpu.matmul %164, %165, %cst_76 {dimension_numbers = #tpu.dot_dimension_numbers<[1], [0], [0], [1], [0, 0, 1, 1], [], []>} : vector<8x64xf32>, vector<64x32xf32>, vector<8x32xf32> -> vector<8x32xf32>
    %c0_77 = arith.constant 0 : index
    %c0_78 = arith.constant 0 : index
    %167 = vector.load %arg15[%c0_77, %c0_78] : memref<1x32xf32, #tpu.memory_space<vmem>>, vector<1x32xf32>
    %168 = vector.broadcast %167 : vector<1x32xf32> to vector<8x32xf32>
    %169 = arith.addf %166, %168 : vector<8x32xf32>
    %170 = arith.addf %157, %169 : vector<8x32xf32>
    %cst_79 = arith.constant dense<0.000000e+00> : vector<8xf32>
    %171 = vector.multi_reduction <add>, %170, %cst_79 [1] : vector<8x32xf32> to vector<8xf32>
    %172 = vector.shape_cast %171 : vector<8xf32> to vector<8x1xf32>
    %cst_80 = arith.constant 3.200000e+01 : f32
    %173 = vector.broadcast %cst_80 : f32 to vector<8x1xf32>
    %174 = arith.divf %172, %173 : vector<8x1xf32>
    %175 = vector.broadcast %174 : vector<8x1xf32> to vector<8x32xf32>
    %176 = arith.subf %170, %175 : vector<8x32xf32>
    %177 = arith.mulf %176, %176 : vector<8x32xf32>
    %cst_81 = arith.constant dense<0.000000e+00> : vector<8xf32>
    %178 = vector.multi_reduction <add>, %177, %cst_81 [1] : vector<8x32xf32> to vector<8xf32>
    %179 = vector.shape_cast %178 : vector<8xf32> to vector<8x1xf32>
    %cst_82 = arith.constant 3.200000e+01 : f32
    %180 = vector.broadcast %cst_82 : f32 to vector<8x1xf32>
    %181 = arith.divf %179, %180 : vector<8x1xf32>
    %182 = vector.broadcast %174 : vector<8x1xf32> to vector<8x32xf32>
    %183 = arith.subf %170, %182 : vector<8x32xf32>
    %cst_83 = arith.constant 9.99999974E-6 : f32
    %184 = vector.broadcast %cst_83 : f32 to vector<8x1xf32>
    %185 = arith.addf %181, %184 : vector<8x1xf32>
    %186 = math.rsqrt %185 : vector<8x1xf32>
    %187 = vector.broadcast %186 : vector<8x1xf32> to vector<8x32xf32>
    %188 = arith.mulf %183, %187 : vector<8x32xf32>
    %c0_84 = arith.constant 0 : index
    %c0_85 = arith.constant 0 : index
    %189 = vector.load %arg16[%c0_84, %c0_85] : memref<1x32xf32, #tpu.memory_space<vmem>>, vector<1x32xf32>
    %190 = vector.broadcast %189 : vector<1x32xf32> to vector<8x32xf32>
    %191 = arith.mulf %188, %190 : vector<8x32xf32>
    %c0_86 = arith.constant 0 : index
    %c0_87 = arith.constant 0 : index
    %192 = vector.load %arg17[%c0_86, %c0_87] : memref<1x32xf32, #tpu.memory_space<vmem>>, vector<1x32xf32>
    %193 = vector.broadcast %192 : vector<1x32xf32> to vector<8x32xf32>
    %194 = arith.addf %191, %193 : vector<8x32xf32>
    %195 = vector.shape_cast %194 : vector<8x32xf32> to vector<1x8x32xf32>
    %c0_88 = arith.constant 0 : index
    %c0_89 = arith.constant 0 : index
    %c0_90 = arith.constant 0 : index
    %196 = vector.load %arg18[%c0_88, %c0_89, %c0_90] : memref<1x8x32xf32, #tpu.memory_space<vmem>>, vector<1x8x32xf32>
    tpu.vector_store %arg18[%c0_88, %c0_89, %c0_90], %195 {strides = array<i32>} : memref<1x8x32xf32, #tpu.memory_space<vmem>>, vector<1x8x32xf32>,
    return
  }
  func.func @transform_0(%arg0: i32) -> (i32, i32, i32) {
    %c0_i32 = arith.constant 0 : i32
    %c0_i32_0 = arith.constant 0 : i32
    %c0_i32_1 = arith.constant 0 : i32
    return %arg0, %c0_i32, %c0_i32_0 : i32, i32, i32
  }
  func.func @transform_1(%arg0: i32) -> (i32, i32, i32) {
    %c0_i32 = arith.constant 0 : i32
    %c0_i32_0 = arith.constant 0 : i32
    %c0_i32_1 = arith.constant 0 : i32
    return %arg0, %c0_i32, %c0_i32_0 : i32, i32, i32
  }
  func.func @transform_2(%arg0: i32) -> (i32, i32, i32) {
    %c0_i32 = arith.constant 0 : i32
    %c0_i32_0 = arith.constant 0 : i32
    %c0_i32_1 = arith.constant 0 : i32
    return %arg0, %c0_i32, %c0_i32_0 : i32, i32, i32
  }
  func.func @transform_3(%arg0: i32) -> (i32, i32) {
    %c0_i32 = arith.constant 0 : i32
    %c0_i32_0 = arith.constant 0 : i32
    %c0_i32_1 = arith.constant 0 : i32
    return %c0_i32, %c0_i32_0 : i32, i32
  }
  func.func @transform_4(%arg0: i32) -> (i32, i32) {
    %c0_i32 = arith.constant 0 : i32
    %c0_i32_0 = arith.constant 0 : i32
    %c0_i32_1 = arith.constant 0 : i32
    return %c0_i32, %c0_i32_0 : i32, i32
  }
  func.func @transform_5(%arg0: i32) -> (i32, i32) {
    %c0_i32 = arith.constant 0 : i32
    %c0_i32_0 = arith.constant 0 : i32
    %c0_i32_1 = arith.constant 0 : i32
    return %c0_i32, %c0_i32_0 : i32, i32
  }
  func.func @transform_6(%arg0: i32) -> (i32, i32) {
    %c0_i32 = arith.constant 0 : i32
    %c0_i32_0 = arith.constant 0 : i32
    %c0_i32_1 = arith.constant 0 : i32
    return %c0_i32, %c0_i32_0 : i32, i32
  }
  func.func @transform_7(%arg0: i32) -> (i32, i32) {
    %c0_i32 = arith.constant 0 : i32
    %c0_i32_0 = arith.constant 0 : i32
    %c0_i32_1 = arith.constant 0 : i32
    return %c0_i32, %c0_i32_0 : i32, i32
  }
  func.func @transform_8(%arg0: i32) -> (i32, i32) {
    %c0_i32 = arith.constant 0 : i32
    %c0_i32_0 = arith.constant 0 : i32
    %c0_i32_1 = arith.constant 0 : i32
    return %c0_i32, %c0_i32_0 : i32, i32
  }
  func.func @transform_9(%arg0: i32) -> (i32, i32) {
    %c0_i32 = arith.constant 0 : i32
    %c0_i32_0 = arith.constant 0 : i32
    %c0_i32_1 = arith.constant 0 : i32
    return %c0_i32, %c0_i32_0 : i32, i32
  }
  func.func @transform_10(%arg0: i32) -> (i32, i32) {
    %c0_i32 = arith.constant 0 : i32
    %c0_i32_0 = arith.constant 0 : i32
    %c0_i32_1 = arith.constant 0 : i32
    return %c0_i32, %c0_i32_0 : i32, i32
  }
  func.func @transform_11(%arg0: i32) -> (i32, i32) {
    %c0_i32 = arith.constant 0 : i32
    %c0_i32_0 = arith.constant 0 : i32
    %c0_i32_1 = arith.constant 0 : i32
    return %c0_i32, %c0_i32_0 : i32, i32
  }
  func.func @transform_12(%arg0: i32) -> (i32, i32) {
    %c0_i32 = arith.constant 0 : i32
    %c0_i32_0 = arith.constant 0 : i32
    %c0_i32_1 = arith.constant 0 : i32
    return %c0_i32, %c0_i32_0 : i32, i32
  }
  func.func @transform_13(%arg0: i32) -> (i32, i32) {
    %c0_i32 = arith.constant 0 : i32
    %c0_i32_0 = arith.constant 0 : i32
    %c0_i32_1 = arith.constant 0 : i32
    return %c0_i32, %c0_i32_0 : i32, i32
  }
  func.func @transform_14(%arg0: i32) -> (i32, i32) {
    %c0_i32 = arith.constant 0 : i32
    %c0_i32_0 = arith.constant 0 : i32
    %c0_i32_1 = arith.constant 0 : i32
    return %c0_i32, %c0_i32_0 : i32, i32
  }
  func.func @transform_15(%arg0: i32) -> (i32, i32) {
    %c0_i32 = arith.constant 0 : i32
    %c0_i32_0 = arith.constant 0 : i32
    %c0_i32_1 = arith.constant 0 : i32
    return %c0_i32, %c0_i32_0 : i32, i32
  }
  func.func @transform_16(%arg0: i32) -> (i32, i32) {
    %c0_i32 = arith.constant 0 : i32
    %c0_i32_0 = arith.constant 0 : i32
    %c0_i32_1 = arith.constant 0 : i32
    return %c0_i32, %c0_i32_0 : i32, i32
  }
  func.func @transform_17(%arg0: i32) -> (i32, i32, i32) {
    %c0_i32 = arith.constant 0 : i32
    %c0_i32_0 = arith.constant 0 : i32
    %c0_i32_1 = arith.constant 0 : i32
    return %arg0, %c0_i32, %c0_i32_0 : i32, i32, i32
  }
  func.func @transform_18(%arg0: i32) -> (i32, i32, i32) {
    %c0_i32 = arith.constant 0 : i32
    %c0_i32_0 = arith.constant 0 : i32
    %c0_i32_1 = arith.constant 0 : i32
    return %arg0, %c0_i32, %c0_i32_0 : i32, i32, i32
  }
}

</mosaic_0001>

<llo_original>
// kernel: tpu_custom_call.1
$region0: #{tpu_custom_call.1}
  #allocation0 [shape = 'u32[]', space=smem, size = 0x4, offset = 0x4, fixed_abs, tag = 'smem constant byte address 0x4 - core index']
  #allocation1 [shape = 'u32[72,128]{1,0:T(1,128)}', space=vmem, size = 0x9000, scoped, tag = 'internal scratch']
  %s0 = inlined_call_operand.hbm [shape: f32[2,8,32], index: 0, kind: input, shape index: {}]
  %s1 = inlined_call_operand.hbm [shape: f32[2,8,32], index: 1, kind: input, shape index: {}]
  %s2 = inlined_call_operand.hbm [shape: f32[2,8,32], index: 2, kind: input, shape index: {}]
  %s3 = inlined_call_operand.vmem [shape: f32[32,32], index: 3, kind: input, shape index: {}]
  %s4 = inlined_call_operand.vmem [shape: f32[1,32], index: 4, kind: input, shape index: {}]
  %s5 = inlined_call_operand.vmem [shape: f32[32,32], index: 5, kind: input, shape index: {}]
  %s6 = inlined_call_operand.vmem [shape: f32[1,32], index: 6, kind: input, shape index: {}]
  %s7 = inlined_call_operand.vmem [shape: f32[32,32], index: 7, kind: input, shape index: {}]
  %s8 = inlined_call_operand.vmem [shape: f32[1,32], index: 8, kind: input, shape index: {}]
  %s9 = inlined_call_operand.vmem [shape: f32[1,32], index: 9, kind: input, shape index: {}]
  %s10 = inlined_call_operand.vmem [shape: f32[1,32], index: 10, kind: input, shape index: {}]
  %s11 = inlined_call_operand.hbm [shape: f32[32,64], index: 11, kind: input, shape index: {}]
  %s12 = inlined_call_operand.vmem [shape: f32[1,64], index: 12, kind: input, shape index: {}]
  %s13 = inlined_call_operand.vmem [shape: f32[64,32], index: 13, kind: input, shape index: {}]
  %s14 = inlined_call_operand.vmem [shape: f32[1,32], index: 14, kind: input, shape index: {}]
  %s15 = inlined_call_operand.vmem [shape: f32[1,32], index: 15, kind: input, shape index: {}]
  %s16 = inlined_call_operand.vmem [shape: f32[1,32], index: 16, kind: input, shape index: {}]
  %s17 = inlined_call_operand.hbm [shape: f32[2,8,32], index: 17, kind: output, shape index: {0}]
  %s18 = inlined_call_operand.vmem [shape: f32[2,32,8], index: 18, kind: output, shape index: {1}]
  %19 = xla_tuple %s17, %s18
  %s20 = sld [smem:[#allocation0]]
  $region125: #{tpu_custom_call.1} parent=0
    _
  %s22 = ssub.s32 1, %s20
  %s23 = scalar_select 0, %s22, %s20
  $region1: #{tpu_custom_call.1} parent=0
    #allocation2 [shape = 'u8[8192]{0}', space=vmem, size = 0x2000, scoped, tag = 'input window, operand 0']
    #allocation3 [shape = 's32[2]{0}', space=sflag, size = 0x8, scoped, tag = 'scoped memory for tpu_custom_call.1']
    #allocation4 [shape = 's32[2]{0}', space=sflag, size = 0x8, scoped, tag = 'scoped memory for tpu_custom_call.1']
    #allocation5 [shape = 'u8[8192]{0}', space=vmem, size = 0x2000, scoped, tag = 'input window, operand 1']
    #allocation6 [shape = 's32[2]{0}', space=sflag, size = 0x8, scoped, tag = 'scoped memory for tpu_custom_call.1']
    #allocation7 [shape = 'u8[8192]{0}', space=vmem, size = 0x2000, scoped, tag = 'input window, operand 2']
    #allocation8 [shape = 'u8[16384]{0}', space=vmem, size = 0x4000, scoped, tag = 'input window, operand 11, single buffered']
    #allocation9 [shape = 's32[1]{0}', space=sflag, size = 0x4, scoped, tag = 'scoped memory for tpu_custom_call.1']
    #allocation10 [shape = 'u8[8192]{0}', space=vmem, size = 0x2000, scoped, tag = 'output window, operand 0']
    %24 = vsyncpa [#allocation3], 0
    %s25 = scalar_lea.sflag [#allocation3], 1
    %26 = vsyncpa %s25, 0
    %27 = vsyncpa [#allocation6], 0
    %s28 = scalar_lea.sflag [#allocation6], 1
    %29 = vsyncpa %s28, 0
    %30 = vsyncpa [#allocation9], 0
    %31 = vsyncpa [#allocation4], 0
    %s32 = scalar_lea.sflag [#allocation4], 1
    %33 = vsyncpa %s32, 0
    loop: start=0, step=1, limit=4
    $region2: #{tpu_custom_call.1} parent=1 // loop_pre_header
      _
    $region3: #{tpu_custom_call.1} parent=1 // loop_header
      %s35 = sphi 0, %s39
      %p36 = scmp.ge.s32.totalorder %s35, 4
      %s45 = sphi 0, %s47
      %s48 = sphi 0, %s45
      %s49 = sphi 0, %s48
      %s65 = sphi 0, %s49
      %s71 = sphi 0, %s73
      %s74 = sphi 0, %s71
      %s75 = sphi 0, %s74
      %s91 = sphi 0, %s75
      %s97 = sphi 0, %s99
      %s100 = sphi 0, %s97
      %s101 = sphi 0, %s100
      %s117 = sphi 0, %s101
      %s121 = sphi 0, %s121
      %s123 = sphi 0, %s121
      %s124 = sphi 0, %s123
      %s138 = sphi 0, %s124
      %s142 = sphi 0, %s142
      %s144 = sphi 0, %s142
      %s145 = sphi 0, %s144
      %s159 = sphi 0, %s145
      %s163 = sphi 0, %s163
      %s165 = sphi 0, %s163
      %s166 = sphi 0, %s165
      %s180 = sphi 0, %s166
      %s184 = sphi 0, %s184
      %s186 = sphi 0, %s184
      %s187 = sphi 0, %s186
      %s201 = sphi 0, %s187
      %s205 = sphi 0, %s205
      %s207 = sphi 0, %s205
      %s208 = sphi 0, %s207
      %s222 = sphi 0, %s208
      %s226 = sphi 0, %s226
      %s228 = sphi 0, %s226
      %s229 = sphi 0, %s228
      %s243 = sphi 0, %s229
      %s247 = sphi 0, %s247
      %s249 = sphi 0, %s247
      %s250 = sphi 0, %s249
      %s264 = sphi 0, %s250
      %s268 = sphi 0, %s268
      %s270 = sphi 0, %s268
      %s271 = sphi 0, %s270
      %s285 = sphi 0, %s271
      %s289 = sphi 0, %s289
      %s291 = sphi 0, %s289
      %s292 = sphi 0, %s291
      %s306 = sphi 0, %s292
      %s310 = sphi 0, %s310
      %s312 = sphi 0, %s310
      %s313 = sphi 0, %s312
      %s327 = sphi 0, %s313
      %s331 = sphi 0, %s331
      %s333 = sphi 0, %s331
      %s334 = sphi 0, %s333
      %s348 = sphi 0, %s334
      %s352 = sphi 0, %s352
      %s354 = sphi 0, %s352
      %s355 = sphi 0, %s354
      %s369 = sphi 0, %s355
      %s373 = sphi 0, %s373
      %s375 = sphi 0, %s373
      %s376 = sphi 0, %s375
      %s390 = sphi 0, %s376
      %s394 = sphi 0, %s394
      %s396 = sphi 0, %s394
      %s397 = sphi 0, %s396
      %s411 = sphi 0, %s397
      %s417 = sphi 0, %s419
      %s420 = sphi 0, %s417
      %s421 = sphi 0, %s420
      %s437 = sphi 0, %s421
      %s443 = sphi 0, %s445
      %s446 = sphi 0, %s443
      %s447 = sphi 0, %s446
      %s463 = sphi 0, %s447
    $region4: #{tpu_custom_call.1} parent=1 // loop_header_branch
      %38 = sbr.rel (%p36) target = $region8
    $region5: #{tpu_custom_call.1} parent=1 // loop_body
      %s40 = ssub.s32 %s35, 1
      %s41 = ssub.s32 %s35, 2
      %s42 = sadd.s32 %s35, 1
      %s43 = ssub.s32 %s35, %s42
      %p44 = scmp.eq.s32.totalorder %s43, 0
      %s46 = sadd.s32 %s45, 1
      %s47 = scalar_select %p44, %s45, %s46
      %p50 = pneg %p44
      %p51 = scmp.eq.s32.totalorder %s35, 1
      %p52 = por %p50, %p51
      %p53 = scmp.ne.s32.totalorder %s45, %s48
      %p54 = scmp.eq.s32.totalorder %s35, 0
      %p55 = por %p53, %p54
      %p56 = scmp.ne.s32.totalorder %s45, %s48
      %p57 = scmp.eq.s32.totalorder %s40, 1
      %p58 = por %p56, %p57
      %p59 = scmp.ne.s32.totalorder %s48, %s49
      %p60 = scmp.eq.s32.totalorder %s40, 0
      %p61 = por %p59, %p60
      %p62 = scmp.ne.s32.totalorder %s48, %s49
      %p63 = scmp.eq.s32.totalorder %s41, 1
      %p64 = por %p62, %p63
      %p66 = scmp.ne.s32.totalorder %s49, %s65
      %p67 = scmp.eq.s32.totalorder %s41, 0
      %p68 = por %p66, %p67
      %s69 = ssub.s32 %s35, %s42
      %p70 = scmp.eq.s32.totalorder %s69, 0
      %s72 = sadd.s32 %s71, 1
      %s73 = scalar_select %p70, %s71, %s72
      %p76 = pneg %p70
      %p77 = scmp.eq.s32.totalorder %s35, 1
      %p78 = por %p76, %p77
      %p79 = scmp.ne.s32.totalorder %s71, %s74
      %p80 = scmp.eq.s32.totalorder %s35, 0
      %p81 = por %p79, %p80
      %p82 = scmp.ne.s32.totalorder %s71, %s74
      %p83 = scmp.eq.s32.totalorder %s40, 1
      %p84 = por %p82, %p83
      %p85 = scmp.ne.s32.totalorder %s74, %s75
      %p86 = scmp.eq.s32.totalorder %s40, 0
      %p87 = por %p85, %p86
      %p88 = scmp.ne.s32.totalorder %s74, %s75
      %p89 = scmp.eq.s32.totalorder %s41, 1
      %p90 = por %p88, %p89
      %p92 = scmp.ne.s32.totalorder %s75, %s91
      %p93 = scmp.eq.s32.totalorder %s41, 0
      %p94 = por %p92, %p93
      %s95 = ssub.s32 %s35, %s42
      %p96 = scmp.eq.s32.totalorder %s95, 0
      %s98 = sadd.s32 %s97, 1
      %s99 = scalar_select %p96, %s97, %s98
      %p102 = pneg %p96
      %p103 = scmp.eq.s32.totalorder %s35, 1
      %p104 = por %p102, %p103
      %p105 = scmp.ne.s32.totalorder %s97, %s100
      %p106 = scmp.eq.s32.totalorder %s35, 0
      %p107 = por %p105, %p106
      %p108 = scmp.ne.s32.totalorder %s97, %s100
      %p109 = scmp.eq.s32.totalorder %s40, 1
      %p110 = por %p108, %p109
      %p111 = scmp.ne.s32.totalorder %s100, %s101
      %p112 = scmp.eq.s32.totalorder %s40, 0
      %p113 = por %p111, %p112
      %p114 = scmp.ne.s32.totalorder %s100, %s101
      %p115 = scmp.eq.s32.totalorder %s41, 1
      %p116 = por %p114, %p115
      %p118 = scmp.ne.s32.totalorder %s101, %s117
      %p119 = scmp.eq.s32.totalorder %s41, 0
      %p120 = por %p118, %p119
      %s122 = sadd.s32 %s121, 1
      %p125 = scmp.eq.s32.totalorder %s35, 1
      %p126 = scmp.ne.s32.totalorder %s121, %s123
      %p127 = scmp.eq.s32.totalorder %s35, 0
      %p128 = por %p126, %p127
      %p129 = scmp.ne.s32.totalorder %s121, %s123
      %p130 = scmp.eq.s32.totalorder %s40, 1
      %p131 = por %p129, %p130
      %p132 = scmp.ne.s32.totalorder %s123, %s124
      %p133 = scmp.eq.s32.totalorder %s40, 0
      %p134 = por %p132, %p133
      %p135 = scmp.ne.s32.totalorder %s123, %s124
      %p136 = scmp.eq.s32.totalorder %s41, 1
      %p137 = por %p135, %p136
      %p139 = scmp.ne.s32.totalorder %s124, %s138
      %p140 = scmp.eq.s32.totalorder %s41, 0
      %p141 = por %p139, %p140
      %s143 = sadd.s32 %s142, 1
      %p146 = scmp.eq.s32.totalorder %s35, 1
      %p147 = scmp.ne.s32.totalorder %s142, %s144
      %p148 = scmp.eq.s32.totalorder %s35, 0
      %p149 = por %p147, %p148
      %p150 = scmp.ne.s32.totalorder %s142, %s144
      %p151 = scmp.eq.s32.totalorder %s40, 1
      %p152 = por %p150, %p151
      %p153 = scmp.ne.s32.totalorder %s144, %s145
      %p154 = scmp.eq.s32.totalorder %s40, 0
      %p155 = por %p153, %p154
      %p156 = scmp.ne.s32.totalorder %s144, %s145
      %p157 = scmp.eq.s32.totalorder %s41, 1
      %p158 = por %p156, %p157
      %p160 = scmp.ne.s32.totalorder %s145, %s159
      %p161 = scmp.eq.s32.totalorder %s41, 0
      %p162 = por %p160, %p161
      %s164 = sadd.s32 %s163, 1
      %p167 = scmp.eq.s32.totalorder %s35, 1
      %p168 = scmp.ne.s32.totalorder %s163, %s165
      %p169 = scmp.eq.s32.totalorder %s35, 0
      %p170 = por %p168, %p169
      %p171 = scmp.ne.s32.totalorder %s163, %s165
      %p172 = scmp.eq.s32.totalorder %s40, 1
      %p173 = por %p171, %p172
      %p174 = scmp.ne.s32.totalorder %s165, %s166
      %p175 = scmp.eq.s32.totalorder %s40, 0
      %p176 = por %p174, %p175
      %p177 = scmp.ne.s32.totalorder %s165, %s166
      %p178 = scmp.eq.s32.totalorder %s41, 1
      %p179 = por %p177, %p178
      %p181 = scmp.ne.s32.totalorder %s166, %s180
      %p182 = scmp.eq.s32.totalorder %s41, 0
      %p183 = por %p181, %p182
      %s185 = sadd.s32 %s184, 1
      %p188 = scmp.eq.s32.totalorder %s35, 1
      %p189 = scmp.ne.s32.totalorder %s184, %s186
      %p190 = scmp.eq.s32.totalorder %s35, 0
      %p191 = por %p189, %p190
      %p192 = scmp.ne.s32.totalorder %s184, %s186
      %p193 = scmp.eq.s32.totalorder %s40, 1
      %p194 = por %p192, %p193
      %p195 = scmp.ne.s32.totalorder %s186, %s187
      %p196 = scmp.eq.s32.totalorder %s40, 0
      %p197 = por %p195, %p196
      %p198 = scmp.ne.s32.totalorder %s186, %s187
      %p199 = scmp.eq.s32.totalorder %s41, 1
      %p200 = por %p198, %p199
      %p202 = scmp.ne.s32.totalorder %s187, %s201
      %p203 = scmp.eq.s32.totalorder %s41, 0
      %p204 = por %p202, %p203
      %s206 = sadd.s32 %s205, 1
      %p209 = scmp.eq.s32.totalorder %s35, 1
      %p210 = scmp.ne.s32.totalorder %s205, %s207
      %p211 = scmp.eq.s32.totalorder %s35, 0
      %p212 = por %p210, %p211
      %p213 = scmp.ne.s32.totalorder %s205, %s207
      %p214 = scmp.eq.s32.totalorder %s40, 1
      %p215 = por %p213, %p214
      %p216 = scmp.ne.s32.totalorder %s207, %s208
      %p217 = scmp.eq.s32.totalorder %s40, 0
      %p218 = por %p216, %p217
      %p219 = scmp.ne.s32.totalorder %s207, %s208
      %p220 = scmp.eq.s32.totalorder %s41, 1
      %p221 = por %p219, %p220
      %p223 = scmp.ne.s32.totalorder %s208, %s222
      %p224 = scmp.eq.s32.totalorder %s41, 0
      %p225 = por %p223, %p224
      %s227 = sadd.s32 %s226, 1
      %p230 = scmp.eq.s32.totalorder %s35, 1
      %p231 = scmp.ne.s32.totalorder %s226, %s228
      %p232 = scmp.eq.s32.totalorder %s35, 0
      %p233 = por %p231, %p232
      %p234 = scmp.ne.s32.totalorder %s226, %s228
      %p235 = scmp.eq.s32.totalorder %s40, 1
      %p236 = por %p234, %p235
      %p237 = scmp.ne.s32.totalorder %s228, %s229
      %p238 = scmp.eq.s32.totalorder %s40, 0
      %p239 = por %p237, %p238
      %p240 = scmp.ne.s32.totalorder %s228, %s229
      %p241 = scmp.eq.s32.totalorder %s41, 1
      %p242 = por %p240, %p241
      %p244 = scmp.ne.s32.totalorder %s229, %s243
      %p245 = scmp.eq.s32.totalorder %s41, 0
      %p246 = por %p244, %p245
      %s248 = sadd.s32 %s247, 1
      %p251 = scmp.eq.s32.totalorder %s35, 1
      %p252 = scmp.ne.s32.totalorder %s247, %s249
      %p253 = scmp.eq.s32.totalorder %s35, 0
      %p254 = por %p252, %p253
      %p255 = scmp.ne.s32.totalorder %s247, %s249
      %p256 = scmp.eq.s32.totalorder %s40, 1
      %p257 = por %p255, %p256
      %p258 = scmp.ne.s32.totalorder %s249, %s250
      %p259 = scmp.eq.s32.totalorder %s40, 0
      %p260 = por %p258, %p259
      %p261 = scmp.ne.s32.totalorder %s249, %s250
      %p262 = scmp.eq.s32.totalorder %s41, 1
      %p263 = por %p261, %p262
      %p265 = scmp.ne.s32.totalorder %s250, %s264
      %p266 = scmp.eq.s32.totalorder %s41, 0
      %p267 = por %p265, %p266
      %s269 = sadd.s32 %s268, 1
      %p272 = scmp.eq.s32.totalorder %s35, 1
      %p273 = scmp.ne.s32.totalorder %s268, %s270
      %p274 = scmp.eq.s32.totalorder %s35, 0
      %p275 = por %p273, %p274
      %p276 = scmp.ne.s32.totalorder %s268, %s270
      %p277 = scmp.eq.s32.totalorder %s40, 1
      %p278 = por %p276, %p277
      %p279 = scmp.ne.s32.totalorder %s270, %s271
      %p280 = scmp.eq.s32.totalorder %s40, 0
      %p281 = por %p279, %p280
      %p282 = scmp.ne.s32.totalorder %s270, %s271
      %p283 = scmp.eq.s32.totalorder %s41, 1
      %p284 = por %p282, %p283
      %p286 = scmp.ne.s32.totalorder %s271, %s285
      %p287 = scmp.eq.s32.totalorder %s41, 0
      %p288 = por %p286, %p287
      %s290 = sadd.s32 %s289, 1
      %p293 = scmp.eq.s32.totalorder %s35, 1
      %p294 = scmp.ne.s32.totalorder %s289, %s291
      %p295 = scmp.eq.s32.totalorder %s35, 0
      %p296 = por %p294, %p295
      %p297 = scmp.ne.s32.totalorder %s289, %s291
      %p298 = scmp.eq.s32.totalorder %s40, 1
      %p299 = por %p297, %p298
      %p300 = scmp.ne.s32.totalorder %s291, %s292
      %p301 = scmp.eq.s32.totalorder %s40, 0
      %p302 = por %p300, %p301
      %p303 = scmp.ne.s32.totalorder %s291, %s292
      %p304 = scmp.eq.s32.totalorder %s41, 1
      %p305 = por %p303, %p304
      %p307 = scmp.ne.s32.totalorder %s292, %s306
      %p308 = scmp.eq.s32.totalorder %s41, 0
      %p309 = por %p307, %p308
      %s311 = sadd.s32 %s310, 1
      %p314 = scmp.eq.s32.totalorder %s35, 1
      %p315 = scmp.ne.s32.totalorder %s310, %s312
      %p316 = scmp.eq.s32.totalorder %s35, 0
      %p317 = por %p315, %p316
      %p318 = scmp.ne.s32.totalorder %s310, %s312
      %p319 = scmp.eq.s32.totalorder %s40, 1
      %p320 = por %p318, %p319
      %p321 = scmp.ne.s32.totalorder %s312, %s313
      %p322 = scmp.eq.s32.totalorder %s40, 0
      %p323 = por %p321, %p322
      %p324 = scmp.ne.s32.totalorder %s312, %s313
      %p325 = scmp.eq.s32.totalorder %s41, 1
      %p326 = por %p324, %p325
      %p328 = scmp.ne.s32.totalorder %s313, %s327
      %p329 = scmp.eq.s32.totalorder %s41, 0
      %p330 = por %p328, %p329
      %s332 = sadd.s32 %s331, 1
      %p335 = scmp.eq.s32.totalorder %s35, 1
      %p336 = scmp.ne.s32.totalorder %s331, %s333
      %p337 = scmp.eq.s32.totalorder %s35, 0
      %p338 = por %p336, %p337
      %p339 = scmp.ne.s32.totalorder %s331, %s333
      %p340 = scmp.eq.s32.totalorder %s40, 1
      %p341 = por %p339, %p340
      %p342 = scmp.ne.s32.totalorder %s333, %s334
      %p343 = scmp.eq.s32.totalorder %s40, 0
      %p344 = por %p342, %p343
      %p345 = scmp.ne.s32.totalorder %s333, %s334
      %p346 = scmp.eq.s32.totalorder %s41, 1
      %p347 = por %p345, %p346
      %p349 = scmp.ne.s32.totalorder %s334, %s348
      %p350 = scmp.eq.s32.totalorder %s41, 0
      %p351 = por %p349, %p350
      %s353 = sadd.s32 %s352, 1
      %p356 = scmp.eq.s32.totalorder %s35, 1
      %p357 = scmp.ne.s32.totalorder %s352, %s354
      %p358 = scmp.eq.s32.totalorder %s35, 0
      %p359 = por %p357, %p358
      %p360 = scmp.ne.s32.totalorder %s352, %s354
      %p361 = scmp.eq.s32.totalorder %s40, 1
      %p362 = por %p360, %p361
      %p363 = scmp.ne.s32.totalorder %s354, %s355
      %p364 = scmp.eq.s32.totalorder %s40, 0
      %p365 = por %p363, %p364
      %p366 = scmp.ne.s32.totalorder %s354, %s355
      %p367 = scmp.eq.s32.totalorder %s41, 1
      %p368 = por %p366, %p367
      %p370 = scmp.ne.s32.totalorder %s355, %s369
      %p371 = scmp.eq.s32.totalorder %s41, 0
      %p372 = por %p370, %p371
      %s374 = sadd.s32 %s373, 1
      %p377 = scmp.eq.s32.totalorder %s35, 1
      %p378 = scmp.ne.s32.totalorder %s373, %s375
      %p379 = scmp.eq.s32.totalorder %s35, 0
      %p380 = por %p378, %p379
      %p381 = scmp.ne.s32.totalorder %s373, %s375
      %p382 = scmp.eq.s32.totalorder %s40, 1
      %p383 = por %p381, %p382
      %p384 = scmp.ne.s32.totalorder %s375, %s376
      %p385 = scmp.eq.s32.totalorder %s40, 0
      %p386 = por %p384, %p385
      %p387 = scmp.ne.s32.totalorder %s375, %s376
      %p388 = scmp.eq.s32.totalorder %s41, 1
      %p389 = por %p387, %p388
      %p391 = scmp.ne.s32.totalorder %s376, %s390
      %p392 = scmp.eq.s32.totalorder %s41, 0
      %p393 = por %p391, %p392
      %s395 = sadd.s32 %s394, 1
      %p398 = scmp.eq.s32.totalorder %s35, 1
      %p399 = scmp.ne.s32.totalorder %s394, %s396
      %p400 = scmp.eq.s32.totalorder %s35, 0
      %p401 = por %p399, %p400
      %p402 = scmp.ne.s32.totalorder %s394, %s396
      %p403 = scmp.eq.s32.totalorder %s40, 1
      %p404 = por %p402, %p403
      %p405 = scmp.ne.s32.totalorder %s396, %s397
      %p406 = scmp.eq.s32.totalorder %s40, 0
      %p407 = por %p405, %p406
      %p408 = scmp.ne.s32.totalorder %s396, %s397
      %p409 = scmp.eq.s32.totalorder %s41, 1
      %p410 = por %p408, %p409
      %p412 = scmp.ne.s32.totalorder %s397, %s411
      %p413 = scmp.eq.s32.totalorder %s41, 0
      %p414 = por %p412, %p413
      %s415 = ssub.s32 %s35, %s42
      %p416 = scmp.eq.s32.totalorder %s415, 0
      %s418 = sadd.s32 %s417, 1
      %s419 = scalar_select %p416, %s417, %s418
      %p422 = pneg %p416
      %p423 = scmp.eq.s32.totalorder %s35, 1
      %p424 = por %p422, %p423
      %p425 = scmp.ne.s32.totalorder %s417, %s420
      %p426 = scmp.eq.s32.totalorder %s35, 0
      %p427 = por %p425, %p426
      %p428 = scmp.ne.s32.totalorder %s417, %s420
      %p429 = scmp.eq.s32.totalorder %s40, 1
      %p430 = por %p428, %p429
      %p431 = scmp.ne.s32.totalorder %s420, %s421
      %p432 = scmp.eq.s32.totalorder %s40, 0
      %p433 = por %p431, %p432
      %p434 = scmp.ne.s32.totalorder %s420, %s421
      %p435 = scmp.eq.s32.totalorder %s41, 1
      %p436 = por %p434, %p435
      %p438 = scmp.ne.s32.totalorder %s421, %s437
      %p439 = scmp.eq.s32.totalorder %s41, 0
      %p440 = por %p438, %p439
      %s441 = ssub.s32 %s35, %s42
      %p442 = scmp.eq.s32.totalorder %s441, 0
      %s444 = sadd.s32 %s443, 1
      %s445 = scalar_select %p442, %s443, %s444
      %p448 = pneg %p442
      %p449 = scmp.eq.s32.totalorder %s35, 1
      %p450 = por %p448, %p449
      %p451 = scmp.ne.s32.totalorder %s443, %s446
      %p452 = scmp.eq.s32.totalorder %s35, 0
      %p453 = por %p451, %p452
      %p454 = scmp.ne.s32.totalorder %s443, %s446
      %p455 = scmp.eq.s32.totalorder %s40, 1
      %p456 = por %p454, %p455
      %p457 = scmp.ne.s32.totalorder %s446, %s447
      %p458 = scmp.eq.s32.totalorder %s40, 0
      %p459 = por %p457, %p458
      %p460 = scmp.ne.s32.totalorder %s446, %s447
      %p461 = scmp.eq.s32.totalorder %s41, 1
      %p462 = por %p460, %p461
      %p464 = scmp.ne.s32.totalorder %s447, %s463
      %p465 = scmp.eq.s32.totalorder %s41, 0
      %p466 = por %p464, %p465
      %p467 = scmp.le.s32.totalorder 1, %s35
      %p468 = scmp.lt.s32.totalorder %s35, 3
      %p469 = pnand %p467, %p468
      %p470 = pneg %p469
      // Predicated region
      $region9: #{tpu_custom_call.1} parent=5 // pred_check
        _
      $region10: #{tpu_custom_call.1} parent=5 // pred_check_branch
        %472 = sbr.rel (%p469) target = $region12
      $region11: #{tpu_custom_call.1} parent=5 // pred_region
        %s473 = ssub.s32 %s35, 1
        // Predicated region
        $region13: #{tpu_custom_call.1} parent=11 // pred_check
          %p474 = pneg %p134
        $region14: #{tpu_custom_call.1} parent=11 // pred_check_branch
          %476 = sbr.rel (%p474) target = $region16
        $region15: #{tpu_custom_call.1} parent=11 // pred_region
          _
        $region16: #{tpu_custom_call.1} parent=11 // pred_fallthru
          _
        // Predicated region
        $region17: #{tpu_custom_call.1} parent=11 // pred_check
          %p477 = pneg %p155
        $region18: #{tpu_custom_call.1} parent=11 // pred_check_branch
          %479 = sbr.rel (%p477) target = $region20
        $region19: #{tpu_custom_call.1} parent=11 // pred_region
          _
        $region20: #{tpu_custom_call.1} parent=11 // pred_fallthru
          _
        // Predicated region
        $region21: #{tpu_custom_call.1} parent=11 // pred_check
          %p480 = pneg %p176
        $region22: #{tpu_custom_call.1} parent=11 // pred_check_branch
          %482 = sbr.rel (%p480) target = $region24
        $region23: #{tpu_custom_call.1} parent=11 // pred_region
          _
        $region24: #{tpu_custom_call.1} parent=11 // pred_fallthru
          _
        // Predicated region
        $region25: #{tpu_custom_call.1} parent=11 // pred_check
          %p483 = pneg %p197
        $region26: #{tpu_custom_call.1} parent=11 // pred_check_branch
          %485 = sbr.rel (%p483) target = $region28
        $region27: #{tpu_custom_call.1} parent=11 // pred_region
          _
        $region28: #{tpu_custom_call.1} parent=11 // pred_fallthru
          _
        // Predicated region
        $region29: #{tpu_custom_call.1} parent=11 // pred_check
          %p486 = pneg %p218
        $region30: #{tpu_custom_call.1} parent=11 // pred_check_branch
          %488 = sbr.rel (%p486) target = $region32
        $region31: #{tpu_custom_call.1} parent=11 // pred_region
          _
        $region32: #{tpu_custom_call.1} parent=11 // pred_fallthru
          _
        // Predicated region
        $region33: #{tpu_custom_call.1} parent=11 // pred_check
          %p489 = pneg %p239
        $region34: #{tpu_custom_call.1} parent=11 // pred_check_branch
          %491 = sbr.rel (%p489) target = $region36
        $region35: #{tpu_custom_call.1} parent=11 // pred_region
          _
        $region36: #{tpu_custom_call.1} parent=11 // pred_fallthru
          _
        // Predicated region
        $region37: #{tpu_custom_call.1} parent=11 // pred_check
          %p492 = pneg %p260
        $region38: #{tpu_custom_call.1} parent=11 // pred_check_branch
          %494 = sbr.rel (%p492) target = $region40
        $region39: #{tpu_custom_call.1} parent=11 // pred_region
          _
        $region40: #{tpu_custom_call.1} parent=11 // pred_fallthru
          _
        // Predicated region
        $region41: #{tpu_custom_call.1} parent=11 // pred_check
          %p495 = pneg %p281
        $region42: #{tpu_custom_call.1} parent=11 // pred_check_branch
          %497 = sbr.rel (%p495) target = $region44
        $region43: #{tpu_custom_call.1} parent=11 // pred_region
          _
        $region44: #{tpu_custom_call.1} parent=11 // pred_fallthru
          _
        // Predicated region
        $region45: #{tpu_custom_call.1} parent=11 // pred_check
          %p498 = pneg %p302
        $region46: #{tpu_custom_call.1} parent=11 // pred_check_branch
          %500 = sbr.rel (%p498) target = $region48
        $region47: #{tpu_custom_call.1} parent=11 // pred_region
          %502 = vsyncadd [#allocation9], 0
          %s503 = sshll.u32 %s11, 4
          %s504 = int_to_ptr.hbm [resolvable:$true] %s503
          %s505 = sshll.u32 [#allocation8], 4
          %s506 = int_to_ptr.vmem [resolvable:$true] %s505
          %511 = dma.hbm_to_vmem [thread:$0]  %s504, 512, %s506, [#allocation9], 128, 128, 8
        $region48: #{tpu_custom_call.1} parent=11 // pred_fallthru
          _
        // Predicated region
        $region49: #{tpu_custom_call.1} parent=11 // pred_check
          %p512 = pneg %p323
        $region50: #{tpu_custom_call.1} parent=11 // pred_check_branch
          %514 = sbr.rel (%p512) target = $region52
        $region51: #{tpu_custom_call.1} parent=11 // pred_region
          _
        $region52: #{tpu_custom_call.1} parent=11 // pred_fallthru
          _
        // Predicated region
        $region53: #{tpu_custom_call.1} parent=11 // pred_check
          %p515 = pneg %p344
        $region54: #{tpu_custom_call.1} parent=11 // pred_check_branch
          %517 = sbr.rel (%p515) target = $region56
        $region55: #{tpu_custom_call.1} parent=11 // pred_region
          _
        $region56: #{tpu_custom_call.1} parent=11 // pred_fallthru
          _
        // Predicated region
        $region57: #{tpu_custom_call.1} parent=11 // pred_check
          %p518 = pneg %p365
        $region58: #{tpu_custom_call.1} parent=11 // pred_check_branch
          %520 = sbr.rel (%p518) target = $region60
        $region59: #{tpu_custom_call.1} parent=11 // pred_region
          _
        $region60: #{tpu_custom_call.1} parent=11 // pred_fallthru
          _
        // Predicated region
        $region61: #{tpu_custom_call.1} parent=11 // pred_check
          %p521 = pneg %p386
        $region62: #{tpu_custom_call.1} parent=11 // pred_check_branch
          %523 = sbr.rel (%p521) target = $region64
        $region63: #{tpu_custom_call.1} parent=11 // pred_region
          _
        $region64: #{tpu_custom_call.1} parent=11 // pred_fallthru
          _
        // Predicated region
        $region65: #{tpu_custom_call.1} parent=11 // pred_check
          %p524 = pneg %p407
        $region66: #{tpu_custom_call.1} parent=11 // pred_check_branch
          %526 = sbr.rel (%p524) target = $region68
        $region67: #{tpu_custom_call.1} parent=11 // pred_region
          _
        $region68: #{tpu_custom_call.1} parent=11 // pred_fallthru
          _
      $region12: #{tpu_custom_call.1} parent=5 // pred_fallthru
        _
      %p527 = scmp.lt.s32.totalorder %s35, 2
      // Predicated region
      $region69: #{tpu_custom_call.1} parent=5 // pred_check
        %p528 = pneg %p527
      $region70: #{tpu_custom_call.1} parent=5 // pred_check_branch
        %530 = sbr.rel (%p528) target = $region72
      $region71: #{tpu_custom_call.1} parent=5 // pred_region
        // Predicated region
        $region73: #{tpu_custom_call.1} parent=71 // pred_check
          %p531 = pneg %p55
        $region74: #{tpu_custom_call.1} parent=71 // pred_check_branch
          %533 = sbr.rel (%p531) target = $region76
        $region75: #{tpu_custom_call.1} parent=71 // pred_region
          %s534 = sand.u32 %s45, 1
          %s535 = scalar_lea.sflag [#allocation3], %s534
          %s536 = sand.u32 %s45, 1
          %s537 = smul.addr %s536, 8
          %s538 = scalar_lea.vmem [#allocation2], %s537
          %540 = vsyncadd %s535, 0
          %s541 = smul.addr %s35, 8
          %s542 = scalar_lea.hbm %s0, %s541
          %s544 = sshll.u32 %s542, 4
          %s545 = int_to_ptr.hbm [resolvable:$true] %s544
          %s546 = sshll.u32 %s538, 4
          %s547 = int_to_ptr.vmem [resolvable:$true] %s546
          %549 = dma.hbm_to_vmem [thread:$0]  %s545, 128, %s547, %s535
        $region76: #{tpu_custom_call.1} parent=71 // pred_fallthru
          _
        // Predicated region
        $region77: #{tpu_custom_call.1} parent=71 // pred_check
          %p550 = pneg %p81
        $region78: #{tpu_custom_call.1} parent=71 // pred_check_branch
          %552 = sbr.rel (%p550) target = $region80
        $region79: #{tpu_custom_call.1} parent=71 // pred_region
          %s553 = sand.u32 %s35, 1
          %s554 = scalar_lea.sflag [#allocation6], %s553
          %s555 = sand.u32 %s71, 1
          %s556 = smul.addr %s555, 8
          %s557 = scalar_lea.vmem [#allocation5], %s556
          %559 = vsyncadd %s554, 0
          %s560 = smul.addr %s35, 8
          %s561 = scalar_lea.hbm %s1, %s560
          %s563 = sshll.u32 %s561, 4
          %s564 = int_to_ptr.hbm [resolvable:$true] %s563
          %s565 = sshll.u32 %s557, 4
          %s566 = int_to_ptr.vmem [resolvable:$true] %s565
          %568 = dma.hbm_to_vmem [thread:$0]  %s564, 128, %s566, %s554
        $region80: #{tpu_custom_call.1} parent=71 // pred_fallthru
          _
        // Predicated region
        $region81: #{tpu_custom_call.1} parent=71 // pred_check
          %p569 = pneg %p107
        $region82: #{tpu_custom_call.1} parent=71 // pred_check_branch
          %571 = sbr.rel (%p569) target = $region84
        $region83: #{tpu_custom_call.1} parent=71 // pred_region
          %s572 = sand.u32 %s35, 1
          %s573 = scalar_lea.sflag [#allocation6], %s572
          %s574 = sand.u32 %s97, 1
          %s575 = smul.addr %s574, 8
          %s576 = scalar_lea.vmem [#allocation7], %s575
          %578 = vsyncadd %s573, 0
          %s579 = smul.addr %s35, 8
          %s580 = scalar_lea.hbm %s2, %s579
          %s582 = sshll.u32 %s580, 4
          %s583 = int_to_ptr.hbm [resolvable:$true] %s582
          %s584 = sshll.u32 %s576, 4
          %s585 = int_to_ptr.vmem [resolvable:$true] %s584
          %587 = dma.hbm_to_vmem [thread:$0]  %s583, 128, %s585, %s573
        $region84: #{tpu_custom_call.1} parent=71 // pred_fallthru
          _
      $region72: #{tpu_custom_call.1} parent=5 // pred_fallthru
        _
      %p588 = scmp.le.s32.totalorder 1, %s35
      %p589 = scmp.lt.s32.totalorder %s35, 3
      %p590 = pnand %p588, %p589
      %p591 = pneg %p590
      // Predicated region
      $region85: #{tpu_custom_call.1} parent=5 // pred_check
        _
      $region86: #{tpu_custom_call.1} parent=5 // pred_check_branch
        %593 = sbr.rel (%p590) target = $region88
      $region87: #{tpu_custom_call.1} parent=5 // pred_region
        %s594 = ssub.s32 %s35, 1
        %s595 = sand.u32 %s48, 1
        %s596 = scalar_lea.sflag [#allocation3], %s595
        %s597 = sand.u32 %s48, 1
        %s598 = smul.addr %s597, 8
        %s599 = scalar_lea.vmem [#allocation2], %s598
        // Predicated region
        $region89: #{tpu_custom_call.1} parent=87 // pred_check
          %p600 = pneg %p61
        $region90: #{tpu_custom_call.1} parent=87 // pred_check_branch
          %602 = sbr.rel (%p600) target = $region92
        $region91: #{tpu_custom_call.1} parent=87 // pred_region
          %604 = dma.done %s596, 128
        $region92: #{tpu_custom_call.1} parent=87 // pred_fallthru
          _
        %s605 = sand.u32 %s40, 1
        %s606 = scalar_lea.sflag [#allocation6], %s605
        %s607 = sand.u32 %s74, 1
        %s608 = smul.addr %s607, 8
        %s609 = scalar_lea.vmem [#allocation5], %s608
        // Predicated region
        $region93: #{tpu_custom_call.1} parent=87 // pred_check
          %p610 = pneg %p87
        $region94: #{tpu_custom_call.1} parent=87 // pred_check_branch
          %612 = sbr.rel (%p610) target = $region96
        $region95: #{tpu_custom_call.1} parent=87 // pred_region
          %614 = dma.done %s606, 128
        $region96: #{tpu_custom_call.1} parent=87 // pred_fallthru
          _
        %s615 = sand.u32 %s40, 1
        %s616 = scalar_lea.sflag [#allocation6], %s615
        %s617 = sand.u32 %s100, 1
        %s618 = smul.addr %s617, 8
        %s619 = scalar_lea.vmem [#allocation7], %s618
        // Predicated region
        $region97: #{tpu_custom_call.1} parent=87 // pred_check
          %p620 = pneg %p113
        $region98: #{tpu_custom_call.1} parent=87 // pred_check_branch
          %622 = sbr.rel (%p620) target = $region100
        $region99: #{tpu_custom_call.1} parent=87 // pred_region
          %624 = dma.done %s616, 128
        $region100: #{tpu_custom_call.1} parent=87 // pred_fallthru
          _
        // Predicated region
        $region101: #{tpu_custom_call.1} parent=87 // pred_check
          %p625 = pneg %p302
        $region102: #{tpu_custom_call.1} parent=87 // pred_check_branch
          %627 = sbr.rel (%p625) target = $region104
        $region103: #{tpu_custom_call.1} parent=87 // pred_region
          %629 = dma.done [#allocation9], 512
        $region104: #{tpu_custom_call.1} parent=87 // pred_fallthru
          _
        %s630 = sand.u32 %s48, 1
        %s631 = scalar_lea.sflag [#allocation3], %s630
        %s632 = sand.u32 %s48, 1
        %s633 = smul.addr %s632, 8
        %s634 = scalar_lea.vmem [#allocation2], %s633
        %p635 = pneg %p61
        %p636 = pneg %p58
        %s637 = sand.u32 %s40, 1
        %s638 = scalar_lea.sflag [#allocation6], %s637
        %s639 = sand.u32 %s74, 1
        %s640 = smul.addr %s639, 8
        %s641 = scalar_lea.vmem [#allocation5], %s640
        %p642 = pneg %p87
        %p643 = pneg %p84
        %s644 = sand.u32 %s40, 1
        %s645 = scalar_lea.sflag [#allocation6], %s644
        %s646 = sand.u32 %s100, 1
        %s647 = smul.addr %s646, 8
        %s648 = scalar_lea.vmem [#allocation7], %s647
        %p649 = pneg %p113
        %p650 = pneg %p110
        %p651 = pneg %p134
        %p652 = pneg %p131
        %p653 = pneg %p155
        %p654 = pneg %p152
        %p655 = pneg %p176
        %p656 = pneg %p173
        %p657 = pneg %p197
        %p658 = pneg %p194
        %p659 = pneg %p218
        %p660 = pneg %p215
        %p661 = pneg %p239
        %p662 = pneg %p236
        %p663 = pneg %p260
        %p664 = pneg %p257
        %p665 = pneg %p281
        %p666 = pneg %p278
        %p667 = pneg %p302
        %p668 = pneg %p299
        %p669 = pneg %p323
        %p670 = pneg %p320
        %p671 = pneg %p344
        %p672 = pneg %p341
        %p673 = pneg %p365
        %p674 = pneg %p362
        %p675 = pneg %p386
        %p676 = pneg %p383
        %p677 = pneg %p407
        %p678 = pneg %p404
        %p679 = pneg %p433
        %p680 = pneg %p430
        %s681 = sand.u32 %s420, 1
        %s682 = scalar_lea.sflag [#allocation4], %s681
        %s683 = sand.u32 %s420, 1
        %s684 = smul.addr %s683, 8
        %s685 = scalar_lea.vmem [#allocation10], %s684
        %p686 = pneg %p459
        %p687 = pneg %p456
        %p688 = scmp.lt.s32.totalorder %s40, 1
        %s689 = scalar_select %p688, %s40, 1
        %s690 = smul.addr %s689, 4
        %s691 = smul.addr %s690, 8
        %s692 = scalar_lea.vmem %s18, %s691
        %p693 = scmp.lt.s32.totalorder %s40, 1
        %s694 = scalar_select %p693, %s40, 1
        %s695 = smul.addr %s694, 4
        %s696 = smul.addr %s695, 8
        %s697 = scalar_lea.vmem %s18, %s696
        %v698 = vld [vmem:[%s599] sm:$0xff]
        %v699 = vld [vmem:[%s609] sm:$0xff]
        %v700 = vld [vmem:[%s619] sm:$0xff]
        %v701 = vld [vmem:[%s4] sm:$0x1]
        %v702 = vld [vmem:[%s6] sm:$0x1]
        %v703 = vld [vmem:[%s8] sm:$0x1]
        %v704 = vld [vmem:[%s3] sm:$0xff]
        %v705 = vld [vmem:[%s3 + $0x8] sm:$0xff]
        %v706 = vld [vmem:[%s3 + $0x10] sm:$0xff]
        %v707 = vld [vmem:[%s3 + $0x18] sm:$0xff]
        %v709 = vperm.slane %v701, 0
        %vm711 = vcmask 261120
        %v713 = vsel %vm711, %v699, 0
        %715 = vmatpush.msra.mxu0 0.0
        %716 = vmatpush.msra.mxu0 0.0
        %717 = vmatpush.msra.mxu0 0.0
        %718 = vmatpush.msra.mxu0 0.0
        %719 = vmatpush.msra.mxu0 0.0
        %720 = vmatpush.msra.mxu0 0.0
        %721 = vmatpush.msra.mxu0 0.0
        %722 = vmatpush.msra.mxu0 0.0
        %723 = vmatpush.msra.mxu0 0.0
        %724 = vmatpush.msra.mxu0 0.0
        %725 = vmatpush.msra.mxu0 0.0
        %726 = vmatpush.msra.mxu0 0.0
        %727 = vmatpush.msra.mxu0 %v707
        %728 = vmatpush.msra.mxu0 %v706
        %729 = vmatpush.msra.mxu0 %v705
        %730 = vmatpush.msra.mxu0 %v704
        %731 = vmatmul.f32.gmra.mxu0 %v713
        %v732 = vpop.f32.mrf.mxu0
        %v733 = vadd.f32 %v709, %v732
        %734 = vdwg.mxu0
        %v736 = vsel %vm711, %v698, 0
        %738 = vmatpush.msra.mxu0 0.0
        %739 = vmatpush.msra.mxu0 0.0
        %740 = vmatpush.msra.mxu0 0.0
        %741 = vmatpush.msra.mxu0 0.0
        %742 = vmatpush.msra.mxu0 0.0
        %743 = vmatpush.msra.mxu0 0.0
        %744 = vmatpush.msra.mxu0 0.0
        %745 = vmatpush.msra.mxu0 0.0
        %746 = vmatpush.msra.mxu0 0.0
        %747 = vmatpush.msra.mxu0 0.0
        %748 = vmatpush.msra.mxu0 0.0
        %749 = vmatpush.msra.mxu0 0.0
        %750 = vmatpush.msra.mxu0 %v707
        %751 = vmatpush.msra.mxu0 %v706
        %752 = vmatpush.msra.mxu0 %v705
        %753 = vmatpush.msra.mxu0 %v704
        %754 = vmatmul.f32.gmra.mxu0 %v736
        %v755 = vpop.f32.mrf.mxu0
        %v756 = vadd.f32 %v709, %v755
        %757 = vdwg.mxu0
        %v758 = vmul.f32 %v756, 0.35355338
        %v759 = vld [vmem:[%s5] sm:$0xff]
        %v760 = vld [vmem:[%s5 + $0x8] sm:$0xff]
        %v761 = vld [vmem:[%s5 + $0x10] sm:$0xff]
        %v762 = vld [vmem:[%s5 + $0x18] sm:$0xff]
        %v764 = vperm.slane %v702, 0
        %v767 = vsel %vm711, %v700, 0
        %769 = vmatpush.msra.mxu0 0.0
        %770 = vmatpush.msra.mxu0 0.0
        %771 = vmatpush.msra.mxu0 0.0
        %772 = vmatpush.msra.mxu0 0.0
        %773 = vmatpush.msra.mxu0 0.0
        %774 = vmatpush.msra.mxu0 0.0
        %775 = vmatpush.msra.mxu0 0.0
        %776 = vmatpush.msra.mxu0 0.0
        %777 = vmatpush.msra.mxu0 0.0
        %778 = vmatpush.msra.mxu0 0.0
        %779 = vmatpush.msra.mxu0 0.0
        %780 = vmatpush.msra.mxu0 0.0
        %781 = vmatpush.msra.mxu0 %v762
        %782 = vmatpush.msra.mxu0 %v761
        %783 = vmatpush.msra.mxu0 %v760
        %784 = vmatpush.msra.mxu0 %v759
        %785 = vmatmul.f32.gmra.mxu0 %v767
        %v786 = vpop.f32.mrf.mxu0
        %v787 = vadd.f32 %v764, %v786
        %788 = vdwg.mxu0
        %v789 = vlaneseq
        %v790 = vshrl.u32 %v789, 7
        %v791 = vlaneseq
        %v792 = vand.u32 %v791, 127
        %v793 = vsub.s32 %v792, %v790
        %vm794 = vcmp.lt.s32.totalorder %v793, 0
        %vm795 = vcmask 64512
        %v797 = vsel %vm795, %v758, 0
        %v800 = vsel %vm795, %v733, 0
        %802 = vmatpush.xpose.msra.mxu0 0.0
        %803 = vmatpush.xpose.msra.mxu0 0.0
        %804 = vmatpush.xpose.msra.mxu0 0.0
        %805 = vmatpush.xpose.msra.mxu0 0.0
        %806 = vmatpush.xpose.msra.mxu0 0.0
        %807 = vmatpush.xpose.msra.mxu0 0.0
        %808 = vmatpush.xpose.msra.mxu0 0.0
        %809 = vmatpush.xpose.msra.mxu0 0.0
        %810 = vmatpush.xpose.msra.mxu0 0.0
        %811 = vmatpush.xpose.msra.mxu0 0.0
        %812 = vmatpush.xpose.msra.mxu0 0.0
        %813 = vmatpush.xpose.msra.mxu0 0.0
        %814 = vmatpush.xpose.msra.mxu0 0.0
        %815 = vmatpush.xpose.msra.mxu0 0.0
        %816 = vmatpush.xpose.msra.mxu0 0.0
        %817 = vmatpush.xpose.msra.mxu0 %v800
        %818 = vmatmul.f32.gmra.mxu0 %v797
        %v819 = vpop.f32.mrf.mxu0
        %v820 = vadd.f32 0.0, %v819
        %821 = vdwg.mxu0
        %v822 = vsel %vm794, %v820, -1e+32
        %v823 = vsel %vm795, %v822, -inf
        %824 = vmax.xlane.f32.xlu0 %v823
        %v825 = vpop.xlane.xlu0 %824
        %v826 = vsub.f32 %v822, %v825
        %v827 = vmul.f32 %v826, 1.442695
        %v828 = vpow.pop %v827
        %v829 = vsel %vm795, %v828, 0.0
        %830 = vadd.xlane.f32.xlu0 %v829
        %v831 = vpop.xlane.xlu0 %830
        %v832 = vrcp.pop %v831
        %v833 = vmul.f32 %v831, %v832
        %v834 = vsub.f32 1.0, %v833
        %v835 = vmul.f32 %v832, %v834
        %v836 = vadd.f32 %v832, %v835
        %vm837 = vweird.f32 %v831
        %vm838 = vweird.f32 %v832
        %vm839 = vmor %vm837, %vm838
        %v840 = vsel %vm839, %v832, %v836
        %v841 = vand.u32 2147483647, %v831
        %vm842 = vcmp.eq.f32.partialorder %v841, 8.507059e+37
        %v843 = vand.u32 %v831, 2147483648
        %v844 = vor.u32 1.1754944e-38, %v843
        %v845 = vsel %vm842, %v844, %v840
        %v846 = vmul.f32 1.0, %v845
        %v847 = vmul.f32 %v828, %v846
        %848 = vst.msk [vmem:[%s697] sm:$0xff] %vm795, %v847
        %v850 = vsel %vm795, %v847, 0
        %852 = vmatpush.msra.mxu0 0.0
        %853 = vmatpush.msra.mxu0 0.0
        %854 = vmatpush.msra.mxu0 0.0
        %855 = vmatpush.msra.mxu0 0.0
        %856 = vmatpush.msra.mxu0 0.0
        %857 = vmatpush.msra.mxu0 0.0
        %858 = vmatpush.msra.mxu0 0.0
        %859 = vmatpush.msra.mxu0 0.0
        %860 = vmatpush.msra.mxu0 0.0
        %861 = vmatpush.msra.mxu0 0.0
        %862 = vmatpush.msra.mxu0 0.0
        %863 = vmatpush.msra.mxu0 0.0
        %864 = vmatpush.msra.mxu0 0.0
        %865 = vmatpush.msra.mxu0 0.0
        %866 = vmatpush.msra.mxu0 0.0
        %867 = vmatpush.msra.mxu0 %v787
        %868 = vmatmul.f32.gmra.mxu0 %v850
        %v869 = vpop.f32.mrf.mxu0
        %v870 = vadd.f32 0.0, %v869
        %871 = vdwg.mxu0
        %872 = vrot.lane.b32.xlu0 %v758, 120
        %v873 = vpop.permute.xlu0 %872
        %874 = vrot.lane.b32.xlu0 %v733, 120
        %v875 = vpop.permute.xlu0 %874
        %v876 = vsel %vm795, %v873, 0
        %v878 = vsel %vm795, %v875, 0
        %880 = vmatpush.xpose.msra.mxu0 0.0
        %881 = vmatpush.xpose.msra.mxu0 0.0
        %882 = vmatpush.xpose.msra.mxu0 0.0
        %883 = vmatpush.xpose.msra.mxu0 0.0
        %884 = vmatpush.xpose.msra.mxu0 0.0
        %885 = vmatpush.xpose.msra.mxu0 0.0
        %886 = vmatpush.xpose.msra.mxu0 0.0
        %887 = vmatpush.xpose.msra.mxu0 0.0
        %888 = vmatpush.xpose.msra.mxu0 0.0
        %889 = vmatpush.xpose.msra.mxu0 0.0
        %890 = vmatpush.xpose.msra.mxu0 0.0
        %891 = vmatpush.xpose.msra.mxu0 0.0
        %892 = vmatpush.xpose.msra.mxu0 0.0
        %893 = vmatpush.xpose.msra.mxu0 0.0
        %894 = vmatpush.xpose.msra.mxu0 0.0
        %895 = vmatpush.xpose.msra.mxu0 %v878
        %896 = vmatmul.f32.gmra.mxu0 %v876
        %v897 = vpop.f32.mrf.mxu0
        %v898 = vadd.f32 0.0, %v897
        %899 = vdwg.mxu0
        %v900 = vsel %vm794, %v898, -1e+32
        %v901 = vsel %vm795, %v900, -inf
        %902 = vmax.xlane.f32.xlu0 %v901
        %v903 = vpop.xlane.xlu0 %902
        %v904 = vsub.f32 %v900, %v903
        %v905 = vmul.f32 %v904, 1.442695
        %v906 = vpow.pop %v905
        %v907 = vsel %vm795, %v906, 0.0
        %908 = vadd.xlane.f32.xlu0 %v907
        %v909 = vpop.xlane.xlu0 %908
        %v910 = vrcp.pop %v909
        %v911 = vmul.f32 %v909, %v910
        %v912 = vsub.f32 1.0, %v911
        %v913 = vmul.f32 %v910, %v912
        %v914 = vadd.f32 %v910, %v913
        %vm915 = vweird.f32 %v909
        %vm916 = vweird.f32 %v910
        %vm917 = vmor %vm915, %vm916
        %v918 = vsel %vm917, %v910, %v914
        %v919 = vand.u32 2147483647, %v909
        %vm920 = vcmp.eq.f32.partialorder %v919, 8.507059e+37
        %v921 = vand.u32 %v909, 2147483648
        %v922 = vor.u32 1.1754944e-38, %v921
        %v923 = vsel %vm920, %v922, %v918
        %v924 = vmul.f32 1.0, %v923
        %v925 = vmul.f32 %v906, %v924
        %926 = vst.msk [vmem:[%s697 + $0x8] sm:$0xff] %vm795, %v925
        %928 = vrot.lane.b32.xlu0 %v787, 120
        %v929 = vpop.permute.xlu0 %928
        %v932 = vsel %vm795, %v925, 0
        %934 = vmatpush.msra.mxu0 0.0
        %935 = vmatpush.msra.mxu0 0.0
        %936 = vmatpush.msra.mxu0 0.0
        %937 = vmatpush.msra.mxu0 0.0
        %938 = vmatpush.msra.mxu0 0.0
        %939 = vmatpush.msra.mxu0 0.0
        %940 = vmatpush.msra.mxu0 0.0
        %941 = vmatpush.msra.mxu0 0.0
        %942 = vmatpush.msra.mxu0 0.0
        %943 = vmatpush.msra.mxu0 0.0
        %944 = vmatpush.msra.mxu0 0.0
        %945 = vmatpush.msra.mxu0 0.0
        %946 = vmatpush.msra.mxu0 0.0
        %947 = vmatpush.msra.mxu0 0.0
        %948 = vmatpush.msra.mxu0 0.0
        %949 = vmatpush.msra.mxu0 %v929
        %950 = vmatmul.f32.gmra.mxu0 %v932
        %v951 = vpop.f32.mrf.mxu0
        %v952 = vadd.f32 0.0, %v951
        %953 = vdwg.mxu0
        %954 = vrot.lane.b32.xlu0 %v758, 112
        %v955 = vpop.permute.xlu0 %954
        %956 = vrot.lane.b32.xlu0 %v733, 112
        %v957 = vpop.permute.xlu0 %956
        %v958 = vsel %vm795, %v955, 0
        %v960 = vsel %vm795, %v957, 0
        %962 = vmatpush.xpose.msra.mxu0 0.0
        %963 = vmatpush.xpose.msra.mxu0 0.0
        %964 = vmatpush.xpose.msra.mxu0 0.0
        %965 = vmatpush.xpose.msra.mxu0 0.0
        %966 = vmatpush.xpose.msra.mxu0 0.0
        %967 = vmatpush.xpose.msra.mxu0 0.0
        %968 = vmatpush.xpose.msra.mxu0 0.0
        %969 = vmatpush.xpose.msra.mxu0 0.0
        %970 = vmatpush.xpose.msra.mxu0 0.0
        %971 = vmatpush.xpose.msra.mxu0 0.0
        %972 = vmatpush.xpose.msra.mxu0 0.0
        %973 = vmatpush.xpose.msra.mxu0 0.0
        %974 = vmatpush.xpose.msra.mxu0 0.0
        %975 = vmatpush.xpose.msra.mxu0 0.0
        %976 = vmatpush.xpose.msra.mxu0 0.0
        %977 = vmatpush.xpose.msra.mxu0 %v960
        %978 = vmatmul.f32.gmra.mxu0 %v958
        %v979 = vpop.f32.mrf.mxu0
        %v980 = vadd.f32 0.0, %v979
        %981 = vdwg.mxu0
        %v982 = vsel %vm794, %v980, -1e+32
        %v983 = vsel %vm795, %v982, -inf
        %984 = vmax.xlane.f32.xlu0 %v983
        %v985 = vpop.xlane.xlu0 %984
        %v986 = vsub.f32 %v982, %v985
        %v987 = vmul.f32 %v986, 1.442695
        %v988 = vpow.pop %v987
        %v989 = vsel %vm795, %v988, 0.0
        %990 = vadd.xlane.f32.xlu0 %v989
        %v991 = vpop.xlane.xlu0 %990
        %v992 = vrcp.pop %v991
        %v993 = vmul.f32 %v991, %v992
        %v994 = vsub.f32 1.0, %v993
        %v995 = vmul.f32 %v992, %v994
        %v996 = vadd.f32 %v992, %v995
        %vm997 = vweird.f32 %v991
        %vm998 = vweird.f32 %v992
        %vm999 = vmor %vm997, %vm998
        %v1000 = vsel %vm999, %v992, %v996
        %v1001 = vand.u32 2147483647, %v991
        %vm1002 = vcmp.eq.f32.partialorder %v1001, 8.507059e+37
        %v1003 = vand.u32 %v991, 2147483648
        %v1004 = vor.u32 1.1754944e-38, %v1003
        %v1005 = vsel %vm1002, %v1004, %v1000
        %v1006 = vmul.f32 1.0, %v1005
        %v1007 = vmul.f32 %v988, %v1006
        %1008 = vst.msk [vmem:[%s697 + $0x10] sm:$0xff] %vm795, %v1007
        %1009 = vrot.lane.b32.xlu0 %v787, 112
        %v1010 = vpop.permute.xlu0 %1009
        %v1013 = vsel %vm795, %v1007, 0
        %1015 = vmatpush.msra.mxu0 0.0
        %1016 = vmatpush.msra.mxu0 0.0
        %1017 = vmatpush.msra.mxu0 0.0
        %1018 = vmatpush.msra.mxu0 0.0
        %1019 = vmatpush.msra.mxu0 0.0
        %1020 = vmatpush.msra.mxu0 0.0
        %1021 = vmatpush.msra.mxu0 0.0
        %1022 = vmatpush.msra.mxu0 0.0
        %1023 = vmatpush.msra.mxu0 0.0
        %1024 = vmatpush.msra.mxu0 0.0
        %1025 = vmatpush.msra.mxu0 0.0
        %1026 = vmatpush.msra.mxu0 0.0
        %1027 = vmatpush.msra.mxu0 0.0
        %1028 = vmatpush.msra.mxu0 0.0
        %1029 = vmatpush.msra.mxu0 0.0
        %1030 = vmatpush.msra.mxu0 %v1010
        %1031 = vmatmul.f32.gmra.mxu0 %v1013
        %v1032 = vpop.f32.mrf.mxu0
        %v1033 = vadd.f32 0.0, %v1032
        %1034 = vdwg.mxu0
        %1035 = vrot.lane.b32.xlu0 %v758, 104
        %v1036 = vpop.permute.xlu0 %1035
        %1037 = vrot.lane.b32.xlu0 %v733, 104
        %v1038 = vpop.permute.xlu0 %1037
        %v1039 = vsel %vm795, %v1036, 0
        %v1041 = vsel %vm795, %v1038, 0
        %1043 = vmatpush.xpose.msra.mxu0 0.0
        %1044 = vmatpush.xpose.msra.mxu0 0.0
        %1045 = vmatpush.xpose.msra.mxu0 0.0
        %1046 = vmatpush.xpose.msra.mxu0 0.0
        %1047 = vmatpush.xpose.msra.mxu0 0.0
        %1048 = vmatpush.xpose.msra.mxu0 0.0
        %1049 = vmatpush.xpose.msra.mxu0 0.0
        %1050 = vmatpush.xpose.msra.mxu0 0.0
        %1051 = vmatpush.xpose.msra.mxu0 0.0
        %1052 = vmatpush.xpose.msra.mxu0 0.0
        %1053 = vmatpush.xpose.msra.mxu0 0.0
        %1054 = vmatpush.xpose.msra.mxu0 0.0
        %1055 = vmatpush.xpose.msra.mxu0 0.0
        %1056 = vmatpush.xpose.msra.mxu0 0.0
        %1057 = vmatpush.xpose.msra.mxu0 0.0
        %1058 = vmatpush.xpose.msra.mxu0 %v1041
        %1059 = vmatmul.f32.gmra.mxu0 %v1039
        %v1060 = vpop.f32.mrf.mxu0
        %v1061 = vadd.f32 0.0, %v1060
        %1062 = vdwg.mxu0
        %v1063 = vsel %vm794, %v1061, -1e+32
        %v1064 = vsel %vm795, %v1063, -inf
        %1065 = vmax.xlane.f32.xlu0 %v1064
        %v1066 = vpop.xlane.xlu0 %1065
        %v1067 = vsub.f32 %v1063, %v1066
        %v1068 = vmul.f32 %v1067, 1.442695
        %v1069 = vpow.pop %v1068
        %v1070 = vsel %vm795, %v1069, 0.0
        %1071 = vadd.xlane.f32.xlu0 %v1070
        %v1072 = vpop.xlane.xlu0 %1071
        %v1073 = vrcp.pop %v1072
        %v1074 = vmul.f32 %v1072, %v1073
        %v1075 = vsub.f32 1.0, %v1074
        %v1076 = vmul.f32 %v1073, %v1075
        %v1077 = vadd.f32 %v1073, %v1076
        %vm1078 = vweird.f32 %v1072
        %vm1079 = vweird.f32 %v1073
        %vm1080 = vmor %vm1078, %vm1079
        %v1081 = vsel %vm1080, %v1073, %v1077
        %v1082 = vand.u32 2147483647, %v1072
        %vm1083 = vcmp.eq.f32.partialorder %v1082, 8.507059e+37
        %v1084 = vand.u32 %v1072, 2147483648
        %v1085 = vor.u32 1.1754944e-38, %v1084
        %v1086 = vsel %vm1083, %v1085, %v1081
        %v1087 = vmul.f32 1.0, %v1086
        %v1088 = vmul.f32 %v1069, %v1087
        %1089 = vst.msk [vmem:[%s697 + $0x18] sm:$0xff] %vm795, %v1088
        %1090 = vrot.lane.b32.xlu0 %v787, 104
        %v1091 = vpop.permute.xlu0 %1090
        %v1094 = vsel %vm795, %v1088, 0
        %1096 = vmatpush.msra.mxu0 0.0
        %1097 = vmatpush.msra.mxu0 0.0
        %1098 = vmatpush.msra.mxu0 0.0
        %1099 = vmatpush.msra.mxu0 0.0
        %1100 = vmatpush.msra.mxu0 0.0
        %1101 = vmatpush.msra.mxu0 0.0
        %1102 = vmatpush.msra.mxu0 0.0
        %1103 = vmatpush.msra.mxu0 0.0
        %1104 = vmatpush.msra.mxu0 0.0
        %1105 = vmatpush.msra.mxu0 0.0
        %1106 = vmatpush.msra.mxu0 0.0
        %1107 = vmatpush.msra.mxu0 0.0
        %1108 = vmatpush.msra.mxu0 0.0
        %1109 = vmatpush.msra.mxu0 0.0
        %1110 = vmatpush.msra.mxu0 0.0
        %1111 = vmatpush.msra.mxu0 %v1091
        %1112 = vmatmul.f32.gmra.mxu0 %v1094
        %v1113 = vpop.f32.mrf.mxu0
        %v1114 = vadd.f32 0.0, %v1113
        %1115 = vdwg.mxu0
        %1117 = vrot.lane.b32.xlu0 %v952, 8
        %v1118 = vpop.permute.xlu0 %1117
        %1121 = vrot.lane.b32.xlu0 %v1033, 16
        %v1122 = vpop.permute.xlu0 %1121
        %1125 = vrot.lane.b32.xlu0 %v1114, 24
        %v1126 = vpop.permute.xlu0 %1125
        %v1128 = vsel %vm795, %v870, %v1118
        %vm1129 = vcmask 130048
        %v1130 = vsel %vm1129, %v1128, %v1122
        %vm1131 = vcmask 195584
        %v1132 = vsel %vm1131, %v1130, %v1126
        %vm1133 = vcmp.ne.s32.totalorder %v790, 0
        %v1134 = vsel %vm1133, 1, 0
        %vm1135 = vcmp.eq.s32.totalorder %v1134, 1
        %v1136 = vsel %vm1135, %v1132, 0.0
        %v1137 = vld [vmem:[%s7] sm:$0xff]
        %v1138 = vld [vmem:[%s7 + $0x8] sm:$0xff]
        %v1139 = vld [vmem:[%s7 + $0x10] sm:$0xff]
        %v1140 = vld [vmem:[%s7 + $0x18] sm:$0xff]
        %v1142 = vperm.slane %v703, 0
        %v1145 = vsel %vm711, %v1136, 0
        %1147 = vmatpush.msra.mxu0 0.0
        %1148 = vmatpush.msra.mxu0 0.0
        %1149 = vmatpush.msra.mxu0 0.0
        %1150 = vmatpush.msra.mxu0 0.0
        %1151 = vmatpush.msra.mxu0 0.0
        %1152 = vmatpush.msra.mxu0 0.0
        %1153 = vmatpush.msra.mxu0 0.0
        %1154 = vmatpush.msra.mxu0 0.0
        %1155 = vmatpush.msra.mxu0 0.0
        %1156 = vmatpush.msra.mxu0 0.0
        %1157 = vmatpush.msra.mxu0 0.0
        %1158 = vmatpush.msra.mxu0 0.0
        %1159 = vmatpush.msra.mxu0 %v1140
        %1160 = vmatpush.msra.mxu0 %v1139
        %1161 = vmatpush.msra.mxu0 %v1138
        %1162 = vmatpush.msra.mxu0 %v1137
        %1163 = vmatmul.f32.gmra.mxu0 %v1145
        %v1164 = vpop.f32.mrf.mxu0
        %v1165 = vadd.f32 %v1142, %v1164
        %1166 = vdwg.mxu0
        %v1167 = vadd.f32 %v698, %v1165
        %v1168 = vsel %vm711, %v1167, 0.0
        %1169 = vadd.xlane.f32.xlu0 %v1168
        %v1170 = vpop.xlane.xlu0 %1169
        %v1171 = vrcp.pop 32.0
        %v1172 = vmul.f32 32.0, %v1171
        %v1173 = vsub.f32 1.0, %v1172
        %v1174 = vmul.f32 %v1171, %v1173
        %v1175 = vadd.f32 %v1171, %v1174
        %vm1176 = vweird.f32 %v1171
        %v1177 = vsel %vm1176, %v1171, %v1175
        %v1178 = vmul.f32 %v1170, %v1177
        %v1179 = vsub.f32 %v1167, %v1178
        %v1180 = vmul.f32 %v1179, %v1179
        %v1181 = vsel %vm711, %v1180, 0.0
        %1182 = vadd.xlane.f32.xlu0 %v1181
        %v1183 = vpop.xlane.xlu0 %1182
        %v1184 = vmul.f32 %v1183, %v1177
        %v1185 = vadd.f32 %v1184, 1e-05
        %v1186 = vrsqrt.pop %v1185
        %v1187 = vmul.f32 %v1186, %v1185
        %v1188 = vmul.f32 %v1187, %v1186
        %v1189 = vmul.f32 0.5, %v1188
        %v1190 = vsub.f32 1.5, %v1189
        %v1191 = vmul.f32 %v1186, %v1190
        %vm1192 = vweird.f32 %v1185
        %vm1193 = vweird.f32 %v1186
        %vm1194 = vmor %vm1192, %vm1193
        %v1195 = vsel %vm1194, %v1186, %v1191
        %v1196 = vmul.f32 %v1179, %v1195
        %v1197 = vld [vmem:[%s9] sm:$0x1]
        %v1199 = vperm.slane %v1197, 0
        %v1201 = vmul.f32 %v1196, %v1199
        %v1202 = vld [vmem:[%s10] sm:$0x1]
        %v1204 = vperm.slane %v1202, 0
        %v1206 = vadd.f32 %v1201, %v1204
        %v1207 = vld [vmem:[#allocation8] sm:$0xff]
        %v1208 = vld [vmem:[#allocation8 + $0x8] sm:$0xff]
        %v1209 = vld [vmem:[#allocation8 + $0x10] sm:$0xff]
        %v1210 = vld [vmem:[#allocation8 + $0x18] sm:$0xff]
        %v1211 = vld [vmem:[%s12] sm:$0x1]
        %v1213 = vperm.slane %v1211, 0
        %v1216 = vsel %vm711, %v1206, 0
        %1218 = vmatpush.msra.mxu0 0.0
        %1219 = vmatpush.msra.mxu0 0.0
        %1220 = vmatpush.msra.mxu0 0.0
        %1221 = vmatpush.msra.mxu0 0.0
        %1222 = vmatpush.msra.mxu0 0.0
        %1223 = vmatpush.msra.mxu0 0.0
        %1224 = vmatpush.msra.mxu0 0.0
        %1225 = vmatpush.msra.mxu0 0.0
        %1226 = vmatpush.msra.mxu0 0.0
        %1227 = vmatpush.msra.mxu0 0.0
        %1228 = vmatpush.msra.mxu0 0.0
        %1229 = vmatpush.msra.mxu0 0.0
        %1230 = vmatpush.msra.mxu0 %v1210
        %1231 = vmatpush.msra.mxu0 %v1209
        %1232 = vmatpush.msra.mxu0 %v1208
        %1233 = vmatpush.msra.mxu0 %v1207
        %1234 = vmatmul.f32.gmra.mxu0 %v1216
        %v1235 = vpop.f32.mrf.mxu0
        %v1236 = vadd.f32 %v1213, %v1235
        %1237 = vdwg.mxu0
        %v1238 = vmax.f32 %v1236, 0.0
        %v1239 = vld [vmem:[%s13] sm:$0xff]
        %v1240 = vld [vmem:[%s13 + $0x8] sm:$0xff]
        %v1241 = vld [vmem:[%s13 + $0x10] sm:$0xff]
        %v1242 = vld [vmem:[%s13 + $0x18] sm:$0xff]
        %v1243 = vld [vmem:[%s13 + $0x20] sm:$0xff]
        %v1244 = vld [vmem:[%s13 + $0x28] sm:$0xff]
        %v1245 = vld [vmem:[%s13 + $0x30] sm:$0xff]
        %v1246 = vld [vmem:[%s13 + $0x38] sm:$0xff]
        %v1247 = vld [vmem:[%s14] sm:$0x1]
        %v1249 = vperm.slane %v1247, 0
        %vm1251 = vcmask 523264
        %v1253 = vsel %vm1251, %v1238, 0
        %1255 = vmatpush.msra.mxu0 0.0
        %1256 = vmatpush.msra.mxu0 0.0
        %1257 = vmatpush.msra.mxu0 0.0
        %1258 = vmatpush.msra.mxu0 0.0
        %1259 = vmatpush.msra.mxu0 0.0
        %1260 = vmatpush.msra.mxu0 0.0
        %1261 = vmatpush.msra.mxu0 0.0
        %1262 = vmatpush.msra.mxu0 0.0
        %1263 = vmatpush.msra.mxu0 %v1246
        %1264 = vmatpush.msra.mxu0 %v1245
        %1265 = vmatpush.msra.mxu0 %v1244
        %1266 = vmatpush.msra.mxu0 %v1243
        %1267 = vmatpush.msra.mxu0 %v1242
        %1268 = vmatpush.msra.mxu0 %v1241
        %1269 = vmatpush.msra.mxu0 %v1240
        %1270 = vmatpush.msra.mxu0 %v1239
        %1271 = vmatmul.f32.gmra.mxu0 %v1253
        %v1272 = vpop.f32.mrf.mxu0
        %v1273 = vadd.f32 %v1249, %v1272
        %1274 = vdwg.mxu0
        %v1275 = vadd.f32 %v1206, %v1273
        %v1276 = vsel %vm711, %v1275, 0.0
        %1277 = vadd.xlane.f32.xlu0 %v1276
        %v1278 = vpop.xlane.xlu0 %1277
        %v1279 = vmul.f32 %v1278, %v1177
        %v1280 = vsub.f32 %v1275, %v1279
        %v1281 = vmul.f32 %v1280, %v1280
        %v1282 = vsel %vm711, %v1281, 0.0
        %1283 = vadd.xlane.f32.xlu0 %v1282
        %v1284 = vpop.xlane.xlu0 %1283
        %v1285 = vmul.f32 %v1284, %v1177
        %v1286 = vadd.f32 %v1285, 1e-05
        %v1287 = vrsqrt.pop %v1286
        %v1288 = vmul.f32 %v1287, %v1286
        %v1289 = vmul.f32 %v1288, %v1287
        %v1290 = vmul.f32 0.5, %v1289
        %v1291 = vsub.f32 1.5, %v1290
        %v1292 = vmul.f32 %v1287, %v1291
        %vm1293 = vweird.f32 %v1286
        %vm1294 = vweird.f32 %v1287
        %vm1295 = vmor %vm1293, %vm1294
        %v1296 = vsel %vm1295, %v1287, %v1292
        %v1297 = vmul.f32 %v1280, %v1296
        %v1298 = vld [vmem:[%s15] sm:$0x1]
        %v1300 = vperm.slane %v1298, 0
        %v1302 = vmul.f32 %v1297, %v1300
        %v1303 = vld [vmem:[%s16] sm:$0x1]
        %v1305 = vperm.slane %v1303, 0
        %v1307 = vadd.f32 %v1302, %v1305
        %1308 = vst.msk [vmem:[%s685] sm:$0xff] %vm711, %v1307
        %s1309 = sand.u32 %s420, 1
        %s1310 = scalar_lea.sflag [#allocation4], %s1309
        %s1311 = sand.u32 %s420, 1
        %s1312 = smul.addr %s1311, 8
        %s1313 = scalar_lea.vmem [#allocation10], %s1312
        %p1314 = scmp.lt.s32.totalorder %s40, 1
        %s1315 = scalar_select %p1314, %s40, 1
        %s1316 = smul.addr %s1315, 4
        %s1317 = smul.addr %s1316, 8
        %s1318 = scalar_lea.vmem %s18, %s1317
        // Predicated region
        $region105: #{tpu_custom_call.1} parent=87 // pred_check
          %p1319 = pneg %p430
        $region106: #{tpu_custom_call.1} parent=87 // pred_check_branch
          %1321 = sbr.rel (%p1319) target = $region108
        $region107: #{tpu_custom_call.1} parent=87 // pred_region
          %1323 = vsyncadd %s1310, 0
          %s1324 = smul.addr %s40, 8
          %s1325 = scalar_lea.hbm %s17, %s1324
          %s1327 = sshll.u32 %s1313, 4
          %s1328 = int_to_ptr.vmem [resolvable:$true] %s1327
          %s1329 = sshll.u32 %s1325, 4
          %s1330 = int_to_ptr.hbm [resolvable:$true] %s1329
          %1332 = dma.vmem_to_hbm [thread:$0]  %s1328, 128, %s1330, %s1310
        $region108: #{tpu_custom_call.1} parent=87 // pred_fallthru
          _
        // Predicated region
        $region109: #{tpu_custom_call.1} parent=87 // pred_check
          %p1333 = pneg %p456
        $region110: #{tpu_custom_call.1} parent=87 // pred_check_branch
          %1335 = sbr.rel (%p1333) target = $region112
        $region111: #{tpu_custom_call.1} parent=87 // pred_region
          _
        $region112: #{tpu_custom_call.1} parent=87 // pred_fallthru
          _
      $region88: #{tpu_custom_call.1} parent=5 // pred_fallthru
        _
      %p1336 = scmp.le.s32.totalorder 2, %s35
      // Predicated region
      $region113: #{tpu_custom_call.1} parent=5 // pred_check
        %p1337 = pneg %p1336
      $region114: #{tpu_custom_call.1} parent=5 // pred_check_branch
        %1339 = sbr.rel (%p1337) target = $region116
      $region115: #{tpu_custom_call.1} parent=5 // pred_region
        %s1340 = ssub.s32 %s35, 2
        // Predicated region
        $region117: #{tpu_custom_call.1} parent=115 // pred_check
          %p1341 = pneg %p436
        $region118: #{tpu_custom_call.1} parent=115 // pred_check_branch
          %1343 = sbr.rel (%p1341) target = $region120
        $region119: #{tpu_custom_call.1} parent=115 // pred_region
          %s1344 = sand.u32 %s421, 1
          %s1345 = scalar_lea.sflag [#allocation4], %s1344
          %s1346 = sand.u32 %s421, 1
          %s1347 = smul.addr %s1346, 8
          %s1348 = scalar_lea.vmem [#allocation10], %s1347
          %1350 = dma.done %s1345, 128
        $region120: #{tpu_custom_call.1} parent=115 // pred_fallthru
          _
        // Predicated region
        $region121: #{tpu_custom_call.1} parent=115 // pred_check
          %p1351 = pneg %p462
        $region122: #{tpu_custom_call.1} parent=115 // pred_check_branch
          %1353 = sbr.rel (%p1351) target = $region124
        $region123: #{tpu_custom_call.1} parent=115 // pred_region
          %p1354 = scmp.lt.s32.totalorder %s41, 1
          %s1355 = scalar_select %p1354, %s41, 1
          %s1356 = smul.addr %s1355, 4
          %s1357 = smul.addr %s1356, 8
          %s1358 = scalar_lea.vmem %s18, %s1357
        $region124: #{tpu_custom_call.1} parent=115 // pred_fallthru
          _
      $region116: #{tpu_custom_call.1} parent=5 // pred_fallthru
        _
    $region6: #{tpu_custom_call.1} parent=1 // loop_footer
      %s39 = sadd.s32 1, %s35
    $region7: #{tpu_custom_call.1} parent=1 // loop_footer_branch
      %34 = sbr.rel target = $region3
    $region8: #{tpu_custom_call.1} parent=1 // loop_exit
      _
    %1359 = vsyncpa [#allocation3], 1
    %s1360 = scalar_lea.sflag [#allocation3], 1
    %1361 = vsyncpa %s1360, 1
    %1362 = vsyncpa [#allocation6], 1
    %s1363 = scalar_lea.sflag [#allocation6], 1
    %1364 = vsyncpa %s1363, 1
    %1365 = vsyncpa [#allocation9], 1
    %1366 = vsyncpa [#allocation4], 1
    %s1367 = scalar_lea.sflag [#allocation4], 1
    %1368 = vsyncpa %s1367, 1

// kernel: tpu_custom_call.1
$region0: #{tpu_custom_call.1}
  #allocation0 [shape = 'u32[]', space=smem, size = 0x4, offset = 0x4, fixed_abs, tag = 'smem constant byte address 0x4 - core index']
  #allocation1 [shape = 'u32[72,128]{1,0:T(1,128)}', space=vmem, size = 0x9000, scoped, tag = 'internal scratch']
  %s0 = inlined_call_operand.hbm [shape: f32[2,8,32], index: 0, kind: input, shape index: {}]
  %s1 = inlined_call_operand.hbm [shape: f32[2,8,32], index: 1, kind: input, shape index: {}]
  %s2 = inlined_call_operand.hbm [shape: f32[2,8,32], index: 2, kind: input, shape index: {}]
  %s3 = inlined_call_operand.vmem [shape: f32[32,32], index: 3, kind: input, shape index: {}]
  %s4 = inlined_call_operand.vmem [shape: f32[1,32], index: 4, kind: input, shape index: {}]
  %s5 = inlined_call_operand.vmem [shape: f32[32,32], index: 5, kind: input, shape index: {}]
  %s6 = inlined_call_operand.vmem [shape: f32[1,32], index: 6, kind: input, shape index: {}]
  %s7 = inlined_call_operand.vmem [shape: f32[32,32], index: 7, kind: input, shape index: {}]
  %s8 = inlined_call_operand.vmem [shape: f32[1,32], index: 8, kind: input, shape index: {}]
  %s9 = inlined_call_operand.vmem [shape: f32[1,32], index: 9, kind: input, shape index: {}]
  %s10 = inlined_call_operand.vmem [shape: f32[1,32], index: 10, kind: input, shape index: {}]
  %s11 = inlined_call_operand.hbm [shape: f32[32,64], index: 11, kind: input, shape index: {}]
  %s12 = inlined_call_operand.vmem [shape: f32[1,64], index: 12, kind: input, shape index: {}]
  %s13 = inlined_call_operand.vmem [shape: f32[64,32], index: 13, kind: input, shape index: {}]
  %s14 = inlined_call_operand.vmem [shape: f32[1,32], index: 14, kind: input, shape index: {}]
  %s15 = inlined_call_operand.vmem [shape: f32[1,32], index: 15, kind: input, shape index: {}]
  %s16 = inlined_call_operand.vmem [shape: f32[1,32], index: 16, kind: input, shape index: {}]
  %s17 = inlined_call_operand.hbm [shape: f32[2,8,32], index: 17, kind: output, shape index: {0}]
  %s18 = inlined_call_operand.vmem [shape: f32[2,32,8], index: 18, kind: output, shape index: {1}]
  %19 = xla_tuple %s17, %s18
  %s20 = sld [smem:[#allocation0]]
  $region125: #{tpu_custom_call.1} parent=0
    _
  %s22 = ssub.s32 1, %s20
  %s23 = scalar_select 0, %s22, %s20
  $region1: #{tpu_custom_call.1} parent=0
    #allocation2 [shape = 'u8[8192]{0}', space=vmem, size = 0x2000, scoped, tag = 'input window, operand 0']
    #allocation3 [shape = 's32[2]{0}', space=sflag, size = 0x8, scoped, tag = 'scoped memory for tpu_custom_call.1']
    #allocation4 [shape = 's32[2]{0}', space=sflag, size = 0x8, scoped, tag = 'scoped memory for tpu_custom_call.1']
    #allocation5 [shape = 'u8[8192]{0}', space=vmem, size = 0x2000, scoped, tag = 'input window, operand 1']
    #allocation6 [shape = 's32[2]{0}', space=sflag, size = 0x8, scoped, tag = 'scoped memory for tpu_custom_call.1']
    #allocation7 [shape = 'u8[8192]{0}', space=vmem, size = 0x2000, scoped, tag = 'input window, operand 2']
    #allocation8 [shape = 'u8[16384]{0}', space=vmem, size = 0x4000, scoped, tag = 'input window, operand 11, single buffered']
    #allocation9 [shape = 's32[1]{0}', space=sflag, size = 0x4, scoped, tag = 'scoped memory for tpu_custom_call.1']
    #allocation10 [shape = 'u8[8192]{0}', space=vmem, size = 0x2000, scoped, tag = 'output window, operand 0']
    %24 = vsyncpa [#allocation3], 0
    %s25 = scalar_lea.sflag [#allocation3], 1
    %26 = vsyncpa %s25, 0
    %27 = vsyncpa [#allocation6], 0
    %s28 = scalar_lea.sflag [#allocation6], 1
    %29 = vsyncpa %s28, 0
    %30 = vsyncpa [#allocation9], 0
    %31 = vsyncpa [#allocation4], 0
    %s32 = scalar_lea.sflag [#allocation4], 1
    %33 = vsyncpa %s32, 0
    loop: start=0, step=1, limit=4
    $region2: #{tpu_custom_call.1} parent=1 // loop_pre_header
      _
    $region3: #{tpu_custom_call.1} parent=1 // loop_header
      %s35 = sphi 0, %s39
      %p36 = scmp.ge.s32.totalorder %s35, 4
      %s45 = sphi 0, %s47
      %s48 = sphi 0, %s45
      %s49 = sphi 0, %s48
      %s65 = sphi 0, %s49
      %s71 = sphi 0, %s73
      %s74 = sphi 0, %s71
      %s75 = sphi 0, %s74
      %s91 = sphi 0, %s75
      %s97 = sphi 0, %s99
      %s100 = sphi 0, %s97
      %s101 = sphi 0, %s100
      %s117 = sphi 0, %s101
      %s121 = sphi 0, %s121
      %s123 = sphi 0, %s121
      %s124 = sphi 0, %s123
      %s138 = sphi 0, %s124
      %s142 = sphi 0, %s142
      %s144 = sphi 0, %s142
      %s145 = sphi 0, %s144
      %s159 = sphi 0, %s145
      %s163 = sphi 0, %s163
      %s165 = sphi 0, %s163
      %s166 = sphi 0, %s165
      %s180 = sphi 0, %s166
      %s184 = sphi 0, %s184
      %s186 = sphi 0, %s184
      %s187 = sphi 0, %s186
      %s201 = sphi 0, %s187
      %s205 = sphi 0, %s205
      %s207 = sphi 0, %s205
      %s208 = sphi 0, %s207
      %s222 = sphi 0, %s208
      %s226 = sphi 0, %s226
      %s228 = sphi 0, %s226
      %s229 = sphi 0, %s228
      %s243 = sphi 0, %s229
      %s247 = sphi 0, %s247
      %s249 = sphi 0, %s247
      %s250 = sphi 0, %s249
      %s264 = sphi 0, %s250
      %s268 = sphi 0, %s268
      %s270 = sphi 0, %s268
      %s271 = sphi 0, %s270
      %s285 = sphi 0, %s271
      %s289 = sphi 0, %s289
      %s291 = sphi 0, %s289
      %s292 = sphi 0, %s291
      %s306 = sphi 0, %s292
      %s310 = sphi 0, %s310
      %s312 = sphi 0, %s310
      %s313 = sphi 0, %s312
      %s327 = sphi 0, %s313
      %s331 = sphi 0, %s331
      %s333 = sphi 0, %s331
      %s334 = sphi 0, %s333
      %s348 = sphi 0, %s334
      %s352 = sphi 0, %s352
      %s354 = sphi 0, %s352
      %s355 = sphi 0, %s354
      %s369 = sphi 0, %s355
      %s373 = sphi 0, %s373
      %s375 = sphi 0, %s373
      %s376 = sphi 0, %s375
      %s390 = sphi 0, %s376
      %s394 = sphi 0, %s394
      %s396 = sphi 0, %s394
      %s397 = sphi 0, %s396
      %s411 = sphi 0, %s397
      %s417 = sphi 0, %s419
      %s420 = sphi 0, %s417
      %s421 = sphi 0, %s420
      %s437 = sphi 0, %s421
      %s443 = sphi 0, %s445
      %s446 = sphi 0, %s443
      %s447 = sphi 0, %s446
      %s463 = sphi 0, %s447
    $region4: #{tpu_custom_call.1} parent=1 // loop_header_branch
      %38 = sbr.rel (%p36) target = $region8
    $region5: #{tpu_custom_call.1} parent=1 // loop_body
      %s40 = ssub.s32 %s35, 1
      %s41 = ssub.s32 %s35, 2
      %s42 = sadd.s32 %s35, 1
      %s43 = ssub.s32 %s35, %s42
      %p44 = scmp.eq.s32.totalorder %s43, 0
      %s46 = sadd.s32 %s45, 1
      %s47 = scalar_select %p44, %s45, %s46
      %p50 = pneg %p44
      %p51 = scmp.eq.s32.totalorder %s35, 1
      %p52 = por %p50, %p51
      %p53 = scmp.ne.s32.totalorder %s45, %s48
      %p54 = scmp.eq.s32.totalorder %s35, 0
      %p55 = por %p53, %p54
      %p56 = scmp.ne.s32.totalorder %s45, %s48
      %p57 = scmp.eq.s32.totalorder %s40, 1
      %p58 = por %p56, %p57
      %p59 = scmp.ne.s32.totalorder %s48, %s49
      %p60 = scmp.eq.s32.totalorder %s40, 0
      %p61 = por %p59, %p60
      %p62 = scmp.ne.s32.totalorder %s48, %s49
      %p63 = scmp.eq.s32.totalorder %s41, 1
      %p64 = por %p62, %p63
      %p66 = scmp.ne.s32.totalorder %s49, %s65
      %p67 = scmp.eq.s32.totalorder %s41, 0
      %p68 = por %p66, %p67
      %s69 = ssub.s32 %s35, %s42
      %p70 = scmp.eq.s32.totalorder %s69, 0
      %s72 = sadd.s32 %s71, 1
      %s73 = scalar_select %p70, %s71, %s72
      %p76 = pneg %p70
      %p77 = scmp.eq.s32.totalorder %s35, 1
      %p78 = por %p76, %p77
      %p79 = scmp.ne.s32.totalorder %s71, %s74
      %p80 = scmp.eq.s32.totalorder %s35, 0
      %p81 = por %p79, %p80
      %p82 = scmp.ne.s32.totalorder %s71, %s74
      %p83 = scmp.eq.s32.totalorder %s40, 1
      %p84 = por %p82, %p83
      %p85 = scmp.ne.s32.totalorder %s74, %s75
      %p86 = scmp.eq.s32.totalorder %s40, 0
      %p87 = por %p85, %p86
      %p88 = scmp.ne.s32.totalorder %s74, %s75
      %p89 = scmp.eq.s32.totalorder %s41, 1
      %p90 = por %p88, %p89
      %p92 = scmp.ne.s32.totalorder %s75, %s91
      %p93 = scmp.eq.s32.totalorder %s41, 0
      %p94 = por %p92, %p93
      %s95 = ssub.s32 %s35, %s42
      %p96 = scmp.eq.s32.totalorder %s95, 0
      %s98 = sadd.s32 %s97, 1
      %s99 = scalar_select %p96, %s97, %s98
      %p102 = pneg %p96
      %p103 = scmp.eq.s32.totalorder %s35, 1
      %p104 = por %p102, %p103
      %p105 = scmp.ne.s32.totalorder %s97, %s100
      %p106 = scmp.eq.s32.totalorder %s35, 0
      %p107 = por %p105, %p106
      %p108 = scmp.ne.s32.totalorder %s97, %s100
      %p109 = scmp.eq.s32.totalorder %s40, 1
      %p110 = por %p108, %p109
      %p111 = scmp.ne.s32.totalorder %s100, %s101
      %p112 = scmp.eq.s32.totalorder %s40, 0
      %p113 = por %p111, %p112
      %p114 = scmp.ne.s32.totalorder %s100, %s101
      %p115 = scmp.eq.s32.totalorder %s41, 1
      %p116 = por %p114, %p115
      %p118 = scmp.ne.s32.totalorder %s101, %s117
      %p119 = scmp.eq.s32.totalorder %s41, 0
      %p120 = por %p118, %p119
      %s122 = sadd.s32 %s121, 1
      %p125 = scmp.eq.s32.totalorder %s35, 1
      %p126 = scmp.ne.s32.totalorder %s121, %s123
      %p127 = scmp.eq.s32.totalorder %s35, 0
      %p128 = por %p126, %p127
      %p129 = scmp.ne.s32.totalorder %s121, %s123
      %p130 = scmp.eq.s32.totalorder %s40, 1
      %p131 = por %p129, %p130
      %p132 = scmp.ne.s32.totalorder %s123, %s124
      %p133 = scmp.eq.s32.totalorder %s40, 0
      %p134 = por %p132, %p133
      %p135 = scmp.ne.s32.totalorder %s123, %s124
      %p136 = scmp.eq.s32.totalorder %s41, 1
      %p137 = por %p135, %p136
      %p139 = scmp.ne.s32.totalorder %s124, %s138
      %p140 = scmp.eq.s32.totalorder %s41, 0
      %p141 = por %p139, %p140
      %s143 = sadd.s32 %s142, 1
      %p146 = scmp.eq.s32.totalorder %s35, 1
      %p147 = scmp.ne.s32.totalorder %s142, %s144
      %p148 = scmp.eq.s32.totalorder %s35, 0
      %p149 = por %p147, %p148
      %p150 = scmp.ne.s32.totalorder %s142, %s144
      %p151 = scmp.eq.s32.totalorder %s40, 1
      %p152 = por %p150, %p151
      %p153 = scmp.ne.s32.totalorder %s144, %s145
      %p154 = scmp.eq.s32.totalorder %s40, 0
      %p155 = por %p153, %p154
      %p156 = scmp.ne.s32.totalorder %s144, %s145
      %p157 = scmp.eq.s32.totalorder %s41, 1
      %p158 = por %p156, %p157
      %p160 = scmp.ne.s32.totalorder %s145, %s159
      %p161 = scmp.eq.s32.totalorder %s41, 0
      %p162 = por %p160, %p161
      %s164 = sadd.s32 %s163, 1
      %p167 = scmp.eq.s32.totalorder %s35, 1
      %p168 = scmp.ne.s32.totalorder %s163, %s165
      %p169 = scmp.eq.s32.totalorder %s35, 0
      %p170 = por %p168, %p169
      %p171 = scmp.ne.s32.totalorder %s163, %s165
      %p172 = scmp.eq.s32.totalorder %s40, 1
      %p173 = por %p171, %p172
      %p174 = scmp.ne.s32.totalorder %s165, %s166
      %p175 = scmp.eq.s32.totalorder %s40, 0
      %p176 = por %p174, %p175
      %p177 = scmp.ne.s32.totalorder %s165, %s166
      %p178 = scmp.eq.s32.totalorder %s41, 1
      %p179 = por %p177, %p178
      %p181 = scmp.ne.s32.totalorder %s166, %s180
      %p182 = scmp.eq.s32.totalorder %s41, 0
      %p183 = por %p181, %p182
      %s185 = sadd.s32 %s184, 1
      %p188 = scmp.eq.s32.totalorder %s35, 1
      %p189 = scmp.ne.s32.totalorder %s184, %s186
      %p190 = scmp.eq.s32.totalorder %s35, 0
      %p191 = por %p189, %p190
      %p192 = scmp.ne.s32.totalorder %s184, %s186
      %p193 = scmp.eq.s32.totalorder %s40, 1
      %p194 = por %p192, %p193
      %p195 = scmp.ne.s32.totalorder %s186, %s187
      %p196 = scmp.eq.s32.totalorder %s40, 0
      %p197 = por %p195, %p196
      %p198 = scmp.ne.s32.totalorder %s186, %s187
      %p199 = scmp.eq.s32.totalorder %s41, 1
      %p200 = por %p198, %p199
      %p202 = scmp.ne.s32.totalorder %s187, %s201
      %p203 = scmp.eq.s32.totalorder %s41, 0
      %p204 = por %p202, %p203
      %s206 = sadd.s32 %s205, 1
      %p209 = scmp.eq.s32.totalorder %s35, 1
      %p210 = scmp.ne.s32.totalorder %s205, %s207
      %p211 = scmp.eq.s32.totalorder %s35, 0
      %p212 = por %p210, %p211
      %p213 = scmp.ne.s32.totalorder %s205, %s207
      %p214 = scmp.eq.s32.totalorder %s40, 1
      %p215 = por %p213, %p214
      %p216 = scmp.ne.s32.totalorder %s207, %s208
      %p217 = scmp.eq.s32.totalorder %s40, 0
      %p218 = por %p216, %p217
      %p219 = scmp.ne.s32.totalorder %s207, %s208
      %p220 = scmp.eq.s32.totalorder %s41, 1
      %p221 = por %p219, %p220
      %p223 = scmp.ne.s32.totalorder %s208, %s222
      %p224 = scmp.eq.s32.totalorder %s41, 0
      %p225 = por %p223, %p224
      %s227 = sadd.s32 %s226, 1
      %p230 = scmp.eq.s32.totalorder %s35, 1
      %p231 = scmp.ne.s32.totalorder %s226, %s228
      %p232 = scmp.eq.s32.totalorder %s35, 0
      %p233 = por %p231, %p232
      %p234 = scmp.ne.s32.totalorder %s226, %s228
      %p235 = scmp.eq.s32.totalorder %s40, 1
      %p236 = por %p234, %p235
      %p237 = scmp.ne.s32.totalorder %s228, %s229
      %p238 = scmp.eq.s32.totalorder %s40, 0
      %p239 = por %p237, %p238
      %p240 = scmp.ne.s32.totalorder %s228, %s229
      %p241 = scmp.eq.s32.totalorder %s41, 1
      %p242 = por %p240, %p241
      %p244 = scmp.ne.s32.totalorder %s229, %s243
      %p245 = scmp.eq.s32.totalorder %s41, 0
      %p246 = por %p244, %p245
      %s248 = sadd.s32 %s247, 1
      %p251 = scmp.eq.s32.totalorder %s35, 1
      %p252 = scmp.ne.s32.totalorder %s247, %s249
      %p253 = scmp.eq.s32.totalorder %s35, 0
      %p254 = por %p252, %p253
      %p255 = scmp.ne.s32.totalorder %s247, %s249
      %p256 = scmp.eq.s32.totalorder %s40, 1
      %p257 = por %p255, %p256
      %p258 = scmp.ne.s32.totalorder %s249, %s250
      %p259 = scmp.eq.s32.totalorder %s40, 0
      %p260 = por %p258, %p259
      %p261 = scmp.ne.s32.totalorder %s249, %s250
      %p262 = scmp.eq.s32.totalorder %s41, 1
      %p263 = por %p261, %p262
      %p265 = scmp.ne.s32.totalorder %s250, %s264
      %p266 = scmp.eq.s32.totalorder %s41, 0
      %p267 = por %p265, %p266
      %s269 = sadd.s32 %s268, 1
      %p272 = scmp.eq.s32.totalorder %s35, 1
      %p273 = scmp.ne.s32.totalorder %s268, %s270
      %p274 = scmp.eq.s32.totalorder %s35, 0
      %p275 = por %p273, %p274
      %p276 = scmp.ne.s32.totalorder %s268, %s270
      %p277 = scmp.eq.s32.totalorder %s40, 1
      %p278 = por %p276, %p277
      %p279 = scmp.ne.s32.totalorder %s270, %s271
      %p280 = scmp.eq.s32.totalorder %s40, 0
      %p281 = por %p279, %p280
      %p282 = scmp.ne.s32.totalorder %s270, %s271
      %p283 = scmp.eq.s32.totalorder %s41, 1
      %p284 = por %p282, %p283
      %p286 = scmp.ne.s32.totalorder %s271, %s285
      %p287 = scmp.eq.s32.totalorder %s41, 0
      %p288 = por %p286, %p287
      %s290 = sadd.s32 %s289, 1
      %p293 = scmp.eq.s32.totalorder %s35, 1
      %p294 = scmp.ne.s32.totalorder %s289, %s291
      %p295 = scmp.eq.s32.totalorder %s35, 0
      %p296 = por %p294, %p295
      %p297 = scmp.ne.s32.totalorder %s289, %s291
      %p298 = scmp.eq.s32.totalorder %s40, 1
      %p299 = por %p297, %p298
      %p300 = scmp.ne.s32.totalorder %s291, %s292
      %p301 = scmp.eq.s32.totalorder %s40, 0
      %p302 = por %p300, %p301
      %p303 = scmp.ne.s32.totalorder %s291, %s292
      %p304 = scmp.eq.s32.totalorder %s41, 1
      %p305 = por %p303, %p304
      %p307 = scmp.ne.s32.totalorder %s292, %s306
      %p308 = scmp.eq.s32.totalorder %s41, 0
      %p309 = por %p307, %p308
      %s311 = sadd.s32 %s310, 1
      %p314 = scmp.eq.s32.totalorder %s35, 1
      %p315 = scmp.ne.s32.totalorder %s310, %s312
      %p316 = scmp.eq.s32.totalorder %s35, 0
      %p317 = por %p315, %p316
      %p318 = scmp.ne.s32.totalorder %s310, %s312
      %p319 = scmp.eq.s32.totalorder %s40, 1
      %p320 = por %p318, %p319
      %p321 = scmp.ne.s32.totalorder %s312, %s313
      %p322 = scmp.eq.s32.totalorder %s40, 0
      %p323 = por %p321, %p322
      %p324 = scmp.ne.s32.totalorder %s312, %s313
      %p325 = scmp.eq.s32.totalorder %s41, 1
      %p326 = por %p324, %p325
      %p328 = scmp.ne.s32.totalorder %s313, %s327
      %p329 = scmp.eq.s32.totalorder %s41, 0
      %p330 = por %p328, %p329
      %s332 = sadd.s32 %s331, 1
      %p335 = scmp.eq.s32.totalorder %s35, 1
      %p336 = scmp.ne.s32.totalorder %s331, %s333
      %p337 = scmp.eq.s32.totalorder %s35, 0
      %p338 = por %p336, %p337
      %p339 = scmp.ne.s32.totalorder %s331, %s333
      %p340 = scmp.eq.s32.totalorder %s40, 1
      %p341 = por %p339, %p340
      %p342 = scmp.ne.s32.totalorder %s333, %s334
      %p343 = scmp.eq.s32.totalorder %s40, 0
      %p344 = por %p342, %p343
      %p345 = scmp.ne.s32.totalorder %s333, %s334
      %p346 = scmp.eq.s32.totalorder %s41, 1
      %p347 = por %p345, %p346
      %p349 = scmp.ne.s32.totalorder %s334, %s348
      %p350 = scmp.eq.s32.totalorder %s41, 0
      %p351 = por %p349, %p350
      %s353 = sadd.s32 %s352, 1
      %p356 = scmp.eq.s32.totalorder %s35, 1
      %p357 = scmp.ne.s32.totalorder %s352, %s354
      %p358 = scmp.eq.s32.totalorder %s35, 0
      %p359 = por %p357, %p358
      %p360 = scmp.ne.s32.totalorder %s352, %s354
      %p361 = scmp.eq.s32.totalorder %s40, 1
      %p362 = por %p360, %p361
      %p363 = scmp.ne.s32.totalorder %s354, %s355
      %p364 = scmp.eq.s32.totalorder %s40, 0
      %p365 = por %p363, %p364
      %p366 = scmp.ne.s32.totalorder %s354, %s355
      %p367 = scmp.eq.s32.totalorder %s41, 1
      %p368 = por %p366, %p367
      %p370 = scmp.ne.s32.totalorder %s355, %s369
      %p371 = scmp.eq.s32.totalorder %s41, 0
      %p372 = por %p370, %p371
      %s374 = sadd.s32 %s373, 1
      %p377 = scmp.eq.s32.totalorder %s35, 1
      %p378 = scmp.ne.s32.totalorder %s373, %s375
      %p379 = scmp.eq.s32.totalorder %s35, 0
      %p380 = por %p378, %p379
      %p381 = scmp.ne.s32.totalorder %s373, %s375
      %p382 = scmp.eq.s32.totalorder %s40, 1
      %p383 = por %p381, %p382
      %p384 = scmp.ne.s32.totalorder %s375, %s376
      %p385 = scmp.eq.s32.totalorder %s40, 0
      %p386 = por %p384, %p385
      %p387 = scmp.ne.s32.totalorder %s375, %s376
      %p388 = scmp.eq.s32.totalorder %s41, 1
      %p389 = por %p387, %p388
      %p391 = scmp.ne.s32.totalorder %s376, %s390
      %p392 = scmp.eq.s32.totalorder %s41, 0
      %p393 = por %p391, %p392
      %s395 = sadd.s32 %s394, 1
      %p398 = scmp.eq.s32.totalorder %s35, 1
      %p399 = scmp.ne.s32.totalorder %s394, %s396
      %p400 = scmp.eq.s32.totalorder %s35, 0
      %p401 = por %p399, %p400
      %p402 = scmp.ne.s32.totalorder %s394, %s396
      %p403 = scmp.eq.s32.totalorder %s40, 1
      %p404 = por %p402, %p403
      %p405 = scmp.ne.s32.totalorder %s396, %s397
      %p406 = scmp.eq.s32.totalorder %s40, 0
      %p407 = por %p405, %p406
      %p408 = scmp.ne.s32.totalorder %s396, %s397
      %p409 = scmp.eq.s32.totalorder %s41, 1
      %p410 = por %p408, %p409
      %p412 = scmp.ne.s32.totalorder %s397, %s411
      %p413 = scmp.eq.s32.totalorder %s41, 0
      %p414 = por %p412, %p413
      %s415 = ssub.s32 %s35, %s42
      %p416 = scmp.eq.s32.totalorder %s415, 0
      %s418 = sadd.s32 %s417, 1
      %s419 = scalar_select %p416, %s417, %s418
      %p422 = pneg %p416
      %p423 = scmp.eq.s32.totalorder %s35, 1
      %p424 = por %p422, %p423
      %p425 = scmp.ne.s32.totalorder %s417, %s420
      %p426 = scmp.eq.s32.totalorder %s35, 0
      %p427 = por %p425, %p426
      %p428 = scmp.ne.s32.totalorder %s417, %s420
      %p429 = scmp.eq.s32.totalorder %s40, 1
      %p430 = por %p428, %p429
      %p431 = scmp.ne.s32.totalorder %s420, %s421
      %p432 = scmp.eq.s32.totalorder %s40, 0
      %p433 = por %p431, %p432
      %p434 = scmp.ne.s32.totalorder %s420, %s421
      %p435 = scmp.eq.s32.totalorder %s41, 1
      %p436 = por %p434, %p435
      %p438 = scmp.ne.s32.totalorder %s421, %s437
      %p439 = scmp.eq.s32.totalorder %s41, 0
      %p440 = por %p438, %p439
      %s441 = ssub.s32 %s35, %s42
      %p442 = scmp.eq.s32.totalorder %s441, 0
      %s444 = sadd.s32 %s443, 1
      %s445 = scalar_select %p442, %s443, %s444
      %p448 = pneg %p442
      %p449 = scmp.eq.s32.totalorder %s35, 1
      %p450 = por %p448, %p449
      %p451 = scmp.ne.s32.totalorder %s443, %s446
      %p452 = scmp.eq.s32.totalorder %s35, 0
      %p453 = por %p451, %p452
      %p454 = scmp.ne.s32.totalorder %s443, %s446
      %p455 = scmp.eq.s32.totalorder %s40, 1
      %p456 = por %p454, %p455
      %p457 = scmp.ne.s32.totalorder %s446, %s447
      %p458 = scmp.eq.s32.totalorder %s40, 0
      %p459 = por %p457, %p458
      %p460 = scmp.ne.s32.totalorder %s446, %s447
      %p461 = scmp.eq.s32.totalorder %s41, 1
      %p462 = por %p460, %p461
      %p464 = scmp.ne.s32.totalorder %s447, %s463
      %p465 = scmp.eq.s32.totalorder %s41, 0
      %p466 = por %p464, %p465
      %p467 = scmp.le.s32.totalorder 1, %s35
      %p468 = scmp.lt.s32.totalorder %s35, 3
      %p469 = pnand %p467, %p468
      %p470 = pneg %p469
      // Predicated region
      $region9: #{tpu_custom_call.1} parent=5 // pred_check
        _
      $region10: #{tpu_custom_call.1} parent=5 // pred_check_branch
        %472 = sbr.rel (%p469) target = $region12
      $region11: #{tpu_custom_call.1} parent=5 // pred_region
        %s473 = ssub.s32 %s35, 1
        // Predicated region
        $region13: #{tpu_custom_call.1} parent=11 // pred_check
          %p474 = pneg %p134
        $region14: #{tpu_custom_call.1} parent=11 // pred_check_branch
          %476 = sbr.rel (%p474) target = $region16
        $region15: #{tpu_custom_call.1} parent=11 // pred_region
          _
        $region16: #{tpu_custom_call.1} parent=11 // pred_fallthru
          _
        // Predicated region
        $region17: #{tpu_custom_call.1} parent=11 // pred_check
          %p477 = pneg %p155
        $region18: #{tpu_custom_call.1} parent=11 // pred_check_branch
          %479 = sbr.rel (%p477) target = $region20
        $region19: #{tpu_custom_call.1} parent=11 // pred_region
          _
        $region20: #{tpu_custom_call.1} parent=11 // pred_fallthru
          _
        // Predicated region
        $region21: #{tpu_custom_call.1} parent=11 // pred_check
          %p480 = pneg %p176
        $region22: #{tpu_custom_call.1} parent=11 // pred_check_branch
          %482 = sbr.rel (%p480) target = $region24
        $region23: #{tpu_custom_call.1} parent=11 // pred_region
          _
        $region24: #{tpu_custom_call.1} parent=11 // pred_fallthru
          _
        // Predicated region
        $region25: #{tpu_custom_call.1} parent=11 // pred_check
          %p483 = pneg %p197
        $region26: #{tpu_custom_call.1} parent=11 // pred_check_branch
          %485 = sbr.rel (%p483) target = $region28
        $region27: #{tpu_custom_call.1} parent=11 // pred_region
          _
        $region28: #{tpu_custom_call.1} parent=11 // pred_fallthru
          _
        // Predicated region
        $region29: #{tpu_custom_call.1} parent=11 // pred_check
          %p486 = pneg %p218
        $region30: #{tpu_custom_call.1} parent=11 // pred_check_branch
          %488 = sbr.rel (%p486) target = $region32
        $region31: #{tpu_custom_call.1} parent=11 // pred_region
          _
        $region32: #{tpu_custom_call.1} parent=11 // pred_fallthru
          _
        // Predicated region
        $region33: #{tpu_custom_call.1} parent=11 // pred_check
          %p489 = pneg %p239
        $region34: #{tpu_custom_call.1} parent=11 // pred_check_branch
          %491 = sbr.rel (%p489) target = $region36
        $region35: #{tpu_custom_call.1} parent=11 // pred_region
          _
        $region36: #{tpu_custom_call.1} parent=11 // pred_fallthru
          _
        // Predicated region
        $region37: #{tpu_custom_call.1} parent=11 // pred_check
          %p492 = pneg %p260
        $region38: #{tpu_custom_call.1} parent=11 // pred_check_branch
          %494 = sbr.rel (%p492) target = $region40
        $region39: #{tpu_custom_call.1} parent=11 // pred_region
          _
        $region40: #{tpu_custom_call.1} parent=11 // pred_fallthru
          _
        // Predicated region
        $region41: #{tpu_custom_call.1} parent=11 // pred_check
          %p495 = pneg %p281
        $region42: #{tpu_custom_call.1} parent=11 // pred_check_branch
          %497 = sbr.rel (%p495) target = $region44
        $region43: #{tpu_custom_call.1} parent=11 // pred_region
          _
        $region44: #{tpu_custom_call.1} parent=11 // pred_fallthru
          _
        // Predicated region
        $region45: #{tpu_custom_call.1} parent=11 // pred_check
          %p498 = pneg %p302
        $region46: #{tpu_custom_call.1} parent=11 // pred_check_branch
          %500 = sbr.rel (%p498) target = $region48
        $region47: #{tpu_custom_call.1} parent=11 // pred_region
          %502 = vsyncadd [#allocation9], 0
          %s503 = sshll.u32 %s11, 4
          %s504 = int_to_ptr.hbm [resolvable:$true] %s503
          %s505 = sshll.u32 [#allocation8], 4
          %s506 = int_to_ptr.vmem [resolvable:$true] %s505
          %511 = dma.hbm_to_vmem [thread:$0]  %s504, 512, %s506, [#allocation9], 128, 128, 8
        $region48: #{tpu_custom_call.1} parent=11 // pred_fallthru
          _
        // Predicated region
        $region49: #{tpu_custom_call.1} parent=11 // pred_check
          %p512 = pneg %p323
        $region50: #{tpu_custom_call.1} parent=11 // pred_check_branch
          %514 = sbr.rel (%p512) target = $region52
        $region51: #{tpu_custom_call.1} parent=11 // pred_region
          _
        $region52: #{tpu_custom_call.1} parent=11 // pred_fallthru
          _
        // Predicated region
        $region53: #{tpu_custom_call.1} parent=11 // pred_check
          %p515 = pneg %p344
        $region54: #{tpu_custom_call.1} parent=11 // pred_check_branch
          %517 = sbr.rel (%p515) target = $region56
        $region55: #{tpu_custom_call.1} parent=11 // pred_region
          _
        $region56: #{tpu_custom_call.1} parent=11 // pred_fallthru
          _
        // Predicated region
        $region57: #{tpu_custom_call.1} parent=11 // pred_check
          %p518 = pneg %p365
        $region58: #{tpu_custom_call.1} parent=11 // pred_check_branch
          %520 = sbr.rel (%p518) target = $region60
        $region59: #{tpu_custom_call.1} parent=11 // pred_region
          _
        $region60: #{tpu_custom_call.1} parent=11 // pred_fallthru
          _
        // Predicated region
        $region61: #{tpu_custom_call.1} parent=11 // pred_check
          %p521 = pneg %p386
        $region62: #{tpu_custom_call.1} parent=11 // pred_check_branch
          %523 = sbr.rel (%p521) target = $region64
        $region63: #{tpu_custom_call.1} parent=11 // pred_region
          _
        $region64: #{tpu_custom_call.1} parent=11 // pred_fallthru
          _
        // Predicated region
        $region65: #{tpu_custom_call.1} parent=11 // pred_check
          %p524 = pneg %p407
        $region66: #{tpu_custom_call.1} parent=11 // pred_check_branch
          %526 = sbr.rel (%p524) target = $region68
        $region67: #{tpu_custom_call.1} parent=11 // pred_region
          _
        $region68: #{tpu_custom_call.1} parent=11 // pred_fallthru
          _
      $region12: #{tpu_custom_call.1} parent=5 // pred_fallthru
        _
      %p527 = scmp.lt.s32.totalorder %s35, 2
      // Predicated region
      $region69: #{tpu_custom_call.1} parent=5 // pred_check
        %p528 = pneg %p527
      $region70: #{tpu_custom_call.1} parent=5 // pred_check_branch
        %530 = sbr.rel (%p528) target = $region72
      $region71: #{tpu_custom_call.1} parent=5 // pred_region
        // Predicated region
        $region73: #{tpu_custom_call.1} parent=71 // pred_check
          %p531 = pneg %p55
        $region74: #{tpu_custom_call.1} parent=71 // pred_check_branch
          %533 = sbr.rel (%p531) target = $region76
        $region75: #{tpu_custom_call.1} parent=71 // pred_region
          %s534 = sand.u32 %s45, 1
          %s535 = scalar_lea.sflag [#allocation3], %s534
          %s536 = sand.u32 %s45, 1
          %s537 = smul.addr %s536, 8
          %s538 = scalar_lea.vmem [#allocation2], %s537
          %540 = vsyncadd %s535, 0
          %s541 = smul.addr %s35, 8
          %s542 = scalar_lea.hbm %s0, %s541
          %s544 = sshll.u32 %s542, 4
          %s545 = int_to_ptr.hbm [resolvable:$true] %s544
          %s546 = sshll.u32 %s538, 4
          %s547 = int_to_ptr.vmem [resolvable:$true] %s546
          %549 = dma.hbm_to_vmem [thread:$0]  %s545, 128, %s547, %s535
        $region76: #{tpu_custom_call.1} parent=71 // pred_fallthru
          _
        // Predicated region
        $region77: #{tpu_custom_call.1} parent=71 // pred_check
          %p550 = pneg %p81
        $region78: #{tpu_custom_call.1} parent=71 // pred_check_branch
          %552 = sbr.rel (%p550) target = $region80
        $region79: #{tpu_custom_call.1} parent=71 // pred_region
          %s553 = sand.u32 %s35, 1
          %s554 = scalar_lea.sflag [#allocation6], %s553
          %s555 = sand.u32 %s71, 1
          %s556 = smul.addr %s555, 8
          %s557 = scalar_lea.vmem [#allocation5], %s556
          %559 = vsyncadd %s554, 0
          %s560 = smul.addr %s35, 8
          %s561 = scalar_lea.hbm %s1, %s560
          %s563 = sshll.u32 %s561, 4
          %s564 = int_to_ptr.hbm [resolvable:$true] %s563
          %s565 = sshll.u32 %s557, 4
          %s566 = int_to_ptr.vmem [resolvable:$true] %s565
          %568 = dma.hbm_to_vmem [thread:$0]  %s564, 128, %s566, %s554
        $region80: #{tpu_custom_call.1} parent=71 // pred_fallthru
          _
        // Predicated region
        $region81: #{tpu_custom_call.1} parent=71 // pred_check
          %p569 = pneg %p107
        $region82: #{tpu_custom_call.1} parent=71 // pred_check_branch
          %571 = sbr.rel (%p569) target = $region84
        $region83: #{tpu_custom_call.1} parent=71 // pred_region
          %s572 = sand.u32 %s35, 1
          %s573 = scalar_lea.sflag [#allocation6], %s572
          %s574 = sand.u32 %s97, 1
          %s575 = smul.addr %s574, 8
          %s576 = scalar_lea.vmem [#allocation7], %s575
          %578 = vsyncadd %s573, 0
          %s579 = smul.addr %s35, 8
          %s580 = scalar_lea.hbm %s2, %s579
          %s582 = sshll.u32 %s580, 4
          %s583 = int_to_ptr.hbm [resolvable:$true] %s582
          %s584 = sshll.u32 %s576, 4
          %s585 = int_to_ptr.vmem [resolvable:$true] %s584
          %587 = dma.hbm_to_vmem [thread:$0]  %s583, 128, %s585, %s573
        $region84: #{tpu_custom_call.1} parent=71 // pred_fallthru
          _
      $region72: #{tpu_custom_call.1} parent=5 // pred_fallthru
        _
      %p588 = scmp.le.s32.totalorder 1, %s35
      %p589 = scmp.lt.s32.totalorder %s35, 3
      %p590 = pnand %p588, %p589
      %p591 = pneg %p590
      // Predicated region
      $region85: #{tpu_custom_call.1} parent=5 // pred_check
        _
      $region86: #{tpu_custom_call.1} parent=5 // pred_check_branch
        %593 = sbr.rel (%p590) target = $region88
      $region87: #{tpu_custom_call.1} parent=5 // pred_region
        %s594 = ssub.s32 %s35, 1
        %s595 = sand.u32 %s48, 1
        %s596 = scalar_lea.sflag [#allocation3], %s595
        %s597 = sand.u32 %s48, 1
        %s598 = smul.addr %s597, 8
        %s599 = scalar_lea.vmem [#allocation2], %s598
        // Predicated region
        $region89: #{tpu_custom_call.1} parent=87 // pred_check
          %p600 = pneg %p61
        $region90: #{tpu_custom_call.1} parent=87 // pred_check_branch
          %602 = sbr.rel (%p600) target = $region92
        $region91: #{tpu_custom_call.1} parent=87 // pred_region
          %604 = dma.done %s596, 128
        $region92: #{tpu_custom_call.1} parent=87 // pred_fallthru
          _
        %s605 = sand.u32 %s40, 1
        %s606 = scalar_lea.sflag [#allocation6], %s605
        %s607 = sand.u32 %s74, 1
        %s608 = smul.addr %s607, 8
        %s609 = scalar_lea.vmem [#allocation5], %s608
        // Predicated region
        $region93: #{tpu_custom_call.1} parent=87 // pred_check
          %p610 = pneg %p87
        $region94: #{tpu_custom_call.1} parent=87 // pred_check_branch
          %612 = sbr.rel (%p610) target = $region96
        $region95: #{tpu_custom_call.1} parent=87 // pred_region
          %614 = dma.done %s606, 128
        $region96: #{tpu_custom_call.1} parent=87 // pred_fallthru
          _
        %s615 = sand.u32 %s40, 1
        %s616 = scalar_lea.sflag [#allocation6], %s615
        %s617 = sand.u32 %s100, 1
        %s618 = smul.addr %s617, 8
        %s619 = scalar_lea.vmem [#allocation7], %s618
        // Predicated region
        $region97: #{tpu_custom_call.1} parent=87 // pred_check
          %p620 = pneg %p113
        $region98: #{tpu_custom_call.1} parent=87 // pred_check_branch
          %622 = sbr.rel (%p620) target = $region100
        $region99: #{tpu_custom_call.1} parent=87 // pred_region
          %624 = dma.done %s616, 128
        $region100: #{tpu_custom_call.1} parent=87 // pred_fallthru
          _
        // Predicated region
        $region101: #{tpu_custom_call.1} parent=87 // pred_check
          %p625 = pneg %p302
        $region102: #{tpu_custom_call.1} parent=87 // pred_check_branch
          %627 = sbr.rel (%p625) target = $region104
        $region103: #{tpu_custom_call.1} parent=87 // pred_region
          %629 = dma.done [#allocation9], 512
        $region104: #{tpu_custom_call.1} parent=87 // pred_fallthru
          _
        %s630 = sand.u32 %s48, 1
        %s631 = scalar_lea.sflag [#allocation3], %s630
        %s632 = sand.u32 %s48, 1
        %s633 = smul.addr %s632, 8
        %s634 = scalar_lea.vmem [#allocation2], %s633
        %p635 = pneg %p61
        %p636 = pneg %p58
        %s637 = sand.u32 %s40, 1
        %s638 = scalar_lea.sflag [#allocation6], %s637
        %s639 = sand.u32 %s74, 1
        %s640 = smul.addr %s639, 8
        %s641 = scalar_lea.vmem [#allocation5], %s640
        %p642 = pneg %p87
        %p643 = pneg %p84
        %s644 = sand.u32 %s40, 1
        %s645 = scalar_lea.sflag [#allocation6], %s644
        %s646 = sand.u32 %s100, 1
        %s647 = smul.addr %s646, 8
        %s648 = scalar_lea.vmem [#allocation7], %s647
        %p649 = pneg %p113
        %p650 = pneg %p110
        %p651 = pneg %p134
        %p652 = pneg %p131
        %p653 = pneg %p155
        %p654 = pneg %p152
        %p655 = pneg %p176
        %p656 = pneg %p173
        %p657 = pneg %p197
        %p658 = pneg %p194
        %p659 = pneg %p218
        %p660 = pneg %p215
        %p661 = pneg %p239
        %p662 = pneg %p236
        %p663 = pneg %p260
        %p664 = pneg %p257
        %p665 = pneg %p281
        %p666 = pneg %p278
        %p667 = pneg %p302
        %p668 = pneg %p299
        %p669 = pneg %p323
        %p670 = pneg %p320
        %p671 = pneg %p344
        %p672 = pneg %p341
        %p673 = pneg %p365
        %p674 = pneg %p362
        %p675 = pneg %p386
        %p676 = pneg %p383
        %p677 = pneg %p407
        %p678 = pneg %p404
        %p679 = pneg %p433
        %p680 = pneg %p430
        %s681 = sand.u32 %s420, 1
        %s682 = scalar_lea.sflag [#allocation4], %s681
        %s683 = sand.u32 %s420, 1
        %s684 = smul.addr %s683, 8
        %s685 = scalar_lea.vmem [#allocation10], %s684
        %p686 = pneg %p459
        %p687 = pneg %p456
        %p688 = scmp.lt.s32.totalorder %s40, 1
        %s689 = scalar_select %p688, %s40, 1
        %s690 = smul.addr %s689, 4
        %s691 = smul.addr %s690, 8
        %s692 = scalar_lea.vmem %s18, %s691
        %p693 = scmp.lt.s32.totalorder %s40, 1
        %s694 = scalar_select %p693, %s40, 1
        %s695 = smul.addr %s694, 4
        %s696 = smul.addr %s695, 8
        %s697 = scalar_lea.vmem %s18, %s696
        %v698 = vld [vmem:[%s599] sm:$0xff]
        %v699 = vld [vmem:[%s609] sm:$0xff]
        %v700 = vld [vmem:[%s619] sm:$0xff]
        %v701 = vld [vmem:[%s4] sm:$0x1]
        %v702 = vld [vmem:[%s6] sm:$0x1]
        %v703 = vld [vmem:[%s8] sm:$0x1]
        %v704 = vld [vmem:[%s3] sm:$0xff]
        %v705 = vld [vmem:[%s3 + $0x8] sm:$0xff]
        %v706 = vld [vmem:[%s3 + $0x10] sm:$0xff]
        %v707 = vld [vmem:[%s3 + $0x18] sm:$0xff]
        %v709 = vperm.slane %v701, 0
        %vm711 = vcmask 261120
        %v713 = vsel %vm711, %v699, 0
        %715 = vmatpush.msra.mxu0 0.0
        %716 = vmatpush.msra.mxu0 0.0
        %717 = vmatpush.msra.mxu0 0.0
        %718 = vmatpush.msra.mxu0 0.0
        %719 = vmatpush.msra.mxu0 0.0
        %720 = vmatpush.msra.mxu0 0.0
        %721 = vmatpush.msra.mxu0 0.0
        %722 = vmatpush.msra.mxu0 0.0
        %723 = vmatpush.msra.mxu0 0.0
        %724 = vmatpush.msra.mxu0 0.0
        %725 = vmatpush.msra.mxu0 0.0
        %726 = vmatpush.msra.mxu0 0.0
        %727 = vmatpush.msra.mxu0 %v707
        %728 = vmatpush.msra.mxu0 %v706
        %729 = vmatpush.msra.mxu0 %v705
        %730 = vmatpush.msra.mxu0 %v704
        %731 = vmatmul.f32.gmra.mxu0 %v713
        %v732 = vpop.f32.mrf.mxu0
        %v733 = vadd.f32 %v709, %v732
        %734 = vdwg.mxu0
        %v736 = vsel %vm711, %v698, 0
        %738 = vmatpush.msra.mxu0 0.0
        %739 = vmatpush.msra.mxu0 0.0
        %740 = vmatpush.msra.mxu0 0.0
        %741 = vmatpush.msra.mxu0 0.0
        %742 = vmatpush.msra.mxu0 0.0
        %743 = vmatpush.msra.mxu0 0.0
        %744 = vmatpush.msra.mxu0 0.0
        %745 = vmatpush.msra.mxu0 0.0
        %746 = vmatpush.msra.mxu0 0.0
        %747 = vmatpush.msra.mxu0 0.0
        %748 = vmatpush.msra.mxu0 0.0
        %749 = vmatpush.msra.mxu0 0.0
        %750 = vmatpush.msra.mxu0 %v707
        %751 = vmatpush.msra.mxu0 %v706
        %752 = vmatpush.msra.mxu0 %v705
        %753 = vmatpush.msra.mxu0 %v704
        %754 = vmatmul.f32.gmra.mxu0 %v736
        %v755 = vpop.f32.mrf.mxu0
        %v756 = vadd.f32 %v709, %v755
        %757 = vdwg.mxu0
        %v758 = vmul.f32 %v756, 0.35355338
        %v759 = vld [vmem:[%s5] sm:$0xff]
        %v760 = vld [vmem:[%s5 + $0x8] sm:$0xff]
        %v761 = vld [vmem:[%s5 + $0x10] sm:$0xff]
        %v762 = vld [vmem:[%s5 + $0x18] sm:$0xff]
        %v764 = vperm.slane %v702, 0
        %v767 = vsel %vm711, %v700, 0
        %769 = vmatpush.msra.mxu0 0.0
        %770 = vmatpush.msra.mxu0 0.0
        %771 = vmatpush.msra.mxu0 0.0
        %772 = vmatpush.msra.mxu0 0.0
        %773 = vmatpush.msra.mxu0 0.0
        %774 = vmatpush.msra.mxu0 0.0
        %775 = vmatpush.msra.mxu0 0.0
        %776 = vmatpush.msra.mxu0 0.0
        %777 = vmatpush.msra.mxu0 0.0
        %778 = vmatpush.msra.mxu0 0.0
        %779 = vmatpush.msra.mxu0 0.0
        %780 = vmatpush.msra.mxu0 0.0
        %781 = vmatpush.msra.mxu0 %v762
        %782 = vmatpush.msra.mxu0 %v761
        %783 = vmatpush.msra.mxu0 %v760
        %784 = vmatpush.msra.mxu0 %v759
        %785 = vmatmul.f32.gmra.mxu0 %v767
        %v786 = vpop.f32.mrf.mxu0
        %v787 = vadd.f32 %v764, %v786
        %788 = vdwg.mxu0
        %v789 = vlaneseq
        %v790 = vshrl.u32 %v789, 7
        %v791 = vlaneseq
        %v792 = vand.u32 %v791, 127
        %v793 = vsub.s32 %v792, %v790
        %vm794 = vcmp.lt.s32.totalorder %v793, 0
        %vm795 = vcmask 64512
        %v797 = vsel %vm795, %v758, 0
        %v800 = vsel %vm795, %v733, 0
        %802 = vmatpush.xpose.msra.mxu0 0.0
        %803 = vmatpush.xpose.msra.mxu0 0.0
        %804 = vmatpush.xpose.msra.mxu0 0.0
        %805 = vmatpush.xpose.msra.mxu0 0.0
        %806 = vmatpush.xpose.msra.mxu0 0.0
        %807 = vmatpush.xpose.msra.mxu0 0.0
        %808 = vmatpush.xpose.msra.mxu0 0.0
        %809 = vmatpush.xpose.msra.mxu0 0.0
        %810 = vmatpush.xpose.msra.mxu0 0.0
        %811 = vmatpush.xpose.msra.mxu0 0.0
        %812 = vmatpush.xpose.msra.mxu0 0.0
        %813 = vmatpush.xpose.msra.mxu0 0.0
        %814 = vmatpush.xpose.msra.mxu0 0.0
        %815 = vmatpush.xpose.msra.mxu0 0.0
        %816 = vmatpush.xpose.msra.mxu0 0.0
        %817 = vmatpush.xpose.msra.mxu0 %v800
        %818 = vmatmul.f32.gmra.mxu0 %v797
        %v819 = vpop.f32.mrf.mxu0
        %v820 = vadd.f32 0.0, %v819
        %821 = vdwg.mxu0
        %v822 = vsel %vm794, %v820, -1e+32
        %v823 = vsel %vm795, %v822, -inf
        %824 = vmax.xlane.f32.xlu0 %v823
        %v825 = vpop.xlane.xlu0 %824
        %v826 = vsub.f32 %v822, %v825
        %v827 = vmul.f32 %v826, 1.442695
        %v828 = vpow.pop %v827
        %v829 = vsel %vm795, %v828, 0.0
        %830 = vadd.xlane.f32.xlu0 %v829
        %v831 = vpop.xlane.xlu0 %830
        %v832 = vrcp.pop %v831
        %v833 = vmul.f32 %v831, %v832
        %v834 = vsub.f32 1.0, %v833
        %v835 = vmul.f32 %v832, %v834
        %v836 = vadd.f32 %v832, %v835
        %vm837 = vweird.f32 %v831
        %vm838 = vweird.f32 %v832
        %vm839 = vmor %vm837, %vm838
        %v840 = vsel %vm839, %v832, %v836
        %v841 = vand.u32 2147483647, %v831
        %vm842 = vcmp.eq.f32.partialorder %v841, 8.507059e+37
        %v843 = vand.u32 %v831, 2147483648
        %v844 = vor.u32 1.1754944e-38, %v843
        %v845 = vsel %vm842, %v844, %v840
        %v846 = vmul.f32 1.0, %v845
        %v847 = vmul.f32 %v828, %v846
        %848 = vst.msk [vmem:[%s697] sm:$0xff] %vm795, %v847
        %v850 = vsel %vm795, %v847, 0
        %852 = vmatpush.msra.mxu0 0.0
        %853 = vmatpush.msra.mxu0 0.0
        %854 = vmatpush.msra.mxu0 0.0
        %855 = vmatpush.msra.mxu0 0.0
        %856 = vmatpush.msra.mxu0 0.0
        %857 = vmatpush.msra.mxu0 0.0
        %858 = vmatpush.msra.mxu0 0.0
        %859 = vmatpush.msra.mxu0 0.0
        %860 = vmatpush.msra.mxu0 0.0
        %861 = vmatpush.msra.mxu0 0.0
        %862 = vmatpush.msra.mxu0 0.0
        %863 = vmatpush.msra.mxu0 0.0
        %864 = vmatpush.msra.mxu0 0.0
        %865 = vmatpush.msra.mxu0 0.0
        %866 = vmatpush.msra.mxu0 0.0
        %867 = vmatpush.msra.mxu0 %v787
        %868 = vmatmul.f32.gmra.mxu0 %v850
        %v869 = vpop.f32.mrf.mxu0
        %v870 = vadd.f32 0.0, %v869
        %871 = vdwg.mxu0
        %872 = vrot.lane.b32.xlu0 %v758, 120
        %v873 = vpop.permute.xlu0 %872
        %874 = vrot.lane.b32.xlu0 %v733, 120
        %v875 = vpop.permute.xlu0 %874
        %v876 = vsel %vm795, %v873, 0
        %v878 = vsel %vm795, %v875, 0
        %880 = vmatpush.xpose.msra.mxu0 0.0
        %881 = vmatpush.xpose.msra.mxu0 0.0
        %882 = vmatpush.xpose.msra.mxu0 0.0
        %883 = vmatpush.xpose.msra.mxu0 0.0
        %884 = vmatpush.xpose.msra.mxu0 0.0
        %885 = vmatpush.xpose.msra.mxu0 0.0
        %886 = vmatpush.xpose.msra.mxu0 0.0
        %887 = vmatpush.xpose.msra.mxu0 0.0
        %888 = vmatpush.xpose.msra.mxu0 0.0
        %889 = vmatpush.xpose.msra.mxu0 0.0
        %890 = vmatpush.xpose.msra.mxu0 0.0
        %891 = vmatpush.xpose.msra.mxu0 0.0
        %892 = vmatpush.xpose.msra.mxu0 0.0
        %893 = vmatpush.xpose.msra.mxu0 0.0
        %894 = vmatpush.xpose.msra.mxu0 0.0
        %895 = vmatpush.xpose.msra.mxu0 %v878
        %896 = vmatmul.f32.gmra.mxu0 %v876
        %v897 = vpop.f32.mrf.mxu0
        %v898 = vadd.f32 0.0, %v897
        %899 = vdwg.mxu0
        %v900 = vsel %vm794, %v898, -1e+32
        %v901 = vsel %vm795, %v900, -inf
        %902 = vmax.xlane.f32.xlu0 %v901
        %v903 = vpop.xlane.xlu0 %902
        %v904 = vsub.f32 %v900, %v903
        %v905 = vmul.f32 %v904, 1.442695
        %v906 = vpow.pop %v905
        %v907 = vsel %vm795, %v906, 0.0
        %908 = vadd.xlane.f32.xlu0 %v907
        %v909 = vpop.xlane.xlu0 %908
        %v910 = vrcp.pop %v909
        %v911 = vmul.f32 %v909, %v910
        %v912 = vsub.f32 1.0, %v911
        %v913 = vmul.f32 %v910, %v912
        %v914 = vadd.f32 %v910, %v913
        %vm915 = vweird.f32 %v909
        %vm916 = vweird.f32 %v910
        %vm917 = vmor %vm915, %vm916
        %v918 = vsel %vm917, %v910, %v914
        %v919 = vand.u32 2147483647, %v909
        %vm920 = vcmp.eq.f32.partialorder %v919, 8.507059e+37
        %v921 = vand.u32 %v909, 2147483648
        %v922 = vor.u32 1.1754944e-38, %v921
        %v923 = vsel %vm920, %v922, %v918
        %v924 = vmul.f32 1.0, %v923
        %v925 = vmul.f32 %v906, %v924
        %926 = vst.msk [vmem:[%s697 + $0x8] sm:$0xff] %vm795, %v925
        %928 = vrot.lane.b32.xlu0 %v787, 120
        %v929 = vpop.permute.xlu0 %928
        %v932 = vsel %vm795, %v925, 0
        %934 = vmatpush.msra.mxu0 0.0
        %935 = vmatpush.msra.mxu0 0.0
        %936 = vmatpush.msra.mxu0 0.0
        %937 = vmatpush.msra.mxu0 0.0
        %938 = vmatpush.msra.mxu0 0.0
        %939 = vmatpush.msra.mxu0 0.0
        %940 = vmatpush.msra.mxu0 0.0
        %941 = vmatpush.msra.mxu0 0.0
        %942 = vmatpush.msra.mxu0 0.0
        %943 = vmatpush.msra.mxu0 0.0
        %944 = vmatpush.msra.mxu0 0.0
        %945 = vmatpush.msra.mxu0 0.0
        %946 = vmatpush.msra.mxu0 0.0
        %947 = vmatpush.msra.mxu0 0.0
        %948 = vmatpush.msra.mxu0 0.0
        %949 = vmatpush.msra.mxu0 %v929
        %950 = vmatmul.f32.gmra.mxu0 %v932
        %v951 = vpop.f32.mrf.mxu0
        %v952 = vadd.f32 0.0, %v951
        %953 = vdwg.mxu0
        %954 = vrot.lane.b32.xlu0 %v758, 112
        %v955 = vpop.permute.xlu0 %954
        %956 = vrot.lane.b32.xlu0 %v733, 112
        %v957 = vpop.permute.xlu0 %956
        %v958 = vsel %vm795, %v955, 0
        %v960 = vsel %vm795, %v957, 0
        %962 = vmatpush.xpose.msra.mxu0 0.0
        %963 = vmatpush.xpose.msra.mxu0 0.0
        %964 = vmatpush.xpose.msra.mxu0 0.0
        %965 = vmatpush.xpose.msra.mxu0 0.0
        %966 = vmatpush.xpose.msra.mxu0 0.0
        %967 = vmatpush.xpose.msra.mxu0 0.0
        %968 = vmatpush.xpose.msra.mxu0 0.0
        %969 = vmatpush.xpose.msra.mxu0 0.0
        %970 = vmatpush.xpose.msra.mxu0 0.0
        %971 = vmatpush.xpose.msra.mxu0 0.0
        %972 = vmatpush.xpose.msra.mxu0 0.0
        %973 = vmatpush.xpose.msra.mxu0 0.0
        %974 = vmatpush.xpose.msra.mxu0 0.0
        %975 = vmatpush.xpose.msra.mxu0 0.0
        %976 = vmatpush.xpose.msra.mxu0 0.0
        %977 = vmatpush.xpose.msra.mxu0 %v960
        %978 = vmatmul.f32.gmra.mxu0 %v958
        %v979 = vpop.f32.mrf.mxu0
        %v980 = vadd.f32 0.0, %v979
        %981 = vdwg.mxu0
        %v982 = vsel %vm794, %v980, -1e+32
        %v983 = vsel %vm795, %v982, -inf
        %984 = vmax.xlane.f32.xlu0 %v983
        %v985 = vpop.xlane.xlu0 %984
        %v986 = vsub.f32 %v982, %v985
        %v987 = vmul.f32 %v986, 1.442695
        %v988 = vpow.pop %v987
        %v989 = vsel %vm795, %v988, 0.0
        %990 = vadd.xlane.f32.xlu0 %v989
        %v991 = vpop.xlane.xlu0 %990
        %v992 = vrcp.pop %v991
        %v993 = vmul.f32 %v991, %v992
        %v994 = vsub.f32 1.0, %v993
        %v995 = vmul.f32 %v992, %v994
        %v996 = vadd.f32 %v992, %v995
        %vm997 = vweird.f32 %v991
        %vm998 = vweird.f32 %v992
        %vm999 = vmor %vm997, %vm998
        %v1000 = vsel %vm999, %v992, %v996
        %v1001 = vand.u32 2147483647, %v991
        %vm1002 = vcmp.eq.f32.partialorder %v1001, 8.507059e+37
        %v1003 = vand.u32 %v991, 2147483648
        %v1004 = vor.u32 1.1754944e-38, %v1003
        %v1005 = vsel %vm1002, %v1004, %v1000
        %v1006 = vmul.f32 1.0, %v1005
        %v1007 = vmul.f32 %v988, %v1006
        %1008 = vst.msk [vmem:[%s697 + $0x10] sm:$0xff] %vm795, %v1007
        %1009 = vrot.lane.b32.xlu0 %v787, 112
        %v1010 = vpop.permute.xlu0 %1009
        %v1013 = vsel %vm795, %v1007, 0
        %1015 = vmatpush.msra.mxu0 0.0
        %1016 = vmatpush.msra.mxu0 0.0
        %1017 = vmatpush.msra.mxu0 0.0
        %1018 = vmatpush.msra.mxu0 0.0
        %1019 = vmatpush.msra.mxu0 0.0
        %1020 = vmatpush.msra.mxu0 0.0
        %1021 = vmatpush.msra.mxu0 0.0
        %1022 = vmatpush.msra.mxu0 0.0
        %1023 = vmatpush.msra.mxu0 0.0
        %1024 = vmatpush.msra.mxu0 0.0
        %1025 = vmatpush.msra.mxu0 0.0
        %1026 = vmatpush.msra.mxu0 0.0
        %1027 = vmatpush.msra.mxu0 0.0
        %1028 = vmatpush.msra.mxu0 0.0
        %1029 = vmatpush.msra.mxu0 0.0
        %1030 = vmatpush.msra.mxu0 %v1010
        %1031 = vmatmul.f32.gmra.mxu0 %v1013
        %v1032 = vpop.f32.mrf.mxu0
        %v1033 = vadd.f32 0.0, %v1032
        %1034 = vdwg.mxu0
        %1035 = vrot.lane.b32.xlu0 %v758, 104
        %v1036 = vpop.permute.xlu0 %1035
        %1037 = vrot.lane.b32.xlu0 %v733, 104
        %v1038 = vpop.permute.xlu0 %1037
        %v1039 = vsel %vm795, %v1036, 0
        %v1041 = vsel %vm795, %v1038, 0
        %1043 = vmatpush.xpose.msra.mxu0 0.0
        %1044 = vmatpush.xpose.msra.mxu0 0.0
        %1045 = vmatpush.xpose.msra.mxu0 0.0
        %1046 = vmatpush.xpose.msra.mxu0 0.0
        %1047 = vmatpush.xpose.msra.mxu0 0.0
        %1048 = vmatpush.xpose.msra.mxu0 0.0
        %1049 = vmatpush.xpose.msra.mxu0 0.0
        %1050 = vmatpush.xpose.msra.mxu0 0.0
        %1051 = vmatpush.xpose.msra.mxu0 0.0
        %1052 = vmatpush.xpose.msra.mxu0 0.0
        %1053 = vmatpush.xpose.msra.mxu0 0.0
        %1054 = vmatpush.xpose.msra.mxu0 0.0
        %1055 = vmatpush.xpose.msra.mxu0 0.0
        %1056 = vmatpush.xpose.msra.mxu0 0.0
        %1057 = vmatpush.xpose.msra.mxu0 0.0
        %1058 = vmatpush.xpose.msra.mxu0 %v1041
        %1059 = vmatmul.f32.gmra.mxu0 %v1039
        %v1060 = vpop.f32.mrf.mxu0
        %v1061 = vadd.f32 0.0, %v1060
        %1062 = vdwg.mxu0
        %v1063 = vsel %vm794, %v1061, -1e+32
        %v1064 = vsel %vm795, %v1063, -inf
        %1065 = vmax.xlane.f32.xlu0 %v1064
        %v1066 = vpop.xlane.xlu0 %1065
        %v1067 = vsub.f32 %v1063, %v1066
        %v1068 = vmul.f32 %v1067, 1.442695
        %v1069 = vpow.pop %v1068
        %v1070 = vsel %vm795, %v1069, 0.0
        %1071 = vadd.xlane.f32.xlu0 %v1070
        %v1072 = vpop.xlane.xlu0 %1071
        %v1073 = vrcp.pop %v1072
        %v1074 = vmul.f32 %v1072, %v1073
        %v1075 = vsub.f32 1.0, %v1074
        %v1076 = vmul.f32 %v1073, %v1075
        %v1077 = vadd.f32 %v1073, %v1076
        %vm1078 = vweird.f32 %v1072
        %vm1079 = vweird.f32 %v1073
        %vm1080 = vmor %vm1078, %vm1079
        %v1081 = vsel %vm1080, %v1073, %v1077
        %v1082 = vand.u32 2147483647, %v1072
        %vm1083 = vcmp.eq.f32.partialorder %v1082, 8.507059e+37
        %v1084 = vand.u32 %v1072, 2147483648
        %v1085 = vor.u32 1.1754944e-38, %v1084
        %v1086 = vsel %vm1083, %v1085, %v1081
        %v1087 = vmul.f32 1.0, %v1086
        %v1088 = vmul.f32 %v1069, %v1087
        %1089 = vst.msk [vmem:[%s697 + $0x18] sm:$0xff] %vm795, %v1088
        %1090 = vrot.lane.b32.xlu0 %v787, 104
        %v1091 = vpop.permute.xlu0 %1090
        %v1094 = vsel %vm795, %v1088, 0
        %1096 = vmatpush.msra.mxu0 0.0
        %1097 = vmatpush.msra.mxu0 0.0
        %1098 = vmatpush.msra.mxu0 0.0
        %1099 = vmatpush.msra.mxu0 0.0
        %1100 = vmatpush.msra.mxu0 0.0
        %1101 = vmatpush.msra.mxu0 0.0
        %1102 = vmatpush.msra.mxu0 0.0
        %1103 = vmatpush.msra.mxu0 0.0
        %1104 = vmatpush.msra.mxu0 0.0
        %1105 = vmatpush.msra.mxu0 0.0
        %1106 = vmatpush.msra.mxu0 0.0
        %1107 = vmatpush.msra.mxu0 0.0
        %1108 = vmatpush.msra.mxu0 0.0
        %1109 = vmatpush.msra.mxu0 0.0
        %1110 = vmatpush.msra.mxu0 0.0
        %1111 = vmatpush.msra.mxu0 %v1091
        %1112 = vmatmul.f32.gmra.mxu0 %v1094
        %v1113 = vpop.f32.mrf.mxu0
        %v1114 = vadd.f32 0.0, %v1113
        %1115 = vdwg.mxu0
        %1117 = vrot.lane.b32.xlu0 %v952, 8
        %v1118 = vpop.permute.xlu0 %1117
        %1121 = vrot.lane.b32.xlu0 %v1033, 16
        %v1122 = vpop.permute.xlu0 %1121
        %1125 = vrot.lane.b32.xlu0 %v1114, 24
        %v1126 = vpop.permute.xlu0 %1125
        %v1128 = vsel %vm795, %v870, %v1118
        %vm1129 = vcmask 130048
        %v1130 = vsel %vm1129, %v1128, %v1122
        %vm1131 = vcmask 195584
        %v1132 = vsel %vm1131, %v1130, %v1126
        %vm1133 = vcmp.ne.s32.totalorder %v790, 0
        %v1134 = vsel %vm1133, 1, 0
        %vm1135 = vcmp.eq.s32.totalorder %v1134, 1
        %v1136 = vsel %vm1135, %v1132, 0.0
        %v1137 = vld [vmem:[%s7] sm:$0xff]
        %v1138 = vld [vmem:[%s7 + $0x8] sm:$0xff]
        %v1139 = vld [vmem:[%s7 + $0x10] sm:$0xff]
        %v1140 = vld [vmem:[%s7 + $0x18] sm:$0xff]
        %v1142 = vperm.slane %v703, 0
        %v1145 = vsel %vm711, %v1136, 0
        %1147 = vmatpush.msra.mxu0 0.0
        %1148 = vmatpush.msra.mxu0 0.0
        %1149 = vmatpush.msra.mxu0 0.0
        %1150 = vmatpush.msra.mxu0 0.0
        %1151 = vmatpush.msra.mxu0 0.0
        %1152 = vmatpush.msra.mxu0 0.0
        %1153 = vmatpush.msra.mxu0 0.0
        %1154 = vmatpush.msra.mxu0 0.0
        %1155 = vmatpush.msra.mxu0 0.0
        %1156 = vmatpush.msra.mxu0 0.0
        %1157 = vmatpush.msra.mxu0 0.0
        %1158 = vmatpush.msra.mxu0 0.0
        %1159 = vmatpush.msra.mxu0 %v1140
        %1160 = vmatpush.msra.mxu0 %v1139
        %1161 = vmatpush.msra.mxu0 %v1138
        %1162 = vmatpush.msra.mxu0 %v1137
        %1163 = vmatmul.f32.gmra.mxu0 %v1145
        %v1164 = vpop.f32.mrf.mxu0
        %v1165 = vadd.f32 %v1142, %v1164
        %1166 = vdwg.mxu0
        %v1167 = vadd.f32 %v698, %v1165
        %v1168 = vsel %vm711, %v1167, 0.0
        %1169 = vadd.xlane.f32.xlu0 %v1168
        %v1170 = vpop.xlane.xlu0 %1169
        %v1171 = vrcp.pop 32.0
        %v1172 = vmul.f32 32.0, %v1171
        %v1173 = vsub.f32 1.0, %v1172
        %v1174 = vmul.f32 %v1171, %v1173
        %v1175 = vadd.f32 %v1171, %v1174
        %vm1176 = vweird.f32 %v1171
        %v1177 = vsel %vm1176, %v1171, %v1175
        %v1178 = vmul.f32 %v1170, %v1177
        %v1179 = vsub.f32 %v1167, %v1178
        %v1180 = vmul.f32 %v1179, %v1179
        %v1181 = vsel %vm711, %v1180, 0.0
        %1182 = vadd.xlane.f32.xlu0 %v1181
        %v1183 = vpop.xlane.xlu0 %1182
        %v1184 = vmul.f32 %v1183, %v1177
        %v1185 = vadd.f32 %v1184, 1e-05
        %v1186 = vrsqrt.pop %v1185
        %v1187 = vmul.f32 %v1186, %v1185
        %v1188 = vmul.f32 %v1187, %v1186
        %v1189 = vmul.f32 0.5, %v1188
        %v1190 = vsub.f32 1.5, %v1189
        %v1191 = vmul.f32 %v1186, %v1190
        %vm1192 = vweird.f32 %v1185
        %vm1193 = vweird.f32 %v1186
        %vm1194 = vmor %vm1192, %vm1193
        %v1195 = vsel %vm1194, %v1186, %v1191
        %v1196 = vmul.f32 %v1179, %v1195
        %v1197 = vld [vmem:[%s9] sm:$0x1]
        %v1199 = vperm.slane %v1197, 0
        %v1201 = vmul.f32 %v1196, %v1199
        %v1202 = vld [vmem:[%s10] sm:$0x1]
        %v1204 = vperm.slane %v1202, 0
        %v1206 = vadd.f32 %v1201, %v1204
        %v1207 = vld [vmem:[#allocation8] sm:$0xff]
        %v1208 = vld [vmem:[#allocation8 + $0x8] sm:$0xff]
        %v1209 = vld [vmem:[#allocation8 + $0x10] sm:$0xff]
        %v1210 = vld [vmem:[#allocation8 + $0x18] sm:$0xff]
        %v1211 = vld [vmem:[%s12] sm:$0x1]
        %v1213 = vperm.slane %v1211, 0
        %v1216 = vsel %vm711, %v1206, 0
        %1218 = vmatpush.msra.mxu0 0.0
        %1219 = vmatpush.msra.mxu0 0.0
        %1220 = vmatpush.msra.mxu0 0.0
        %1221 = vmatpush.msra.mxu0 0.0
        %1222 = vmatpush.msra.mxu0 0.0
        %1223 = vmatpush.msra.mxu0 0.0
        %1224 = vmatpush.msra.mxu0 0.0
        %1225 = vmatpush.msra.mxu0 0.0
        %1226 = vmatpush.msra.mxu0 0.0
        %1227 = vmatpush.msra.mxu0 0.0
        %1228 = vmatpush.msra.mxu0 0.0
        %1229 = vmatpush.msra.mxu0 0.0
        %1230 = vmatpush.msra.mxu0 %v1210
        %1231 = vmatpush.msra.mxu0 %v1209
        %1232 = vmatpush.msra.mxu0 %v1208
        %1233 = vmatpush.msra.mxu0 %v1207
        %1234 = vmatmul.f32.gmra.mxu0 %v1216
        %v1235 = vpop.f32.mrf.mxu0
        %v1236 = vadd.f32 %v1213, %v1235
        %1237 = vdwg.mxu0
        %v1238 = vmax.f32 %v1236, 0.0
        %v1239 = vld [vmem:[%s13] sm:$0xff]
        %v1240 = vld [vmem:[%s13 + $0x8] sm:$0xff]
        %v1241 = vld [vmem:[%s13 + $0x10] sm:$0xff]
        %v1242 = vld [vmem:[%s13 + $0x18] sm:$0xff]
        %v1243 = vld [vmem:[%s13 + $0x20] sm:$0xff]
        %v1244 = vld [vmem:[%s13 + $0x28] sm:$0xff]
        %v1245 = vld [vmem:[%s13 + $0x30] sm:$0xff]
        %v1246 = vld [vmem:[%s13 + $0x38] sm:$0xff]
        %v1247 = vld [vmem:[%s14] sm:$0x1]
        %v1249 = vperm.slane %v1247, 0
        %vm1251 = vcmask 523264
        %v1253 = vsel %vm1251, %v1238, 0
        %1255 = vmatpush.msra.mxu0 0.0
        %1256 = vmatpush.msra.mxu0 0.0
        %1257 = vmatpush.msra.mxu0 0.0
        %1258 = vmatpush.msra.mxu0 0.0
        %1259 = vmatpush.msra.mxu0 0.0
        %1260 = vmatpush.msra.mxu0 0.0
        %1261 = vmatpush.msra.mxu0 0.0
        %1262 = vmatpush.msra.mxu0 0.0
        %1263 = vmatpush.msra.mxu0 %v1246
        %1264 = vmatpush.msra.mxu0 %v1245
        %1265 = vmatpush.msra.mxu0 %v1244
        %1266 = vmatpush.msra.mxu0 %v1243
        %1267 = vmatpush.msra.mxu0 %v1242
        %1268 = vmatpush.msra.mxu0 %v1241
        %1269 = vmatpush.msra.mxu0 %v1240
        %1270 = vmatpush.msra.mxu0 %v1239
        %1271 = vmatmul.f32.gmra.mxu0 %v1253
        %v1272 = vpop.f32.mrf.mxu0
        %v1273 = vadd.f32 %v1249, %v1272
        %1274 = vdwg.mxu0
        %v1275 = vadd.f32 %v1206, %v1273
        %v1276 = vsel %vm711, %v1275, 0.0
        %1277 = vadd.xlane.f32.xlu0 %v1276
        %v1278 = vpop.xlane.xlu0 %1277
        %v1279 = vmul.f32 %v1278, %v1177
        %v1280 = vsub.f32 %v1275, %v1279
        %v1281 = vmul.f32 %v1280, %v1280
        %v1282 = vsel %vm711, %v1281, 0.0
        %1283 = vadd.xlane.f32.xlu0 %v1282
        %v1284 = vpop.xlane.xlu0 %1283
        %v1285 = vmul.f32 %v1284, %v1177
        %v1286 = vadd.f32 %v1285, 1e-05
        %v1287 = vrsqrt.pop %v1286
        %v1288 = vmul.f32 %v1287, %v1286
        %v1289 = vmul.f32 %v1288, %v1287
        %v1290 = vmul.f32 0.5, %v1289
        %v1291 = vsub.f32 1.5, %v1290
        %v1292 = vmul.f32 %v1287, %v1291
        %vm1293 = vweird.f32 %v1286
        %vm1294 = vweird.f32 %v1287
        %vm1295 = vmor %vm1293, %vm1294
        %v1296 = vsel %vm1295, %v1287, %v1292
        %v1297 = vmul.f32 %v1280, %v1296
        %v1298 = vld [vmem:[%s15] sm:$0x1]
        %v1300 = vperm.slane %v1298, 0
        %v1302 = vmul.f32 %v1297, %v1300
        %v1303 = vld [vmem:[%s16] sm:$0x1]
        %v1305 = vperm.slane %v1303, 0
        %v1307 = vadd.f32 %v1302, %v1305
        %1308 = vst.msk [vmem:[%s685] sm:$0xff] %vm711, %v1307
        %s1309 = sand.u32 %s420, 1
        %s1310 = scalar_lea.sflag [#allocation4], %s1309
        %s1311 = sand.u32 %s420, 1
        %s1312 = smul.addr %s1311, 8
        %s1313 = scalar_lea.vmem [#allocation10], %s1312
        %p1314 = scmp.lt.s32.totalorder %s40, 1
        %s1315 = scalar_select %p1314, %s40, 1
        %s1316 = smul.addr %s1315, 4
        %s1317 = smul.addr %s1316, 8
        %s1318 = scalar_lea.vmem %s18, %s1317
        // Predicated region
        $region105: #{tpu_custom_call.1} parent=87 // pred_check
          %p1319 = pneg %p430
        $region106: #{tpu_custom_call.1} parent=87 // pred_check_branch
          %1321 = sbr.rel (%p1319) target = $region108
        $region107: #{tpu_custom_call.1} parent=87 // pred_region
          %1323 = vsyncadd %s1310, 0
          %s1324 = smul.addr %s40, 8
          %s1325 = scalar_lea.hbm %s17, %s1324
          %s1327 = sshll.u32 %s1313, 4
          %s1328 = int_to_ptr.vmem [resolvable:$true] %s1327
          %s1329 = sshll.u32 %s1325, 4
          %s1330 = int_to_ptr.hbm [resolvable:$true] %s1329
          %1332 = dma.vmem_to_hbm [thread:$0]  %s1328, 128, %s1330, %s1310
        $region108: #{tpu_custom_call.1} parent=87 // pred_fallthru
          _
        // Predicated region
        $region109: #{tpu_custom_call.1} parent=87 // pred_check
          %p1333 = pneg %p456
        $region110: #{tpu_custom_call.1} parent=87 // pred_check_branch
          %1335 = sbr.rel (%p1333) target = $region112
        $region111: #{tpu_custom_call.1} parent=87 // pred_region
          _
        $region112: #{tpu_custom_call.1} parent=87 // pred_fallthru
          _
      $region88: #{tpu_custom_call.1} parent=5 // pred_fallthru
        _
      %p1336 = scmp.le.s32.totalorder 2, %s35
      // Predicated region
      $region113: #{tpu_custom_call.1} parent=5 // pred_check
        %p1337 = pneg %p1336
      $region114: #{tpu_custom_call.1} parent=5 // pred_check_branch
        %1339 = sbr.rel (%p1337) target = $region116
      $region115: #{tpu_custom_call.1} parent=5 // pred_region
        %s1340 = ssub.s32 %s35, 2
        // Predicated region
        $region117: #{tpu_custom_call.1} parent=115 // pred_check
          %p1341 = pneg %p436
        $region118: #{tpu_custom_call.1} parent=115 // pred_check_branch
          %1343 = sbr.rel (%p1341) target = $region120
        $region119: #{tpu_custom_call.1} parent=115 // pred_region
          %s1344 = sand.u32 %s421, 1
          %s1345 = scalar_lea.sflag [#allocation4], %s1344
          %s1346 = sand.u32 %s421, 1
          %s1347 = smul.addr %s1346, 8
          %s1348 = scalar_lea.vmem [#allocation10], %s1347
          %1350 = dma.done %s1345, 128
        $region120: #{tpu_custom_call.1} parent=115 // pred_fallthru
          _
        // Predicated region
        $region121: #{tpu_custom_call.1} parent=115 // pred_check
          %p1351 = pneg %p462
        $region122: #{tpu_custom_call.1} parent=115 // pred_check_branch
          %1353 = sbr.rel (%p1351) target = $region124
        $region123: #{tpu_custom_call.1} parent=115 // pred_region
          %p1354 = scmp.lt.s32.totalorder %s41, 1
          %s1355 = scalar_select %p1354, %s41, 1
          %s1356 = smul.addr %s1355, 4
          %s1357 = smul.addr %s1356, 8
          %s1358 = scalar_lea.vmem %s18, %s1357
        $region124: #{tpu_custom_call.1} parent=115 // pred_fallthru
          _
      $region116: #{tpu_custom_call.1} parent=5 // pred_fallthru
        _
    $region6: #{tpu_custom_call.1} parent=1 // loop_footer
      %s39 = sadd.s32 1, %s35
    $region7: #{tpu_custom_call.1} parent=1 // loop_footer_branch
      %34 = sbr.rel target = $region3
    $region8: #{tpu_custom_call.1} parent=1 // loop_exit
      _
    %1359 = vsyncpa [#allocation3], 1
    %s1360 = scalar_lea.sflag [#allocation3], 1
    %1361 = vsyncpa %s1360, 1
    %1362 = vsyncpa [#allocation6], 1
    %s1363 = scalar_lea.sflag [#allocation6], 1
    %1364 = vsyncpa %s1363, 1
    %1365 = vsyncpa [#allocation9], 1
    %1366 = vsyncpa [#allocation4], 1
    %s1367 = scalar_lea.sflag [#allocation4], 1
    %1368 = vsyncpa %s1367, 1

</llo_original>
